<compile_context>
chip_gen: v6e
topology: v6e:2x2x1
jax: 0.10.0
libtpu: 0.0.40
codegen_flags: <defaults>
</compile_context>

<pallas_src>
import functools

import jax
import jax.numpy as jnp
from jax.experimental import pallas as pl
from jax.experimental.pallas import tpu as pltpu


def _round_up(a, b):
    return (a + b - 1) // b * b


# -----------------------------------------------------------------------------
# Pallas kernel: grouped expert MLPs over expert-sorted expanded rows
# -----------------------------------------------------------------------------
def grouped_expert_kernel(lohi_ref, x_ref, w1_ref, b1_ref, w2_ref, b2_ref,
                          wts_ref, o_ref):
    """One grid step = one tile of expert-sorted expanded (token, expert) rows.

    lohi_ref: SMEM (n_tiles, 2) int32 (scalar prefetch): [first, last] expert
              id present in tile i (rows are sorted by expert -> contiguous).
    x_ref:    (tm, D)    bf16 gathered token rows.
    w1_ref:   (E, D, F)  bf16, VMEM-resident (constant index_map).
    b1_ref:   (E, 1, F)  f32.
    w2_ref:   (E, F, D)  bf16, VMEM-resident.
    b2_ref:   (E, 1, D)  f32.
    wts_ref:  (tm, E)    f32: row's routing weight in its expert's column, 0
              elsewhere (doubles as the boundary-tile mask).
    o_ref:    (tm, D)    f32 per-row weighted expert output.
    """
    i = pl.program_id(0)
    n_experts = w1_ref.shape[0]
    lo = lohi_ref[i, 0]
    hi = lohi_ref[i, 1]

    o_ref[...] = jnp.zeros_like(o_ref)

    for e in range(n_experts):             # static unroll (E small & static)
        @pl.when((lo <= e) & (e <= hi))    # skip experts absent from this tile
        def _(e=e):
            h = jnp.dot(x_ref[...], w1_ref[e],
                        preferred_element_type=jnp.float32)
            h = jnp.maximum(h + b1_ref[e], 0.0)                      # ReLU
            y = jnp.dot(h.astype(jnp.bfloat16), w2_ref[e],
                        preferred_element_type=jnp.float32) + b2_ref[e]
            # Column e is zero for rows routed to another expert -> correct
            # even on group-boundary tiles that contain two experts.
            o_ref[...] += wts_ref[:, e:e + 1] * y       # static lane slice


# -----------------------------------------------------------------------------
# Pallas wrapper
# -----------------------------------------------------------------------------
def grouped_expert_forward(x_exp, w1, b1, w2, b2, wts_exp, tile_lohi, *, tm):
    Tk_pad, D = x_exp.shape
    E, _, F = w1.shape
    assert Tk_pad % tm == 0
    n_tiles = Tk_pad // tm

    b1r = b1.reshape(E, 1, F).astype(jnp.float32)
    b2r = b2.reshape(E, 1, D).astype(jnp.float32)

    # --- explicit VMEM budget (review items 2 & 3) ---------------------------
    resident = (w1.size * w1.dtype.itemsize + w2.size * w2.dtype.itemsize
                + b1r.size * 4 + b2r.size * 4)
    # Single-buffer the resident weights (constant index_map -> never
    # re-DMA'd) once default double buffering would meaningfully eat into the
    # scoped-VMEM budget (v7x: 64 MiB physical / 32 MiB default scoped).
    single_buffer_weights = resident > (8 << 20)
    weight_bufs = 1 if single_buffer_weights else 2
    streamed = 2 * (tm * D * x_exp.dtype.itemsize    # x tile (double-buffered)
                    + tm * E * 4                     # routing-weight tile
                    + tm * D * 4)                    # output tile
    need = weight_bufs * resident + streamed
    vmem_limit = max(min(int(need * 1.25) + (4 << 20), 128 << 20), 32 << 20)

    def wspec(shape):
        index_map = lambda i, lohi, _n=len(shape): (0,) * _n
        if single_buffer_weights:
            return pl.BlockSpec(shape, index_map, pipeline_mode=pl.Buffered(1))
        return pl.BlockSpec(shape, index_map)

    return pl.pallas_call(
        grouped_expert_kernel,
        out_shape=jax.ShapeDtypeStruct((Tk_pad, D), jnp.float32),
        grid_spec=pltpu.PrefetchScalarGridSpec(
            num_scalar_prefetch=1,                        # tile_lohi -> SMEM
            grid=(n_tiles,),
            in_specs=[
                pl.BlockSpec((tm, D), lambda i, lohi: (i, 0)),   # token rows
                wspec((E, D, F)),                                # W1 (resident)
                wspec((E, 1, F)),                                # b1
                wspec((E, F, D)),                                # W2 (resident)
                wspec((E, 1, D)),                                # b2
                pl.BlockSpec((tm, E), lambda i, lohi: (i, 0)),   # row weights
            ],
            out_specs=pl.BlockSpec((tm, D), lambda i, lohi: (i, 0)),
        ),
        compiler_params=pltpu.CompilerParams(
            dimension_semantics=("parallel",),
            vmem_limit_bytes=vmem_limit),
    )(tile_lohi, x_exp, w1, b1r, w2, b2r, wts_exp)


# -----------------------------------------------------------------------------
# Full SimpleMoELayer.forward
# -----------------------------------------------------------------------------
def simple_moe_layer(x, params, thermal_bias, *, top_k, tm=256):
    """Returns (output, aux_loss, metrics) — matches the PyTorch module."""
    T, D = x.shape
    E, _, F = params["w1"].shape

    # --- gate + router + aux loss (plain XLA: tiny, fuses with the glue) -----
    gate_logits = (jnp.dot(x, params["wg"],
                           precision=jax.lax.Precision.HIGHEST)
                   + params["bg"])                                     # (T, E)
    biased_logits = gate_logits + thermal_bias
    topk_vals, topk_idx = jax.lax.top_k(biased_logits, top_k)          # (T, k)
    routing_weights = jax.nn.softmax(topk_vals, axis=-1)               # (T, k)

    gate_probs_all = jax.nn.softmax(gate_logits, axis=-1)
    tokens_per_expert = jax.nn.one_hot(topk_idx[:, 0], E,
                                       dtype=jnp.float32).sum(axis=0)
    aux_loss = (tokens_per_expert / (T + 1e-8)
                * gate_probs_all.mean(axis=0)).sum() * E

    # --- expert-grouped dispatch: expand, sort by expert ---------------------
    Tk = T * top_k
    flat_expert = topk_idx.reshape(-1)                                  # (Tk,)
    flat_token = jnp.broadcast_to(jnp.arange(T, dtype=jnp.int32)[:, None],
                                  (T, top_k)).reshape(-1)
    flat_weight = routing_weights.reshape(-1)

    order = jnp.argsort(flat_expert)                 # stable sort by expert id
    sort_expert = flat_expert[order]
    sort_token = flat_token[order]
    sort_weight = flat_weight[order]

    # tile sizing over the expanded rows; keep >= 2 tiles for v7x's two TCs
    tm = max(8, _round_up(min(tm, _round_up(Tk, 8)), 8))
    Tk_pad = _round_up(Tk, tm)
    if Tk_pad // tm == 1 and tm >= 16:
        tm = max(8, _round_up(tm // 2, 8))
        Tk_pad = _round_up(Tk, tm)
    n_tiles = Tk_pad // tm

    pad = Tk_pad - Tk
    if pad:
        # Pad with the last (largest) present expert id so padding never
        # triggers an extra expert matmul; padded rows carry zero weight and
        # scatter onto token 0 (adds exactly zero).
        sort_expert = jnp.concatenate(
            [sort_expert, jnp.full((pad,), sort_expert[-1])])
        sort_token = jnp.concatenate(
            [sort_token, jnp.zeros((pad,), sort_token.dtype)])
        sort_weight = jnp.concatenate(
            [sort_weight, jnp.zeros((pad,), sort_weight.dtype)])

    # per-row routing weight placed in its expert's column (mask + weight)
    wts_exp = (jax.nn.one_hot(sort_expert, E, dtype=jnp.float32)
               * sort_weight[:, None])                             # (Tk_pad, E)

    # per-tile [first, last] expert present (rows are expert-sorted)
    exp_tiles = sort_expert.reshape(n_tiles, tm)
    tile_lohi = jnp.stack([exp_tiles[:, 0], exp_tiles[:, -1]],
                          axis=1).astype(jnp.int32)                # (n_tiles, 2)

    # gather tokens into expanded sorted order; single bf16 cast, padding
    # folded into the gather (no separately padded copy of x)
    x_bf16 = x if x.dtype == jnp.bfloat16 else x.astype(jnp.bfloat16)
    x_exp = x_bf16[sort_token]                                     # (Tk_pad, D)

    # expert weights are expected bf16 from parameter setup (no per-call cast)
    w1 = params["w1"] if params["w1"].dtype == jnp.bfloat16 \
        else params["w1"].astype(jnp.bfloat16)
    w2 = params["w2"] if params["w2"].dtype == jnp.bfloat16 \
        else params["w2"].astype(jnp.bfloat16)

    # --- Pallas hot path: grouped expert MLPs (bf16 operands, f32 accum) -----
    y_exp = grouped_expert_forward(x_exp, w1, params["b1"], w2, params["b2"],
                                   wts_exp, tile_lohi, tm=tm)

    # scatter-add weighted expert outputs back to tokens (padded rows add 0)
    output = jnp.zeros((T, D), jnp.float32).at[sort_token].add(y_exp)

    # --- metrics (no wall-clock timings on TPU) -------------------------------
    expert_usage = (topk_idx[:, :, None]
                    == jnp.arange(E)[None, None, :]).any(axis=1).sum(axis=0)
    metrics = {
        "expert_usage_current": expert_usage.astype(jnp.float32),
        "total_assignments": expert_usage.sum().astype(jnp.float32),
        "top_k_indices": topk_idx,
        # Extra fields (not in the PyTorch metrics) exposed for verification:
        "gate_logits": gate_logits,
        "routing_weights": routing_weights,
    }
    return output, aux_loss, metrics


# -----------------------------------------------------------------------------
# Pure-JAX references (mirror the PyTorch structure) for verification
# -----------------------------------------------------------------------------
def reference_gate_router_aux(x, params, thermal_bias, *, top_k):
    hp = jax.lax.Precision.HIGHEST
    T = x.shape[0]
    E = params["wg"].shape[1]
    gate_logits = jnp.dot(x, params["wg"], precision=hp) + params["bg"]
    biased = gate_logits + thermal_bias
    topk_vals, topk_idx = jax.lax.top_k(biased, top_k)
    probs = jax.nn.softmax(topk_vals, axis=-1)
    gate_probs_all = jax.nn.softmax(gate_logits, axis=-1)
    tpe = jax.nn.one_hot(topk_idx[:, 0], E).sum(0)
    aux = (tpe / (T + 1e-8) * gate_probs_all.mean(0)).sum() * E
    return gate_logits, topk_idx, probs, aux


def reference_experts(x, params, topk_idx, probs, *, matmul_dtype=jnp.float32):
    """Per-expert loop (dense form of the PyTorch gather/scatter), given routing."""
    E = params["w1"].shape[0]
    hp = jax.lax.Precision.HIGHEST
    out = jnp.zeros(x.shape, jnp.float32)
    for e in range(E):
        h = jnp.dot(x.astype(matmul_dtype), params["w1"][e].astype(matmul_dtype),
                    preferred_element_type=jnp.float32, precision=hp)
        h = jnp.maximum(h + params["b1"][e], 0.0)
        y = jnp.dot(h.astype(matmul_dtype), params["w2"][e].astype(matmul_dtype),
                    preferred_element_type=jnp.float32, precision=hp)
        y = y + params["b2"][e]
        w_e = jnp.where(topk_idx == e, probs, 0.0).sum(axis=-1)
        out = out + y * w_e[:, None]
    return out


# -----------------------------------------------------------------------------
if __name__ == "__main__":
    # Small but lane-dense shapes: (num_tokens, d_model); D/F multiples of 128.
    T, D, F, E, TOP_K = 512, 128, 256, 4, 2
    TM = 256   # -> 4 tiles over the T*top_k=1024 expanded rows (v7x-friendly)

    key = jax.random.PRNGKey(0)
    k_x, k_wg, k_w1, k_w2 = jax.random.split(key, 4)

    x = jax.random.normal(k_x, (T, D), dtype=jnp.float32)

    params_f32 = {
        "wg": 0.1 * jax.random.normal(k_wg, (D, E), dtype=jnp.float32),
        "bg": jnp.zeros((E,), dtype=jnp.float32),
        "w1": 0.1 * jax.random.normal(k_w1, (E, D, F), dtype=jnp.float32),
        "b1": jnp.zeros((E, F), dtype=jnp.float32),
        "w2": 0.1 * jax.random.normal(k_w2, (E, F, D), dtype=jnp.float32),
        "b2": jnp.zeros((E, D), dtype=jnp.float32),
    }
    # Expert matmul weights stored bf16 once at setup (no per-forward cast).
    params = dict(params_f32,
                  w1=params_f32["w1"].astype(jnp.bfloat16),
                  w2=params_f32["w2"].astype(jnp.bfloat16))

    # Deterministic "thermal" expert priority bias (stands in for the
    # thermal_signal_generator.get_expert_priorities() dict).
    priorities = {str(i): 0.05 * i for i in range(E)}
    thermal_bias = jnp.array([priorities.get(str(i), 0.0) for i in range(E)],
                             dtype=jnp.float32)

    fwd = jax.jit(functools.partial(simple_moe_layer, top_k=TOP_K, tm=TM))
    out, aux_loss, metrics = fwd(x, params, thermal_bias)
    out = jax.block_until_ready(out)
    aux_loss = jax.block_until_ready(aux_loss)

    # --- verification --------------------------------------------------------
    ref_gate, _, _, ref_aux = reference_gate_router_aux(
        x, params_f32, thermal_bias, top_k=TOP_K)

    assert jnp.allclose(metrics["gate_logits"], ref_gate, atol=2e-3), \
        "gate logits mismatch"
    assert jnp.allclose(aux_loss, ref_aux, atol=1e-3), "aux_loss mismatch"

    # Grouped Pallas kernel vs dense reference with the same routing and the
    # same bf16-operand / f32-accum precision policy -> must match tightly.
    ref_out_bf16 = reference_experts(x, params_f32, metrics["top_k_indices"],
                                     metrics["routing_weights"],
                                     matmul_dtype=jnp.bfloat16)
    assert jnp.allclose(out, ref_out_bf16, atol=5e-3, rtol=5e-3), \
        "expert output mismatch (bf16-matched reference)"

    # Vs full-f32 reference (mirrors PyTorch) — loose tolerance covers the
    # deliberate bf16-operand precision choice.
    ref_out_f32 = reference_experts(x, params_f32, metrics["top_k_indices"],
                                    metrics["routing_weights"],
                                    matmul_dtype=jnp.float32)
    assert jnp.allclose(out, ref_out_f32, atol=1e-1, rtol=1e-1), \
        "expert output mismatch (f32 reference)"

    print("KERNEL_OK")
</pallas_src>

<mosaic_0001>
module attributes {stable_mosaic.version = 11 : i64} {
  func.func @grouped_expert_kernel(%arg0: i32, %arg1: memref<4x2xi32, #tpu.memory_space<smem>>, %arg2: memref<256x128xbf16, #tpu.memory_space<vmem>>, %arg3: memref<4x128x256xbf16, #tpu.memory_space<vmem>>, %arg4: memref<4x1x256xf32, #tpu.memory_space<vmem>>, %arg5: memref<4x256x128xbf16, #tpu.memory_space<vmem>>, %arg6: memref<4x1x128xf32, #tpu.memory_space<vmem>>, %arg7: memref<256x4xf32, #tpu.memory_space<vmem>>, %arg8: memref<256x128xf32, #tpu.memory_space<vmem>>) attributes {dimension_semantics = [#tpu.dimension_semantics<parallel>], iteration_bounds = array<i64: 4>, scalar_prefetch = 1 : i64, scratch_operands = 0 : i64, tpu.core_type = #tpu.core_type<tc>, window_params = [{transform_indices = @transform_0, window_bounds = array<i64: 256, 128>}, {pipeline_mode = #tpu.pipeline_mode<synchronous>, transform_indices = @transform_1, window_bounds = array<i64: 4, 128, 256>}, {pipeline_mode = #tpu.pipeline_mode<synchronous>, transform_indices = @transform_2, window_bounds = array<i64: 4, 1, 256>}, {pipeline_mode = #tpu.pipeline_mode<synchronous>, transform_indices = @transform_3, window_bounds = array<i64: 4, 256, 128>}, {pipeline_mode = #tpu.pipeline_mode<synchronous>, transform_indices = @transform_4, window_bounds = array<i64: 4, 1, 128>}, {transform_indices = @transform_5, window_bounds = array<i64: 256, 4>}, {transform_indices = @transform_6, window_bounds = array<i64: 256, 128>}]} {
    %0 = arith.index_cast %arg0 : i32 to index
    %c0 = arith.constant 0 : index
    %1 = memref.load %arg1[%0, %c0] : memref<4x2xi32, #tpu.memory_space<smem>>
    %2 = arith.index_cast %arg0 : i32 to index
    %c1 = arith.constant 1 : index
    %3 = memref.load %arg1[%2, %c1] : memref<4x2xi32, #tpu.memory_space<smem>>
    %cst = arith.constant 0.000000e+00 : f32
    %4 = vector.broadcast %cst : f32 to vector<256x128xf32>
    %c0_0 = arith.constant 0 : index
    %c0_1 = arith.constant 0 : index
    %5 = vector.load %arg8[%c0_0, %c0_1] : memref<256x128xf32, #tpu.memory_space<vmem>>, vector<256x128xf32>
    tpu.vector_store %arg8[%c0_0, %c0_1], %4 {strides = array<i32>} : memref<256x128xf32, #tpu.memory_space<vmem>>, vector<256x128xf32>,
    %c0_i32 = arith.constant 0 : i32
    %6 = arith.cmpi sle, %1, %c0_i32 : i32
    %c0_i32_2 = arith.constant 0 : i32
    %7 = arith.cmpi sge, %3, %c0_i32_2 : i32
    %8 = arith.andi %6, %7 : i1
    %9 = arith.extui %8 : i1 to i32
    %c0_i32_3 = arith.constant 0 : i32
    %10 = arith.cmpi ne, %9, %c0_i32_3 : i32
    scf.if %10 {
      %c0_10 = arith.constant 0 : index
      %c0_11 = arith.constant 0 : index
      %26 = vector.load %arg2[%c0_10, %c0_11] : memref<256x128xbf16, #tpu.memory_space<vmem>>, vector<256x128xbf16>
      %c0_12 = arith.constant 0 : index
      %c0_13 = arith.constant 0 : index
      %c0_14 = arith.constant 0 : index
      %27 = vector.load %arg3[%c0_12, %c0_13, %c0_14] : memref<4x128x256xbf16, #tpu.memory_space<vmem>>, vector<1x128x256xbf16>
      %28 = vector.shape_cast %27 : vector<1x128x256xbf16> to vector<128x256xbf16>
      %cst_15 = arith.constant dense<0.000000e+00> : vector<256x256xf32>
      %29 = tpu.matmul %26, %28, %cst_15 {dimension_numbers = #tpu.dot_dimension_numbers<[1], [0], [0], [1], [0, 0, 1, 1], [], []>} : vector<256x128xbf16>, vector<128x256xbf16>, vector<256x256xf32> -> vector<256x256xf32>
      %c0_16 = arith.constant 0 : index
      %c0_17 = arith.constant 0 : index
      %c0_18 = arith.constant 0 : index
      %30 = vector.load %arg4[%c0_16, %c0_17, %c0_18] : memref<4x1x256xf32, #tpu.memory_space<vmem>>, vector<1x1x256xf32>
      %31 = vector.shape_cast %30 : vector<1x1x256xf32> to vector<1x256xf32>
      %32 = vector.broadcast %31 : vector<1x256xf32> to vector<256x256xf32>
      %33 = arith.addf %29, %32 : vector<256x256xf32>
      %cst_19 = arith.constant 0.000000e+00 : f32
      %34 = vector.broadcast %cst_19 : f32 to vector<256x256xf32>
      %35 = arith.maximumf %33, %34 : vector<256x256xf32>
      %36 = arith.truncf %35 : vector<256x256xf32> to vector<256x256xbf16>
      %c0_20 = arith.constant 0 : index
      %c0_21 = arith.constant 0 : index
      %c0_22 = arith.constant 0 : index
      %37 = vector.load %arg5[%c0_20, %c0_21, %c0_22] : memref<4x256x128xbf16, #tpu.memory_space<vmem>>, vector<1x256x128xbf16>
      %38 = vector.shape_cast %37 : vector<1x256x128xbf16> to vector<256x128xbf16>
      %cst_23 = arith.constant dense<0.000000e+00> : vector<256x128xf32>
      %39 = tpu.matmul %36, %38, %cst_23 {dimension_numbers = #tpu.dot_dimension_numbers<[1], [0], [0], [1], [0, 0, 1, 1], [], []>} : vector<256x256xbf16>, vector<256x128xbf16>, vector<256x128xf32> -> vector<256x128xf32>
      %c0_24 = arith.constant 0 : index
      %c0_25 = arith.constant 0 : index
      %c0_26 = arith.constant 0 : index
      %40 = vector.load %arg6[%c0_24, %c0_25, %c0_26] : memref<4x1x128xf32, #tpu.memory_space<vmem>>, vector<1x1x128xf32>
      %41 = vector.shape_cast %40 : vector<1x1x128xf32> to vector<1x128xf32>
      %42 = vector.broadcast %41 : vector<1x128xf32> to vector<256x128xf32>
      %43 = arith.addf %39, %42 : vector<256x128xf32>
      %c0_27 = arith.constant 0 : index
      %c0_28 = arith.constant 0 : index
      %44 = vector.load %arg8[%c0_27, %c0_28] : memref<256x128xf32, #tpu.memory_space<vmem>>, vector<256x128xf32>
      %c0_29 = arith.constant 0 : index
      %c0_30 = arith.constant 0 : index
      %45 = vector.load %arg7[%c0_29, %c0_30] : memref<256x4xf32, #tpu.memory_space<vmem>>, vector<256x1xf32>
      %46 = vector.broadcast %45 : vector<256x1xf32> to vector<256x128xf32>
      %47 = arith.mulf %46, %43 : vector<256x128xf32>
      %48 = arith.addf %44, %47 : vector<256x128xf32>
      %c0_31 = arith.constant 0 : index
      %c0_32 = arith.constant 0 : index
      %49 = vector.load %arg8[%c0_31, %c0_32] : memref<256x128xf32, #tpu.memory_space<vmem>>, vector<256x128xf32>
      tpu.vector_store %arg8[%c0_31, %c0_32], %48 {strides = array<i32>} : memref<256x128xf32, #tpu.memory_space<vmem>>, vector<256x128xf32>,
    } else {
    }
    %c1_i32 = arith.constant 1 : i32
    %11 = arith.cmpi sle, %1, %c1_i32 : i32
    %c1_i32_4 = arith.constant 1 : i32
    %12 = arith.cmpi sge, %3, %c1_i32_4 : i32
    %13 = arith.andi %11, %12 : i1
    %14 = arith.extui %13 : i1 to i32
    %c0_i32_5 = arith.constant 0 : i32
    %15 = arith.cmpi ne, %14, %c0_i32_5 : i32
    scf.if %15 {
      %c0_10 = arith.constant 0 : index
      %c0_11 = arith.constant 0 : index
      %26 = vector.load %arg2[%c0_10, %c0_11] : memref<256x128xbf16, #tpu.memory_space<vmem>>, vector<256x128xbf16>
      %c1_12 = arith.constant 1 : index
      %c0_13 = arith.constant 0 : index
      %c0_14 = arith.constant 0 : index
      %27 = vector.load %arg3[%c1_12, %c0_13, %c0_14] : memref<4x128x256xbf16, #tpu.memory_space<vmem>>, vector<1x128x256xbf16>
      %28 = vector.shape_cast %27 : vector<1x128x256xbf16> to vector<128x256xbf16>
      %cst_15 = arith.constant dense<0.000000e+00> : vector<256x256xf32>
      %29 = tpu.matmul %26, %28, %cst_15 {dimension_numbers = #tpu.dot_dimension_numbers<[1], [0], [0], [1], [0, 0, 1, 1], [], []>} : vector<256x128xbf16>, vector<128x256xbf16>, vector<256x256xf32> -> vector<256x256xf32>
      %c1_16 = arith.constant 1 : index
      %c0_17 = arith.constant 0 : index
      %c0_18 = arith.constant 0 : index
      %30 = vector.load %arg4[%c1_16, %c0_17, %c0_18] : memref<4x1x256xf32, #tpu.memory_space<vmem>>, vector<1x1x256xf32>
      %31 = vector.shape_cast %30 : vector<1x1x256xf32> to vector<1x256xf32>
      %32 = vector.broadcast %31 : vector<1x256xf32> to vector<256x256xf32>
      %33 = arith.addf %29, %32 : vector<256x256xf32>
      %cst_19 = arith.constant 0.000000e+00 : f32
      %34 = vector.broadcast %cst_19 : f32 to vector<256x256xf32>
      %35 = arith.maximumf %33, %34 : vector<256x256xf32>
      %36 = arith.truncf %35 : vector<256x256xf32> to vector<256x256xbf16>
      %c1_20 = arith.constant 1 : index
      %c0_21 = arith.constant 0 : index
      %c0_22 = arith.constant 0 : index
      %37 = vector.load %arg5[%c1_20, %c0_21, %c0_22] : memref<4x256x128xbf16, #tpu.memory_space<vmem>>, vector<1x256x128xbf16>
      %38 = vector.shape_cast %37 : vector<1x256x128xbf16> to vector<256x128xbf16>
      %cst_23 = arith.constant dense<0.000000e+00> : vector<256x128xf32>
      %39 = tpu.matmul %36, %38, %cst_23 {dimension_numbers = #tpu.dot_dimension_numbers<[1], [0], [0], [1], [0, 0, 1, 1], [], []>} : vector<256x256xbf16>, vector<256x128xbf16>, vector<256x128xf32> -> vector<256x128xf32>
      %c1_24 = arith.constant 1 : index
      %c0_25 = arith.constant 0 : index
      %c0_26 = arith.constant 0 : index
      %40 = vector.load %arg6[%c1_24, %c0_25, %c0_26] : memref<4x1x128xf32, #tpu.memory_space<vmem>>, vector<1x1x128xf32>
      %41 = vector.shape_cast %40 : vector<1x1x128xf32> to vector<1x128xf32>
      %42 = vector.broadcast %41 : vector<1x128xf32> to vector<256x128xf32>
      %43 = arith.addf %39, %42 : vector<256x128xf32>
      %c0_27 = arith.constant 0 : index
      %c0_28 = arith.constant 0 : index
      %44 = vector.load %arg8[%c0_27, %c0_28] : memref<256x128xf32, #tpu.memory_space<vmem>>, vector<256x128xf32>
      %c0_29 = arith.constant 0 : index
      %c1_30 = arith.constant 1 : index
      %45 = vector.load %arg7[%c0_29, %c1_30] : memref<256x4xf32, #tpu.memory_space<vmem>>, vector<256x1xf32>
      %46 = vector.broadcast %45 : vector<256x1xf32> to vector<256x128xf32>
      %47 = arith.mulf %46, %43 : vector<256x128xf32>
      %48 = arith.addf %44, %47 : vector<256x128xf32>
      %c0_31 = arith.constant 0 : index
      %c0_32 = arith.constant 0 : index
      %49 = vector.load %arg8[%c0_31, %c0_32] : memref<256x128xf32, #tpu.memory_space<vmem>>, vector<256x128xf32>
      tpu.vector_store %arg8[%c0_31, %c0_32], %48 {strides = array<i32>} : memref<256x128xf32, #tpu.memory_space<vmem>>, vector<256x128xf32>,
    } else {
    }
    %c2_i32 = arith.constant 2 : i32
    %16 = arith.cmpi sle, %1, %c2_i32 : i32
    %c2_i32_6 = arith.constant 2 : i32
    %17 = arith.cmpi sge, %3, %c2_i32_6 : i32
    %18 = arith.andi %16, %17 : i1
    %19 = arith.extui %18 : i1 to i32
    %c0_i32_7 = arith.constant 0 : i32
    %20 = arith.cmpi ne, %19, %c0_i32_7 : i32
    scf.if %20 {
      %c0_10 = arith.constant 0 : index
      %c0_11 = arith.constant 0 : index
      %26 = vector.load %arg2[%c0_10, %c0_11] : memref<256x128xbf16, #tpu.memory_space<vmem>>, vector<256x128xbf16>
      %c2 = arith.constant 2 : index
      %c0_12 = arith.constant 0 : index
      %c0_13 = arith.constant 0 : index
      %27 = vector.load %arg3[%c2, %c0_12, %c0_13] : memref<4x128x256xbf16, #tpu.memory_space<vmem>>, vector<1x128x256xbf16>
      %28 = vector.shape_cast %27 : vector<1x128x256xbf16> to vector<128x256xbf16>
      %cst_14 = arith.constant dense<0.000000e+00> : vector<256x256xf32>
      %29 = tpu.matmul %26, %28, %cst_14 {dimension_numbers = #tpu.dot_dimension_numbers<[1], [0], [0], [1], [0, 0, 1, 1], [], []>} : vector<256x128xbf16>, vector<128x256xbf16>, vector<256x256xf32> -> vector<256x256xf32>
      %c2_15 = arith.constant 2 : index
      %c0_16 = arith.constant 0 : index
      %c0_17 = arith.constant 0 : index
      %30 = vector.load %arg4[%c2_15, %c0_16, %c0_17] : memref<4x1x256xf32, #tpu.memory_space<vmem>>, vector<1x1x256xf32>
      %31 = vector.shape_cast %30 : vector<1x1x256xf32> to vector<1x256xf32>
      %32 = vector.broadcast %31 : vector<1x256xf32> to vector<256x256xf32>
      %33 = arith.addf %29, %32 : vector<256x256xf32>
      %cst_18 = arith.constant 0.000000e+00 : f32
      %34 = vector.broadcast %cst_18 : f32 to vector<256x256xf32>
      %35 = arith.maximumf %33, %34 : vector<256x256xf32>
      %36 = arith.truncf %35 : vector<256x256xf32> to vector<256x256xbf16>
      %c2_19 = arith.constant 2 : index
      %c0_20 = arith.constant 0 : index
      %c0_21 = arith.constant 0 : index
      %37 = vector.load %arg5[%c2_19, %c0_20, %c0_21] : memref<4x256x128xbf16, #tpu.memory_space<vmem>>, vector<1x256x128xbf16>
      %38 = vector.shape_cast %37 : vector<1x256x128xbf16> to vector<256x128xbf16>
      %cst_22 = arith.constant dense<0.000000e+00> : vector<256x128xf32>
      %39 = tpu.matmul %36, %38, %cst_22 {dimension_numbers = #tpu.dot_dimension_numbers<[1], [0], [0], [1], [0, 0, 1, 1], [], []>} : vector<256x256xbf16>, vector<256x128xbf16>, vector<256x128xf32> -> vector<256x128xf32>
      %c2_23 = arith.constant 2 : index
      %c0_24 = arith.constant 0 : index
      %c0_25 = arith.constant 0 : index
      %40 = vector.load %arg6[%c2_23, %c0_24, %c0_25] : memref<4x1x128xf32, #tpu.memory_space<vmem>>, vector<1x1x128xf32>
      %41 = vector.shape_cast %40 : vector<1x1x128xf32> to vector<1x128xf32>
      %42 = vector.broadcast %41 : vector<1x128xf32> to vector<256x128xf32>
      %43 = arith.addf %39, %42 : vector<256x128xf32>
      %c0_26 = arith.constant 0 : index
      %c0_27 = arith.constant 0 : index
      %44 = vector.load %arg8[%c0_26, %c0_27] : memref<256x128xf32, #tpu.memory_space<vmem>>, vector<256x128xf32>
      %c0_28 = arith.constant 0 : index
      %c2_29 = arith.constant 2 : index
      %45 = vector.load %arg7[%c0_28, %c2_29] : memref<256x4xf32, #tpu.memory_space<vmem>>, vector<256x1xf32>
      %46 = vector.broadcast %45 : vector<256x1xf32> to vector<256x128xf32>
      %47 = arith.mulf %46, %43 : vector<256x128xf32>
      %48 = arith.addf %44, %47 : vector<256x128xf32>
      %c0_30 = arith.constant 0 : index
      %c0_31 = arith.constant 0 : index
      %49 = vector.load %arg8[%c0_30, %c0_31] : memref<256x128xf32, #tpu.memory_space<vmem>>, vector<256x128xf32>
      tpu.vector_store %arg8[%c0_30, %c0_31], %48 {strides = array<i32>} : memref<256x128xf32, #tpu.memory_space<vmem>>, vector<256x128xf32>,
    } else {
    }
    %c3_i32 = arith.constant 3 : i32
    %21 = arith.cmpi sle, %1, %c3_i32 : i32
    %c3_i32_8 = arith.constant 3 : i32
    %22 = arith.cmpi sge, %3, %c3_i32_8 : i32
    %23 = arith.andi %21, %22 : i1
    %24 = arith.extui %23 : i1 to i32
    %c0_i32_9 = arith.constant 0 : i32
    %25 = arith.cmpi ne, %24, %c0_i32_9 : i32
    scf.if %25 {
      %c0_10 = arith.constant 0 : index
      %c0_11 = arith.constant 0 : index
      %26 = vector.load %arg2[%c0_10, %c0_11] : memref<256x128xbf16, #tpu.memory_space<vmem>>, vector<256x128xbf16>
      %c3 = arith.constant 3 : index
      %c0_12 = arith.constant 0 : index
      %c0_13 = arith.constant 0 : index
      %27 = vector.load %arg3[%c3, %c0_12, %c0_13] : memref<4x128x256xbf16, #tpu.memory_space<vmem>>, vector<1x128x256xbf16>
      %28 = vector.shape_cast %27 : vector<1x128x256xbf16> to vector<128x256xbf16>
      %cst_14 = arith.constant dense<0.000000e+00> : vector<256x256xf32>
      %29 = tpu.matmul %26, %28, %cst_14 {dimension_numbers = #tpu.dot_dimension_numbers<[1], [0], [0], [1], [0, 0, 1, 1], [], []>} : vector<256x128xbf16>, vector<128x256xbf16>, vector<256x256xf32> -> vector<256x256xf32>
      %c3_15 = arith.constant 3 : index
      %c0_16 = arith.constant 0 : index
      %c0_17 = arith.constant 0 : index
      %30 = vector.load %arg4[%c3_15, %c0_16, %c0_17] : memref<4x1x256xf32, #tpu.memory_space<vmem>>, vector<1x1x256xf32>
      %31 = vector.shape_cast %30 : vector<1x1x256xf32> to vector<1x256xf32>
      %32 = vector.broadcast %31 : vector<1x256xf32> to vector<256x256xf32>
      %33 = arith.addf %29, %32 : vector<256x256xf32>
      %cst_18 = arith.constant 0.000000e+00 : f32
      %34 = vector.broadcast %cst_18 : f32 to vector<256x256xf32>
      %35 = arith.maximumf %33, %34 : vector<256x256xf32>
      %36 = arith.truncf %35 : vector<256x256xf32> to vector<256x256xbf16>
      %c3_19 = arith.constant 3 : index
      %c0_20 = arith.constant 0 : index
      %c0_21 = arith.constant 0 : index
      %37 = vector.load %arg5[%c3_19, %c0_20, %c0_21] : memref<4x256x128xbf16, #tpu.memory_space<vmem>>, vector<1x256x128xbf16>
      %38 = vector.shape_cast %37 : vector<1x256x128xbf16> to vector<256x128xbf16>
      %cst_22 = arith.constant dense<0.000000e+00> : vector<256x128xf32>
      %39 = tpu.matmul %36, %38, %cst_22 {dimension_numbers = #tpu.dot_dimension_numbers<[1], [0], [0], [1], [0, 0, 1, 1], [], []>} : vector<256x256xbf16>, vector<256x128xbf16>, vector<256x128xf32> -> vector<256x128xf32>
      %c3_23 = arith.constant 3 : index
      %c0_24 = arith.constant 0 : index
      %c0_25 = arith.constant 0 : index
      %40 = vector.load %arg6[%c3_23, %c0_24, %c0_25] : memref<4x1x128xf32, #tpu.memory_space<vmem>>, vector<1x1x128xf32>
      %41 = vector.shape_cast %40 : vector<1x1x128xf32> to vector<1x128xf32>
      %42 = vector.broadcast %41 : vector<1x128xf32> to vector<256x128xf32>
      %43 = arith.addf %39, %42 : vector<256x128xf32>
      %c0_26 = arith.constant 0 : index
      %c0_27 = arith.constant 0 : index
      %44 = vector.load %arg8[%c0_26, %c0_27] : memref<256x128xf32, #tpu.memory_space<vmem>>, vector<256x128xf32>
      %c0_28 = arith.constant 0 : index
      %c3_29 = arith.constant 3 : index
      %45 = vector.load %arg7[%c0_28, %c3_29] : memref<256x4xf32, #tpu.memory_space<vmem>>, vector<256x1xf32>
      %46 = vector.broadcast %45 : vector<256x1xf32> to vector<256x128xf32>
      %47 = arith.mulf %46, %43 : vector<256x128xf32>
      %48 = arith.addf %44, %47 : vector<256x128xf32>
      %c0_30 = arith.constant 0 : index
      %c0_31 = arith.constant 0 : index
      %49 = vector.load %arg8[%c0_30, %c0_31] : memref<256x128xf32, #tpu.memory_space<vmem>>, vector<256x128xf32>
      tpu.vector_store %arg8[%c0_30, %c0_31], %48 {strides = array<i32>} : memref<256x128xf32, #tpu.memory_space<vmem>>, vector<256x128xf32>,
    } else {
    }
    return
  }
  func.func @transform_0(%arg0: i32, %arg1: memref<4x2xi32, #tpu.memory_space<smem>>) -> (i32, i32) {
    %c0_i32 = arith.constant 0 : i32
    %c0_i32_0 = arith.constant 0 : i32
    return %arg0, %c0_i32 : i32, i32
  }
  func.func @transform_1(%arg0: i32, %arg1: memref<4x2xi32, #tpu.memory_space<smem>>) -> (i32, i32, i32) {
    %c0_i32 = arith.constant 0 : i32
    %c0_i32_0 = arith.constant 0 : i32
    %c0_i32_1 = arith.constant 0 : i32
    %c0_i32_2 = arith.constant 0 : i32
    return %c0_i32, %c0_i32_0, %c0_i32_1 : i32, i32, i32
  }
  func.func @transform_2(%arg0: i32, %arg1: memref<4x2xi32, #tpu.memory_space<smem>>) -> (i32, i32, i32) {
    %c0_i32 = arith.constant 0 : i32
    %c0_i32_0 = arith.constant 0 : i32
    %c0_i32_1 = arith.constant 0 : i32
    %c0_i32_2 = arith.constant 0 : i32
    return %c0_i32, %c0_i32_0, %c0_i32_1 : i32, i32, i32
  }
  func.func @transform_3(%arg0: i32, %arg1: memref<4x2xi32, #tpu.memory_space<smem>>) -> (i32, i32, i32) {
    %c0_i32 = arith.constant 0 : i32
    %c0_i32_0 = arith.constant 0 : i32
    %c0_i32_1 = arith.constant 0 : i32
    %c0_i32_2 = arith.constant 0 : i32
    return %c0_i32, %c0_i32_0, %c0_i32_1 : i32, i32, i32
  }
  func.func @transform_4(%arg0: i32, %arg1: memref<4x2xi32, #tpu.memory_space<smem>>) -> (i32, i32, i32) {
    %c0_i32 = arith.constant 0 : i32
    %c0_i32_0 = arith.constant 0 : i32
    %c0_i32_1 = arith.constant 0 : i32
    %c0_i32_2 = arith.constant 0 : i32
    return %c0_i32, %c0_i32_0, %c0_i32_1 : i32, i32, i32
  }
  func.func @transform_5(%arg0: i32, %arg1: memref<4x2xi32, #tpu.memory_space<smem>>) -> (i32, i32) {
    %c0_i32 = arith.constant 0 : i32
    %c0_i32_0 = arith.constant 0 : i32
    return %arg0, %c0_i32 : i32, i32
  }
  func.func @transform_6(%arg0: i32, %arg1: memref<4x2xi32, #tpu.memory_space<smem>>) -> (i32, i32) {
    %c0_i32 = arith.constant 0 : i32
    %c0_i32_0 = arith.constant 0 : i32
    return %arg0, %c0_i32 : i32, i32
  }
}

</mosaic_0001>

<llo_original>
// kernel: simple_moe_layer.1
$region0: #{simple_moe_layer.1}
  #allocation0 [shape = 'u32[]', space=smem, size = 0x4, offset = 0x4, fixed_abs, tag = 'smem constant byte address 0x4 - core index']
  #allocation1 [shape = 'u32[144,128]{1,0:T(1,128)}', space=vmem, size = 0x12000, scoped, tag = 'internal scratch']
  #allocation2 [shape = 's32[1]{0}', space=sflag, size = 0x4, scoped, tag = 'scoped memory for simple_moe_layer.1']
  #allocation3 [shape = 'u8[2048]{0}', space=smem, size = 0x800, scoped, tag = 'prefetched SMEM operand 0']
  %s0 = inlined_call_operand.vmem [shape: s32[4,2], index: 0, kind: input, shape index: {}]
  %s1 = inlined_call_operand.vmem [shape: bf16[1024,128], index: 1, kind: input, shape index: {}]
  %s2 = inlined_call_operand.vmem [shape: bf16[4,128,256], index: 2, kind: input, shape index: {}]
  %s3 = inlined_call_operand.vmem [shape: f32[4,1,256], index: 3, kind: input, shape index: {}]
  %s4 = inlined_call_operand.vmem [shape: bf16[4,256,128], index: 4, kind: input, shape index: {}]
  %s5 = inlined_call_operand.vmem [shape: f32[4,1,128], index: 5, kind: input, shape index: {}]
  %s6 = inlined_call_operand.vmem [shape: f32[1024,4], index: 6, kind: input, shape index: {}]
  %s7 = inlined_call_operand.vmem [shape: f32[1024,128], index: 7, kind: output, shape index: {}]
  %s8 = sld [smem:[#allocation0]]
  $region73: #{simple_moe_layer.1} parent=0
    _
  %s10 = ssub.s32 1, %s8
  %s11 = scalar_select 0, %s10, %s8
  %s12 = sshll.u32 %s0, 4
  %s13 = int_to_ptr.vmem [resolvable:$true] %s12
  %15 = dma.vmem_to_smem %s13, 64, [#allocation3], [#allocation2]
  %16 = dma.done [#allocation2], 64
  %17 = sfence
  loop: start=0, step=1, limit=6
  $region2: #{simple_moe_layer.1} parent=0 // loop_pre_header
    _
  $region3: #{simple_moe_layer.1} parent=0 // loop_header
    %s19 = sphi 0, %s23
    %p20 = scmp.ge.s32.totalorder %s19, 6
    %s29 = sphi 0, %s31
    %s32 = sphi 0, %s29
    %s33 = sphi 0, %s32
    %s49 = sphi 0, %s33
    %s53 = sphi 0, %s53
    %s55 = sphi 0, %s53
    %s56 = sphi 0, %s55
    %s70 = sphi 0, %s56
    %s74 = sphi 0, %s74
    %s76 = sphi 0, %s74
    %s77 = sphi 0, %s76
    %s91 = sphi 0, %s77
    %s95 = sphi 0, %s95
    %s97 = sphi 0, %s95
    %s98 = sphi 0, %s97
    %s112 = sphi 0, %s98
    %s116 = sphi 0, %s116
    %s118 = sphi 0, %s116
    %s119 = sphi 0, %s118
    %s133 = sphi 0, %s119
    %s139 = sphi 0, %s141
    %s142 = sphi 0, %s139
    %s143 = sphi 0, %s142
    %s159 = sphi 0, %s143
    %s165 = sphi 0, %s167
    %s168 = sphi 0, %s165
    %s169 = sphi 0, %s168
    %s185 = sphi 0, %s169
  $region4: #{simple_moe_layer.1} parent=0 // loop_header_branch
    %22 = sbr.rel (%p20) target = $region8
  $region5: #{simple_moe_layer.1} parent=0 // loop_body
    %s24 = ssub.s32 %s19, 1
    %s25 = ssub.s32 %s19, 2
    %s26 = sadd.s32 %s19, 1
    %s27 = ssub.s32 %s19, %s26
    %p28 = scmp.eq.s32.totalorder %s27, 0
    %s30 = sadd.s32 %s29, 1
    %s31 = scalar_select %p28, %s29, %s30
    %p34 = pneg %p28
    %p35 = scmp.eq.s32.totalorder %s19, 3
    %p36 = por %p34, %p35
    %p37 = scmp.ne.s32.totalorder %s29, %s32
    %p38 = scmp.eq.s32.totalorder %s19, 0
    %p39 = por %p37, %p38
    %p40 = scmp.ne.s32.totalorder %s29, %s32
    %p41 = scmp.eq.s32.totalorder %s24, 3
    %p42 = por %p40, %p41
    %p43 = scmp.ne.s32.totalorder %s32, %s33
    %p44 = scmp.eq.s32.totalorder %s24, 0
    %p45 = por %p43, %p44
    %p46 = scmp.ne.s32.totalorder %s32, %s33
    %p47 = scmp.eq.s32.totalorder %s25, 3
    %p48 = por %p46, %p47
    %p50 = scmp.ne.s32.totalorder %s33, %s49
    %p51 = scmp.eq.s32.totalorder %s25, 0
    %p52 = por %p50, %p51
    %s54 = sadd.s32 %s53, 1
    %p57 = scmp.eq.s32.totalorder %s19, 3
    %p58 = scmp.ne.s32.totalorder %s53, %s55
    %p59 = scmp.eq.s32.totalorder %s19, 0
    %p60 = por %p58, %p59
    %p61 = scmp.ne.s32.totalorder %s53, %s55
    %p62 = scmp.eq.s32.totalorder %s24, 3
    %p63 = por %p61, %p62
    %p64 = scmp.ne.s32.totalorder %s55, %s56
    %p65 = scmp.eq.s32.totalorder %s24, 0
    %p66 = por %p64, %p65
    %p67 = scmp.ne.s32.totalorder %s55, %s56
    %p68 = scmp.eq.s32.totalorder %s25, 3
    %p69 = por %p67, %p68
    %p71 = scmp.ne.s32.totalorder %s56, %s70
    %p72 = scmp.eq.s32.totalorder %s25, 0
    %p73 = por %p71, %p72
    %s75 = sadd.s32 %s74, 1
    %p78 = scmp.eq.s32.totalorder %s19, 3
    %p79 = scmp.ne.s32.totalorder %s74, %s76
    %p80 = scmp.eq.s32.totalorder %s19, 0
    %p81 = por %p79, %p80
    %p82 = scmp.ne.s32.totalorder %s74, %s76
    %p83 = scmp.eq.s32.totalorder %s24, 3
    %p84 = por %p82, %p83
    %p85 = scmp.ne.s32.totalorder %s76, %s77
    %p86 = scmp.eq.s32.totalorder %s24, 0
    %p87 = por %p85, %p86
    %p88 = scmp.ne.s32.totalorder %s76, %s77
    %p89 = scmp.eq.s32.totalorder %s25, 3
    %p90 = por %p88, %p89
    %p92 = scmp.ne.s32.totalorder %s77, %s91
    %p93 = scmp.eq.s32.totalorder %s25, 0
    %p94 = por %p92, %p93
    %s96 = sadd.s32 %s95, 1
    %p99 = scmp.eq.s32.totalorder %s19, 3
    %p100 = scmp.ne.s32.totalorder %s95, %s97
    %p101 = scmp.eq.s32.totalorder %s19, 0
    %p102 = por %p100, %p101
    %p103 = scmp.ne.s32.totalorder %s95, %s97
    %p104 = scmp.eq.s32.totalorder %s24, 3
    %p105 = por %p103, %p104
    %p106 = scmp.ne.s32.totalorder %s97, %s98
    %p107 = scmp.eq.s32.totalorder %s24, 0
    %p108 = por %p106, %p107
    %p109 = scmp.ne.s32.totalorder %s97, %s98
    %p110 = scmp.eq.s32.totalorder %s25, 3
    %p111 = por %p109, %p110
    %p113 = scmp.ne.s32.totalorder %s98, %s112
    %p114 = scmp.eq.s32.totalorder %s25, 0
    %p115 = por %p113, %p114
    %s117 = sadd.s32 %s116, 1
    %p120 = scmp.eq.s32.totalorder %s19, 3
    %p121 = scmp.ne.s32.totalorder %s116, %s118
    %p122 = scmp.eq.s32.totalorder %s19, 0
    %p123 = por %p121, %p122
    %p124 = scmp.ne.s32.totalorder %s116, %s118
    %p125 = scmp.eq.s32.totalorder %s24, 3
    %p126 = por %p124, %p125
    %p127 = scmp.ne.s32.totalorder %s118, %s119
    %p128 = scmp.eq.s32.totalorder %s24, 0
    %p129 = por %p127, %p128
    %p130 = scmp.ne.s32.totalorder %s118, %s119
    %p131 = scmp.eq.s32.totalorder %s25, 3
    %p132 = por %p130, %p131
    %p134 = scmp.ne.s32.totalorder %s119, %s133
    %p135 = scmp.eq.s32.totalorder %s25, 0
    %p136 = por %p134, %p135
    %s137 = ssub.s32 %s19, %s26
    %p138 = scmp.eq.s32.totalorder %s137, 0
    %s140 = sadd.s32 %s139, 1
    %s141 = scalar_select %p138, %s139, %s140
    %p144 = pneg %p138
    %p145 = scmp.eq.s32.totalorder %s19, 3
    %p146 = por %p144, %p145
    %p147 = scmp.ne.s32.totalorder %s139, %s142
    %p148 = scmp.eq.s32.totalorder %s19, 0
    %p149 = por %p147, %p148
    %p150 = scmp.ne.s32.totalorder %s139, %s142
    %p151 = scmp.eq.s32.totalorder %s24, 3
    %p152 = por %p150, %p151
    %p153 = scmp.ne.s32.totalorder %s142, %s143
    %p154 = scmp.eq.s32.totalorder %s24, 0
    %p155 = por %p153, %p154
    %p156 = scmp.ne.s32.totalorder %s142, %s143
    %p157 = scmp.eq.s32.totalorder %s25, 3
    %p158 = por %p156, %p157
    %p160 = scmp.ne.s32.totalorder %s143, %s159
    %p161 = scmp.eq.s32.totalorder %s25, 0
    %p162 = por %p160, %p161
    %s163 = ssub.s32 %s19, %s26
    %p164 = scmp.eq.s32.totalorder %s163, 0
    %s166 = sadd.s32 %s165, 1
    %s167 = scalar_select %p164, %s165, %s166
    %p170 = pneg %p164
    %p171 = scmp.eq.s32.totalorder %s19, 3
    %p172 = por %p170, %p171
    %p173 = scmp.ne.s32.totalorder %s165, %s168
    %p174 = scmp.eq.s32.totalorder %s19, 0
    %p175 = por %p173, %p174
    %p176 = scmp.ne.s32.totalorder %s165, %s168
    %p177 = scmp.eq.s32.totalorder %s24, 3
    %p178 = por %p176, %p177
    %p179 = scmp.ne.s32.totalorder %s168, %s169
    %p180 = scmp.eq.s32.totalorder %s24, 0
    %p181 = por %p179, %p180
    %p182 = scmp.ne.s32.totalorder %s168, %s169
    %p183 = scmp.eq.s32.totalorder %s25, 3
    %p184 = por %p182, %p183
    %p186 = scmp.ne.s32.totalorder %s169, %s185
    %p187 = scmp.eq.s32.totalorder %s25, 0
    %p188 = por %p186, %p187
    %p189 = scmp.le.s32.totalorder 1, %s19
    %p190 = scmp.lt.s32.totalorder %s19, 5
    %p191 = pnand %p189, %p190
    %p192 = pneg %p191
    // Predicated region
    $region9: #{simple_moe_layer.1} parent=5 // pred_check
      _
    $region10: #{simple_moe_layer.1} parent=5 // pred_check_branch
      %194 = sbr.rel (%p191) target = $region12
    $region11: #{simple_moe_layer.1} parent=5 // pred_region
      %s195 = ssub.s32 %s19, 1
      // Predicated region
      $region13: #{simple_moe_layer.1} parent=11 // pred_check
        %p196 = pneg %p66
      $region14: #{simple_moe_layer.1} parent=11 // pred_check_branch
        %198 = sbr.rel (%p196) target = $region16
      $region15: #{simple_moe_layer.1} parent=11 // pred_region
        _
      $region16: #{simple_moe_layer.1} parent=11 // pred_fallthru
        _
      // Predicated region
      $region17: #{simple_moe_layer.1} parent=11 // pred_check
        %p199 = pneg %p87
      $region18: #{simple_moe_layer.1} parent=11 // pred_check_branch
        %201 = sbr.rel (%p199) target = $region20
      $region19: #{simple_moe_layer.1} parent=11 // pred_region
        _
      $region20: #{simple_moe_layer.1} parent=11 // pred_fallthru
        _
      // Predicated region
      $region21: #{simple_moe_layer.1} parent=11 // pred_check
        %p202 = pneg %p108
      $region22: #{simple_moe_layer.1} parent=11 // pred_check_branch
        %204 = sbr.rel (%p202) target = $region24
      $region23: #{simple_moe_layer.1} parent=11 // pred_region
        _
      $region24: #{simple_moe_layer.1} parent=11 // pred_fallthru
        _
      // Predicated region
      $region25: #{simple_moe_layer.1} parent=11 // pred_check
        %p205 = pneg %p129
      $region26: #{simple_moe_layer.1} parent=11 // pred_check_branch
        %207 = sbr.rel (%p205) target = $region28
      $region27: #{simple_moe_layer.1} parent=11 // pred_region
        _
      $region28: #{simple_moe_layer.1} parent=11 // pred_fallthru
        _
    $region12: #{simple_moe_layer.1} parent=5 // pred_fallthru
      _
    %p208 = scmp.lt.s32.totalorder %s19, 4
    // Predicated region
    $region29: #{simple_moe_layer.1} parent=5 // pred_check
      %p209 = pneg %p208
    $region30: #{simple_moe_layer.1} parent=5 // pred_check_branch
      %211 = sbr.rel (%p209) target = $region32
    $region31: #{simple_moe_layer.1} parent=5 // pred_region
      // Predicated region
      $region33: #{simple_moe_layer.1} parent=31 // pred_check
        %p212 = pneg %p39
      $region34: #{simple_moe_layer.1} parent=31 // pred_check_branch
        %214 = sbr.rel (%p212) target = $region36
      $region35: #{simple_moe_layer.1} parent=31 // pred_region
        %s215 = smul.u32 32, %s19
        %p216 = scmp.lt.s32.totalorder %s215, 127
        %s217 = scalar_select %p216, %s215, 127
        %s218 = smul.addr %s217, 4
        %s219 = scalar_lea.vmem %s1, %s218
        %s220 = smul.u32 32, %s19
      $region36: #{simple_moe_layer.1} parent=31 // pred_fallthru
        _
      // Predicated region
      $region37: #{simple_moe_layer.1} parent=31 // pred_check
        %p221 = pneg %p149
      $region38: #{simple_moe_layer.1} parent=31 // pred_check_branch
        %223 = sbr.rel (%p221) target = $region40
      $region39: #{simple_moe_layer.1} parent=31 // pred_region
        %s224 = smul.u32 32, %s19
        %p225 = scmp.lt.s32.totalorder %s224, 127
        %s226 = scalar_select %p225, %s224, 127
        %s227 = smul.addr %s226, 8
        %s228 = scalar_lea.vmem %s6, %s227
        %s229 = smul.u32 32, %s19
      $region40: #{simple_moe_layer.1} parent=31 // pred_fallthru
        _
    $region32: #{simple_moe_layer.1} parent=5 // pred_fallthru
      _
    %p230 = scmp.le.s32.totalorder 1, %s19
    %p231 = scmp.lt.s32.totalorder %s19, 5
    %p232 = pnand %p230, %p231
    %p233 = pneg %p232
    // Predicated region
    $region41: #{simple_moe_layer.1} parent=5 // pred_check
      _
    $region42: #{simple_moe_layer.1} parent=5 // pred_check_branch
      %235 = sbr.rel (%p232) target = $region44
    $region43: #{simple_moe_layer.1} parent=5 // pred_region
      %s236 = ssub.s32 %s19, 1
      %s237 = smul.u32 32, %s24
      %p238 = scmp.lt.s32.totalorder %s237, 127
      %s239 = scalar_select %p238, %s237, 127
      %s240 = smul.addr %s239, 4
      %s241 = scalar_lea.vmem %s1, %s240
      %p242 = pneg %p45
      %p243 = pneg %p42
      %p244 = pneg %p66
      %p245 = pneg %p63
      %p246 = pneg %p87
      %p247 = pneg %p84
      %p248 = pneg %p108
      %p249 = pneg %p105
      %p250 = pneg %p129
      %p251 = pneg %p126
      %s252 = smul.u32 32, %s24
      %p253 = scmp.lt.s32.totalorder %s252, 127
      %s254 = scalar_select %p253, %s252, 127
      %s255 = smul.addr %s254, 8
      %s256 = scalar_lea.vmem %s6, %s255
      %p257 = pneg %p155
      %p258 = pneg %p152
      %p259 = pneg %p181
      %p260 = pneg %p178
      %s261 = smul.u32 32, %s24
      %p262 = scmp.lt.s32.totalorder %s261, 127
      %s263 = scalar_select %p262, %s261, 127
      %s264 = smul.addr %s263, 8
      %s265 = scalar_lea.vmem %s7, %s264
      %s266 = smul.u32 32, %s24
      %p267 = scmp.lt.s32.totalorder %s266, 127
      %s268 = scalar_select %p267, %s266, 127
      %s269 = smul.addr %s268, 4
      %s270 = scalar_lea.vmem %s1, %s269
      %s271 = smul.u32 32, %s24
      %s272 = smul.u32 32, %s24
      %p273 = scmp.lt.s32.totalorder %s272, 127
      %s274 = scalar_select %p273, %s272, 127
      %s275 = smul.addr %s274, 8
      %s276 = scalar_lea.vmem %s6, %s275
      %s277 = smul.u32 32, %s24
      %s278 = smul.u32 32, %s24
      %p279 = scmp.lt.s32.totalorder %s278, 127
      %s280 = scalar_select %p279, %s278, 127
      %s281 = smul.addr %s280, 8
      %s282 = scalar_lea.vmem %s7, %s281
      %s283 = smul.u32 32, %s24
      %s285 = smul.u32 %s24, 128
      %s286 = sld [smem:[#allocation3 + %s285]]
      %s287 = sadd.s32 %s285, 1
      %s288 = sld [smem:[#allocation3 + %s287]]
      %289 = vst [vmem:[%s282] sm:$0xff] 0.0
      %290 = vst [vmem:[%s282 + $0x8] sm:$0xff] 0.0
      %291 = vst [vmem:[%s282 + $0x10] sm:$0xff] 0.0
      %292 = vst [vmem:[%s282 + $0x18] sm:$0xff] 0.0
      %293 = vst [vmem:[%s282 + $0x20] sm:$0xff] 0.0
      %294 = vst [vmem:[%s282 + $0x28] sm:$0xff] 0.0
      %295 = vst [vmem:[%s282 + $0x30] sm:$0xff] 0.0
      %296 = vst [vmem:[%s282 + $0x38] sm:$0xff] 0.0
      %297 = vst [vmem:[%s282 + $0x40] sm:$0xff] 0.0
      %298 = vst [vmem:[%s282 + $0x48] sm:$0xff] 0.0
      %299 = vst [vmem:[%s282 + $0x50] sm:$0xff] 0.0
      %300 = vst [vmem:[%s282 + $0x58] sm:$0xff] 0.0
      %301 = vst [vmem:[%s282 + $0x60] sm:$0xff] 0.0
      %302 = vst [vmem:[%s282 + $0x68] sm:$0xff] 0.0
      %303 = vst [vmem:[%s282 + $0x70] sm:$0xff] 0.0
      %304 = vst [vmem:[%s282 + $0x78] sm:$0xff] 0.0
      %305 = vst [vmem:[%s282 + $0x80] sm:$0xff] 0.0
      %306 = vst [vmem:[%s282 + $0x88] sm:$0xff] 0.0
      %307 = vst [vmem:[%s282 + $0x90] sm:$0xff] 0.0
      %308 = vst [vmem:[%s282 + $0x98] sm:$0xff] 0.0
      %309 = vst [vmem:[%s282 + $0xa0] sm:$0xff] 0.0
      %310 = vst [vmem:[%s282 + $0xa8] sm:$0xff] 0.0
      %311 = vst [vmem:[%s282 + $0xb0] sm:$0xff] 0.0
      %312 = vst [vmem:[%s282 + $0xb8] sm:$0xff] 0.0
      %313 = vst [vmem:[%s282 + $0xc0] sm:$0xff] 0.0
      %314 = vst [vmem:[%s282 + $0xc8] sm:$0xff] 0.0
      %315 = vst [vmem:[%s282 + $0xd0] sm:$0xff] 0.0
      %316 = vst [vmem:[%s282 + $0xd8] sm:$0xff] 0.0
      %317 = vst [vmem:[%s282 + $0xe0] sm:$0xff] 0.0
      %318 = vst [vmem:[%s282 + $0xe8] sm:$0xff] 0.0
      %319 = vst [vmem:[%s282 + $0xf0] sm:$0xff] 0.0
      %320 = vst [vmem:[%s282 + $0xf8] sm:$0xff] 0.0
      %p321 = scmp.le.s32.totalorder %s286, 0
      %p322 = scmp.ge.s32.totalorder %s288, 0
      %p323 = pnand %p321, %p322
      %p324 = pneg %p323
      // Predicated region
      $region45: #{simple_moe_layer.1} parent=43 // pred_check
        _
      $region46: #{simple_moe_layer.1} parent=43 // pred_check_branch
        %326 = sbr.rel (%p323) target = $region48
      $region47: #{simple_moe_layer.1} parent=43 // pred_region
        %v327 = vld [vmem:[%s270] sm:$0xf]
        %v328 = vld [vmem:[%s270 + $0x4] sm:$0xf]
        %v329 = vld [vmem:[%s270 + $0x8] sm:$0xf]
        %v330 = vld [vmem:[%s270 + $0xc] sm:$0xf]
        %v331 = vld [vmem:[%s270 + $0x10] sm:$0xf]
        %v332 = vld [vmem:[%s270 + $0x14] sm:$0xf]
        %v333 = vld [vmem:[%s270 + $0x18] sm:$0xf]
        %v334 = vld [vmem:[%s270 + $0x1c] sm:$0xf]
        %v335 = vld [vmem:[%s270 + $0x20] sm:$0xf]
        %v336 = vld [vmem:[%s270 + $0x24] sm:$0xf]
        %v337 = vld [vmem:[%s270 + $0x28] sm:$0xf]
        %v338 = vld [vmem:[%s270 + $0x2c] sm:$0xf]
        %v339 = vld [vmem:[%s270 + $0x30] sm:$0xf]
        %v340 = vld [vmem:[%s270 + $0x34] sm:$0xf]
        %v341 = vld [vmem:[%s270 + $0x38] sm:$0xf]
        %v342 = vld [vmem:[%s270 + $0x3c] sm:$0xf]
        %v343 = vld [vmem:[%s270 + $0x40] sm:$0xf]
        %v344 = vld [vmem:[%s270 + $0x44] sm:$0xf]
        %v345 = vld [vmem:[%s270 + $0x48] sm:$0xf]
        %v346 = vld [vmem:[%s270 + $0x4c] sm:$0xf]
        %v347 = vld [vmem:[%s270 + $0x50] sm:$0xf]
        %v348 = vld [vmem:[%s270 + $0x54] sm:$0xf]
        %v349 = vld [vmem:[%s270 + $0x58] sm:$0xf]
        %v350 = vld [vmem:[%s270 + $0x5c] sm:$0xf]
        %v351 = vld [vmem:[%s270 + $0x60] sm:$0xf]
        %v352 = vld [vmem:[%s270 + $0x64] sm:$0xf]
        %v353 = vld [vmem:[%s270 + $0x68] sm:$0xf]
        %v354 = vld [vmem:[%s270 + $0x6c] sm:$0xf]
        %v355 = vld [vmem:[%s270 + $0x70] sm:$0xf]
        %v356 = vld [vmem:[%s270 + $0x74] sm:$0xf]
        %v357 = vld [vmem:[%s270 + $0x78] sm:$0xf]
        %v358 = vld [vmem:[%s270 + $0x7c] sm:$0xf]
        %v359 = vld [vmem:[%s2] sm:$0xff]
        %v360 = vld [vmem:[%s2 + $0x8] sm:$0xff]
        %v361 = vld [vmem:[%s2 + $0x10] sm:$0xff]
        %v362 = vld [vmem:[%s2 + $0x18] sm:$0xff]
        %v363 = vld [vmem:[%s2 + $0x20] sm:$0xff]
        %v364 = vld [vmem:[%s2 + $0x28] sm:$0xff]
        %v365 = vld [vmem:[%s2 + $0x30] sm:$0xff]
        %v366 = vld [vmem:[%s2 + $0x38] sm:$0xff]
        %v367 = vld [vmem:[%s2 + $0x40] sm:$0xff]
        %v368 = vld [vmem:[%s2 + $0x48] sm:$0xff]
        %v369 = vld [vmem:[%s2 + $0x50] sm:$0xff]
        %v370 = vld [vmem:[%s2 + $0x58] sm:$0xff]
        %v371 = vld [vmem:[%s2 + $0x60] sm:$0xff]
        %v372 = vld [vmem:[%s2 + $0x68] sm:$0xff]
        %v373 = vld [vmem:[%s2 + $0x70] sm:$0xff]
        %v374 = vld [vmem:[%s2 + $0x78] sm:$0xff]
        %v375 = vld [vmem:[%s3] sm:$0x3]
        %v377 = vlaneseq
        %v378 = vshrl.u32 %v377, 7
        %v379 = vsub.s32 0, %v378
        %v380 = vrot.slane %v375, %v379
        %v381 = vlaneseq
        %v382 = vshrl.u32 %v381, 7
        %v383 = vsub.s32 1, %v382
        %v384 = vrot.slane %v375, %v383
        %v419 = vunpack.c.l.b16 %v327
        %v420 = vunpack.c.l.b16 %v328
        %v421 = vunpack.c.l.b16 %v329
        %v422 = vunpack.c.l.b16 %v330
        %v423 = vunpack.c.l.b16 %v331
        %v424 = vunpack.c.l.b16 %v332
        %v425 = vunpack.c.l.b16 %v333
        %v426 = vunpack.c.l.b16 %v334
        %v427 = vunpack.c.l.b16 %v335
        %v428 = vunpack.c.l.b16 %v336
        %v429 = vunpack.c.l.b16 %v337
        %v430 = vunpack.c.l.b16 %v338
        %v431 = vunpack.c.l.b16 %v339
        %v432 = vunpack.c.l.b16 %v340
        %v433 = vunpack.c.l.b16 %v341
        %v434 = vunpack.c.l.b16 %v342
        %v435 = vunpack.c.l.b16 %v343
        %v436 = vunpack.c.l.b16 %v344
        %v437 = vunpack.c.l.b16 %v345
        %v438 = vunpack.c.l.b16 %v346
        %v439 = vunpack.c.l.b16 %v347
        %v440 = vunpack.c.l.b16 %v348
        %v441 = vunpack.c.l.b16 %v349
        %v442 = vunpack.c.l.b16 %v350
        %v443 = vunpack.c.l.b16 %v351
        %v444 = vunpack.c.l.b16 %v352
        %v445 = vunpack.c.l.b16 %v353
        %v446 = vunpack.c.l.b16 %v354
        %v447 = vunpack.c.l.b16 %v355
        %v448 = vunpack.c.l.b16 %v356
        %v449 = vunpack.c.l.b16 %v357
        %v450 = vunpack.c.l.b16 %v358
        %v451 = vpack.c.b16 %v420, %v419
        %v452 = vpack.c.b16 %v422, %v421
        %v453 = vpack.c.b16 %v424, %v423
        %v454 = vpack.c.b16 %v426, %v425
        %v455 = vpack.c.b16 %v428, %v427
        %v456 = vpack.c.b16 %v430, %v429
        %v457 = vpack.c.b16 %v432, %v431
        %v458 = vpack.c.b16 %v434, %v433
        %v459 = vpack.c.b16 %v436, %v435
        %v460 = vpack.c.b16 %v438, %v437
        %v461 = vpack.c.b16 %v440, %v439
        %v462 = vpack.c.b16 %v442, %v441
        %v463 = vpack.c.b16 %v444, %v443
        %v464 = vpack.c.b16 %v446, %v445
        %v465 = vpack.c.b16 %v448, %v447
        %v466 = vpack.c.b16 %v450, %v449
        %v499 = vunpack.c.l.b16 %v359
        %v500 = vunpack.c.h.b16 %v359
        %v501 = vunpack.c.l.b16 %v360
        %v502 = vunpack.c.h.b16 %v360
        %v503 = vunpack.c.l.b16 %v361
        %v504 = vunpack.c.h.b16 %v361
        %v505 = vunpack.c.l.b16 %v362
        %v506 = vunpack.c.h.b16 %v362
        %v507 = vunpack.c.l.b16 %v363
        %v508 = vunpack.c.h.b16 %v363
        %v509 = vunpack.c.l.b16 %v364
        %v510 = vunpack.c.h.b16 %v364
        %v511 = vunpack.c.l.b16 %v365
        %v512 = vunpack.c.h.b16 %v365
        %v513 = vunpack.c.l.b16 %v366
        %v514 = vunpack.c.h.b16 %v366
        %v515 = vunpack.c.l.b16 %v367
        %v516 = vunpack.c.h.b16 %v367
        %v517 = vunpack.c.l.b16 %v368
        %v518 = vunpack.c.h.b16 %v368
        %v519 = vunpack.c.l.b16 %v369
        %v520 = vunpack.c.h.b16 %v369
        %v521 = vunpack.c.l.b16 %v370
        %v522 = vunpack.c.h.b16 %v370
        %v523 = vunpack.c.l.b16 %v371
        %v524 = vunpack.c.h.b16 %v371
        %v525 = vunpack.c.l.b16 %v372
        %v526 = vunpack.c.h.b16 %v372
        %v527 = vunpack.c.l.b16 %v373
        %v528 = vunpack.c.h.b16 %v373
        %v529 = vunpack.c.l.b16 %v374
        %v530 = vunpack.c.h.b16 %v374
        %v531 = vpack.c.b16 %v501, %v499
        %v532 = vpack.c.b16 %v502, %v500
        %v533 = vpack.c.b16 %v505, %v503
        %v534 = vpack.c.b16 %v506, %v504
        %v535 = vpack.c.b16 %v509, %v507
        %v536 = vpack.c.b16 %v510, %v508
        %v537 = vpack.c.b16 %v513, %v511
        %v538 = vpack.c.b16 %v514, %v512
        %v539 = vpack.c.b16 %v517, %v515
        %v540 = vpack.c.b16 %v518, %v516
        %v541 = vpack.c.b16 %v521, %v519
        %v542 = vpack.c.b16 %v522, %v520
        %v543 = vpack.c.b16 %v525, %v523
        %v544 = vpack.c.b16 %v526, %v524
        %v545 = vpack.c.b16 %v529, %v527
        %v546 = vpack.c.b16 %v530, %v528
        %563 = vmatprep.subr.bf16.mxu0 %v546
        %564 = vmatpush1.bf16.msra.mxu0 %v545
        %565 = vmatprep.subr.bf16.mxu0 %v544
        %566 = vmatpush1.bf16.msra.mxu0 %v543
        %567 = vmatprep.subr.bf16.mxu0 %v542
        %568 = vmatpush1.bf16.msra.mxu0 %v541
        %569 = vmatprep.subr.bf16.mxu0 %v540
        %570 = vmatpush1.bf16.msra.mxu0 %v539
        %571 = vmatprep.subr.bf16.mxu0 %v538
        %572 = vmatpush1.bf16.msra.mxu0 %v537
        %573 = vmatprep.subr.bf16.mxu0 %v536
        %574 = vmatpush1.bf16.msra.mxu0 %v535
        %575 = vmatprep.subr.bf16.mxu0 %v534
        %576 = vmatpush1.bf16.msra.mxu0 %v533
        %577 = vmatprep.subr.bf16.mxu0 %v532
        %578 = vmatpush1.bf16.msra.mxu0 %v531
        %579 = vmatprep.subr.bf16.mxu0 0
        %580 = vmatpush2.bf16.msra.mxu0 0
        %581 = vmatprep.subr.bf16.mxu0 0
        %582 = vmatpush2.bf16.msra.mxu0 0
        %583 = vmatprep.subr.bf16.mxu0 0
        %584 = vmatpush2.bf16.msra.mxu0 0
        %585 = vmatprep.subr.bf16.mxu0 0
        %586 = vmatpush2.bf16.msra.mxu0 0
        %587 = vmatprep.subr.bf16.mxu0 0
        %588 = vmatpush2.bf16.msra.mxu0 0
        %589 = vmatprep.subr.bf16.mxu0 0
        %590 = vmatpush2.bf16.msra.mxu0 0
        %591 = vmatprep.subr.bf16.mxu0 0
        %592 = vmatpush2.bf16.msra.mxu0 0
        %593 = vmatprep.subr.bf16.mxu0 0
        %594 = vmatpush2.bf16.msra.mxu0 0
        %595 = vmatprep.mubr.bf16.mxu0 0
        %596 = vmatmul.mubr.bf16.gmra.mxu0 %v451
        %v597 = vpop.f32.mrf.mxu0
        %v598 = vadd.f32 %v380, %v597
        %v599 = vpop.f32.mrf.mxu0
        %v600 = vadd.f32 %v384, %v599
        %v601 = vpop.f32.mrf.mxu0
        %v602 = vadd.f32 %v380, %v601
        %v603 = vpop.f32.mrf.mxu0
        %v604 = vadd.f32 %v384, %v603
        %605 = vmatprep.mubr.bf16.mxu0 0
        %606 = vmatmul.mubr.bf16.gmra.mxu0 %v452
        %v607 = vpop.f32.mrf.mxu0
        %v608 = vadd.f32 %v380, %v607
        %v609 = vpop.f32.mrf.mxu0
        %v610 = vadd.f32 %v384, %v609
        %v611 = vpop.f32.mrf.mxu0
        %v612 = vadd.f32 %v380, %v611
        %v613 = vpop.f32.mrf.mxu0
        %v614 = vadd.f32 %v384, %v613
        %615 = vmatprep.mubr.bf16.mxu0 0
        %616 = vmatmul.mubr.bf16.gmra.mxu0 %v453
        %v617 = vpop.f32.mrf.mxu0
        %v618 = vadd.f32 %v380, %v617
        %v619 = vpop.f32.mrf.mxu0
        %v620 = vadd.f32 %v384, %v619
        %v621 = vpop.f32.mrf.mxu0
        %v622 = vadd.f32 %v380, %v621
        %v623 = vpop.f32.mrf.mxu0
        %v624 = vadd.f32 %v384, %v623
        %625 = vmatprep.mubr.bf16.mxu0 0
        %626 = vmatmul.mubr.bf16.gmra.mxu0 %v454
        %v627 = vpop.f32.mrf.mxu0
        %v628 = vadd.f32 %v380, %v627
        %v629 = vpop.f32.mrf.mxu0
        %v630 = vadd.f32 %v384, %v629
        %v631 = vpop.f32.mrf.mxu0
        %v632 = vadd.f32 %v380, %v631
        %v633 = vpop.f32.mrf.mxu0
        %v634 = vadd.f32 %v384, %v633
        %635 = vmatprep.mubr.bf16.mxu0 0
        %636 = vmatmul.mubr.bf16.gmra.mxu0 %v455
        %v637 = vpop.f32.mrf.mxu0
        %v638 = vadd.f32 %v380, %v637
        %v639 = vpop.f32.mrf.mxu0
        %v640 = vadd.f32 %v384, %v639
        %v641 = vpop.f32.mrf.mxu0
        %v642 = vadd.f32 %v380, %v641
        %v643 = vpop.f32.mrf.mxu0
        %v644 = vadd.f32 %v384, %v643
        %645 = vmatprep.mubr.bf16.mxu0 0
        %646 = vmatmul.mubr.bf16.gmra.mxu0 %v456
        %v647 = vpop.f32.mrf.mxu0
        %v648 = vadd.f32 %v380, %v647
        %v649 = vpop.f32.mrf.mxu0
        %v650 = vadd.f32 %v384, %v649
        %v651 = vpop.f32.mrf.mxu0
        %v652 = vadd.f32 %v380, %v651
        %v653 = vpop.f32.mrf.mxu0
        %v654 = vadd.f32 %v384, %v653
        %655 = vmatprep.mubr.bf16.mxu0 0
        %656 = vmatmul.mubr.bf16.gmra.mxu0 %v457
        %v657 = vpop.f32.mrf.mxu0
        %v658 = vadd.f32 %v380, %v657
        %v659 = vpop.f32.mrf.mxu0
        %v660 = vadd.f32 %v384, %v659
        %v661 = vpop.f32.mrf.mxu0
        %v662 = vadd.f32 %v380, %v661
        %v663 = vpop.f32.mrf.mxu0
        %v664 = vadd.f32 %v384, %v663
        %665 = vmatprep.mubr.bf16.mxu0 0
        %666 = vmatmul.mubr.bf16.gmra.mxu0 %v458
        %v667 = vpop.f32.mrf.mxu0
        %v668 = vadd.f32 %v380, %v667
        %v669 = vpop.f32.mrf.mxu0
        %v670 = vadd.f32 %v384, %v669
        %v671 = vpop.f32.mrf.mxu0
        %v672 = vadd.f32 %v380, %v671
        %v673 = vpop.f32.mrf.mxu0
        %v674 = vadd.f32 %v384, %v673
        %675 = vmatprep.mubr.bf16.mxu0 0
        %676 = vmatmul.mubr.bf16.gmra.mxu0 %v459
        %v677 = vpop.f32.mrf.mxu0
        %v678 = vadd.f32 %v380, %v677
        %v679 = vpop.f32.mrf.mxu0
        %v680 = vadd.f32 %v384, %v679
        %v681 = vpop.f32.mrf.mxu0
        %v682 = vadd.f32 %v380, %v681
        %v683 = vpop.f32.mrf.mxu0
        %v684 = vadd.f32 %v384, %v683
        %685 = vmatprep.mubr.bf16.mxu0 0
        %686 = vmatmul.mubr.bf16.gmra.mxu0 %v460
        %v687 = vpop.f32.mrf.mxu0
        %v688 = vadd.f32 %v380, %v687
        %v689 = vpop.f32.mrf.mxu0
        %v690 = vadd.f32 %v384, %v689
        %v691 = vpop.f32.mrf.mxu0
        %v692 = vadd.f32 %v380, %v691
        %v693 = vpop.f32.mrf.mxu0
        %v694 = vadd.f32 %v384, %v693
        %695 = vmatprep.mubr.bf16.mxu0 0
        %696 = vmatmul.mubr.bf16.gmra.mxu0 %v461
        %v697 = vpop.f32.mrf.mxu0
        %v698 = vadd.f32 %v380, %v697
        %v699 = vpop.f32.mrf.mxu0
        %v700 = vadd.f32 %v384, %v699
        %v701 = vpop.f32.mrf.mxu0
        %v702 = vadd.f32 %v380, %v701
        %v703 = vpop.f32.mrf.mxu0
        %v704 = vadd.f32 %v384, %v703
        %705 = vmatprep.mubr.bf16.mxu0 0
        %706 = vmatmul.mubr.bf16.gmra.mxu0 %v462
        %v707 = vpop.f32.mrf.mxu0
        %v708 = vadd.f32 %v380, %v707
        %v709 = vpop.f32.mrf.mxu0
        %v710 = vadd.f32 %v384, %v709
        %v711 = vpop.f32.mrf.mxu0
        %v712 = vadd.f32 %v380, %v711
        %v713 = vpop.f32.mrf.mxu0
        %v714 = vadd.f32 %v384, %v713
        %715 = vmatprep.mubr.bf16.mxu0 0
        %716 = vmatmul.mubr.bf16.gmra.mxu0 %v463
        %v717 = vpop.f32.mrf.mxu0
        %v718 = vadd.f32 %v380, %v717
        %v719 = vpop.f32.mrf.mxu0
        %v720 = vadd.f32 %v384, %v719
        %v721 = vpop.f32.mrf.mxu0
        %v722 = vadd.f32 %v380, %v721
        %v723 = vpop.f32.mrf.mxu0
        %v724 = vadd.f32 %v384, %v723
        %725 = vmatprep.mubr.bf16.mxu0 0
        %726 = vmatmul.mubr.bf16.gmra.mxu0 %v464
        %v727 = vpop.f32.mrf.mxu0
        %v728 = vadd.f32 %v380, %v727
        %v729 = vpop.f32.mrf.mxu0
        %v730 = vadd.f32 %v384, %v729
        %v731 = vpop.f32.mrf.mxu0
        %v732 = vadd.f32 %v380, %v731
        %v733 = vpop.f32.mrf.mxu0
        %v734 = vadd.f32 %v384, %v733
        %735 = vmatprep.mubr.bf16.mxu0 0
        %736 = vmatmul.mubr.bf16.gmra.mxu0 %v465
        %v737 = vpop.f32.mrf.mxu0
        %v738 = vadd.f32 %v380, %v737
        %v739 = vpop.f32.mrf.mxu0
        %v740 = vadd.f32 %v384, %v739
        %v741 = vpop.f32.mrf.mxu0
        %v742 = vadd.f32 %v380, %v741
        %v743 = vpop.f32.mrf.mxu0
        %v744 = vadd.f32 %v384, %v743
        %745 = vmatprep.mubr.bf16.mxu0 0
        %746 = vmatmul.mubr.bf16.gmra.mxu0 %v466
        %v747 = vpop.f32.mrf.mxu0
        %v748 = vadd.f32 %v380, %v747
        %v749 = vpop.f32.mrf.mxu0
        %v750 = vadd.f32 %v384, %v749
        %v751 = vpop.f32.mrf.mxu0
        %v752 = vadd.f32 %v380, %v751
        %v753 = vpop.f32.mrf.mxu0
        %v754 = vadd.f32 %v384, %v753
        %755 = vdwg.mxu0
        %v756 = vmax.f32 %v598, 0.0
        %v757 = vmax.f32 %v600, 0.0
        %v758 = vmax.f32 %v602, 0.0
        %v759 = vmax.f32 %v604, 0.0
        %v760 = vmax.f32 %v608, 0.0
        %v761 = vmax.f32 %v610, 0.0
        %v762 = vmax.f32 %v612, 0.0
        %v763 = vmax.f32 %v614, 0.0
        %v764 = vmax.f32 %v618, 0.0
        %v765 = vmax.f32 %v620, 0.0
        %v766 = vmax.f32 %v622, 0.0
        %v767 = vmax.f32 %v624, 0.0
        %v768 = vmax.f32 %v628, 0.0
        %v769 = vmax.f32 %v630, 0.0
        %v770 = vmax.f32 %v632, 0.0
        %v771 = vmax.f32 %v634, 0.0
        %v772 = vmax.f32 %v638, 0.0
        %v773 = vmax.f32 %v640, 0.0
        %v774 = vmax.f32 %v642, 0.0
        %v775 = vmax.f32 %v644, 0.0
        %v776 = vmax.f32 %v648, 0.0
        %v777 = vmax.f32 %v650, 0.0
        %v778 = vmax.f32 %v652, 0.0
        %v779 = vmax.f32 %v654, 0.0
        %v780 = vmax.f32 %v658, 0.0
        %v781 = vmax.f32 %v660, 0.0
        %v782 = vmax.f32 %v662, 0.0
        %v783 = vmax.f32 %v664, 0.0
        %v784 = vmax.f32 %v668, 0.0
        %v785 = vmax.f32 %v670, 0.0
        %v786 = vmax.f32 %v672, 0.0
        %v787 = vmax.f32 %v674, 0.0
        %v788 = vmax.f32 %v678, 0.0
        %v789 = vmax.f32 %v680, 0.0
        %v790 = vmax.f32 %v682, 0.0
        %v791 = vmax.f32 %v684, 0.0
        %v792 = vmax.f32 %v688, 0.0
        %v793 = vmax.f32 %v690, 0.0
        %v794 = vmax.f32 %v692, 0.0
        %v795 = vmax.f32 %v694, 0.0
        %v796 = vmax.f32 %v698, 0.0
        %v797 = vmax.f32 %v700, 0.0
        %v798 = vmax.f32 %v702, 0.0
        %v799 = vmax.f32 %v704, 0.0
        %v800 = vmax.f32 %v708, 0.0
        %v801 = vmax.f32 %v710, 0.0
        %v802 = vmax.f32 %v712, 0.0
        %v803 = vmax.f32 %v714, 0.0
        %v804 = vmax.f32 %v718, 0.0
        %v805 = vmax.f32 %v720, 0.0
        %v806 = vmax.f32 %v722, 0.0
        %v807 = vmax.f32 %v724, 0.0
        %v808 = vmax.f32 %v728, 0.0
        %v809 = vmax.f32 %v730, 0.0
        %v810 = vmax.f32 %v732, 0.0
        %v811 = vmax.f32 %v734, 0.0
        %v812 = vmax.f32 %v738, 0.0
        %v813 = vmax.f32 %v740, 0.0
        %v814 = vmax.f32 %v742, 0.0
        %v815 = vmax.f32 %v744, 0.0
        %v816 = vmax.f32 %v748, 0.0
        %v817 = vmax.f32 %v750, 0.0
        %v818 = vmax.f32 %v752, 0.0
        %v819 = vmax.f32 %v754, 0.0
        %v820 = vpack.c.bf16 %v758, %v756
        %v821 = vpack.c.bf16 %v759, %v757
        %v822 = vpack.c.bf16 %v762, %v760
        %v823 = vpack.c.bf16 %v763, %v761
        %v824 = vpack.c.bf16 %v766, %v764
        %v825 = vpack.c.bf16 %v767, %v765
        %v826 = vpack.c.bf16 %v770, %v768
        %v827 = vpack.c.bf16 %v771, %v769
        %v828 = vpack.c.bf16 %v774, %v772
        %v829 = vpack.c.bf16 %v775, %v773
        %v830 = vpack.c.bf16 %v778, %v776
        %v831 = vpack.c.bf16 %v779, %v777
        %v832 = vpack.c.bf16 %v782, %v780
        %v833 = vpack.c.bf16 %v783, %v781
        %v834 = vpack.c.bf16 %v786, %v784
        %v835 = vpack.c.bf16 %v787, %v785
        %v836 = vpack.c.bf16 %v790, %v788
        %v837 = vpack.c.bf16 %v791, %v789
        %v838 = vpack.c.bf16 %v794, %v792
        %v839 = vpack.c.bf16 %v795, %v793
        %v840 = vpack.c.bf16 %v798, %v796
        %v841 = vpack.c.bf16 %v799, %v797
        %v842 = vpack.c.bf16 %v802, %v800
        %v843 = vpack.c.bf16 %v803, %v801
        %v844 = vpack.c.bf16 %v806, %v804
        %v845 = vpack.c.bf16 %v807, %v805
        %v846 = vpack.c.bf16 %v810, %v808
        %v847 = vpack.c.bf16 %v811, %v809
        %v848 = vpack.c.bf16 %v814, %v812
        %v849 = vpack.c.bf16 %v815, %v813
        %v850 = vpack.c.bf16 %v818, %v816
        %v851 = vpack.c.bf16 %v819, %v817
        %v852 = vld [vmem:[%s4] sm:$0xf]
        %v853 = vld [vmem:[%s4 + $0x4] sm:$0xf]
        %v854 = vld [vmem:[%s4 + $0x8] sm:$0xf]
        %v855 = vld [vmem:[%s4 + $0xc] sm:$0xf]
        %v856 = vld [vmem:[%s4 + $0x10] sm:$0xf]
        %v857 = vld [vmem:[%s4 + $0x14] sm:$0xf]
        %v858 = vld [vmem:[%s4 + $0x18] sm:$0xf]
        %v859 = vld [vmem:[%s4 + $0x1c] sm:$0xf]
        %v860 = vld [vmem:[%s4 + $0x20] sm:$0xf]
        %v861 = vld [vmem:[%s4 + $0x24] sm:$0xf]
        %v862 = vld [vmem:[%s4 + $0x28] sm:$0xf]
        %v863 = vld [vmem:[%s4 + $0x2c] sm:$0xf]
        %v864 = vld [vmem:[%s4 + $0x30] sm:$0xf]
        %v865 = vld [vmem:[%s4 + $0x34] sm:$0xf]
        %v866 = vld [vmem:[%s4 + $0x38] sm:$0xf]
        %v867 = vld [vmem:[%s4 + $0x3c] sm:$0xf]
        %v868 = vld [vmem:[%s4 + $0x40] sm:$0xf]
        %v869 = vld [vmem:[%s4 + $0x44] sm:$0xf]
        %v870 = vld [vmem:[%s4 + $0x48] sm:$0xf]
        %v871 = vld [vmem:[%s4 + $0x4c] sm:$0xf]
        %v872 = vld [vmem:[%s4 + $0x50] sm:$0xf]
        %v873 = vld [vmem:[%s4 + $0x54] sm:$0xf]
        %v874 = vld [vmem:[%s4 + $0x58] sm:$0xf]
        %v875 = vld [vmem:[%s4 + $0x5c] sm:$0xf]
        %v876 = vld [vmem:[%s4 + $0x60] sm:$0xf]
        %v877 = vld [vmem:[%s4 + $0x64] sm:$0xf]
        %v878 = vld [vmem:[%s4 + $0x68] sm:$0xf]
        %v879 = vld [vmem:[%s4 + $0x6c] sm:$0xf]
        %v880 = vld [vmem:[%s4 + $0x70] sm:$0xf]
        %v881 = vld [vmem:[%s4 + $0x74] sm:$0xf]
        %v882 = vld [vmem:[%s4 + $0x78] sm:$0xf]
        %v883 = vld [vmem:[%s4 + $0x7c] sm:$0xf]
        %v884 = vld [vmem:[%s5] sm:$0x1]
        %v886 = vlaneseq
        %v887 = vshrl.u32 %v886, 7
        %v888 = vsub.s32 0, %v887
        %v889 = vrot.slane %v884, %v888
        %v923 = vunpack.c.l.b16 %v852
        %v924 = vunpack.c.l.b16 %v853
        %v925 = vunpack.c.l.b16 %v854
        %v926 = vunpack.c.l.b16 %v855
        %v927 = vunpack.c.l.b16 %v856
        %v928 = vunpack.c.l.b16 %v857
        %v929 = vunpack.c.l.b16 %v858
        %v930 = vunpack.c.l.b16 %v859
        %v931 = vunpack.c.l.b16 %v860
        %v932 = vunpack.c.l.b16 %v861
        %v933 = vunpack.c.l.b16 %v862
        %v934 = vunpack.c.l.b16 %v863
        %v935 = vunpack.c.l.b16 %v864
        %v936 = vunpack.c.l.b16 %v865
        %v937 = vunpack.c.l.b16 %v866
        %v938 = vunpack.c.l.b16 %v867
        %v939 = vunpack.c.l.b16 %v868
        %v940 = vunpack.c.l.b16 %v869
        %v941 = vunpack.c.l.b16 %v870
        %v942 = vunpack.c.l.b16 %v871
        %v943 = vunpack.c.l.b16 %v872
        %v944 = vunpack.c.l.b16 %v873
        %v945 = vunpack.c.l.b16 %v874
        %v946 = vunpack.c.l.b16 %v875
        %v947 = vunpack.c.l.b16 %v876
        %v948 = vunpack.c.l.b16 %v877
        %v949 = vunpack.c.l.b16 %v878
        %v950 = vunpack.c.l.b16 %v879
        %v951 = vunpack.c.l.b16 %v880
        %v952 = vunpack.c.l.b16 %v881
        %v953 = vunpack.c.l.b16 %v882
        %v954 = vunpack.c.l.b16 %v883
        %v955 = vpack.c.b16 %v924, %v923
        %v956 = vpack.c.b16 %v926, %v925
        %v957 = vpack.c.b16 %v928, %v927
        %v958 = vpack.c.b16 %v930, %v929
        %v959 = vpack.c.b16 %v932, %v931
        %v960 = vpack.c.b16 %v934, %v933
        %v961 = vpack.c.b16 %v936, %v935
        %v962 = vpack.c.b16 %v938, %v937
        %v963 = vpack.c.b16 %v940, %v939
        %v964 = vpack.c.b16 %v942, %v941
        %v965 = vpack.c.b16 %v944, %v943
        %v966 = vpack.c.b16 %v946, %v945
        %v967 = vpack.c.b16 %v948, %v947
        %v968 = vpack.c.b16 %v950, %v949
        %v969 = vpack.c.b16 %v952, %v951
        %v970 = vpack.c.b16 %v954, %v953
        %987 = vmatprep.subr.bf16.mxu0 0
        %988 = vmatpush1.bf16.msra.mxu0 %v962
        %989 = vmatprep.subr.bf16.mxu0 0
        %990 = vmatpush1.bf16.msra.mxu0 %v961
        %991 = vmatprep.subr.bf16.mxu0 0
        %992 = vmatpush1.bf16.msra.mxu0 %v960
        %993 = vmatprep.subr.bf16.mxu0 0
        %994 = vmatpush1.bf16.msra.mxu0 %v959
        %995 = vmatprep.subr.bf16.mxu0 0
        %996 = vmatpush1.bf16.msra.mxu0 %v958
        %997 = vmatprep.subr.bf16.mxu0 0
        %998 = vmatpush1.bf16.msra.mxu0 %v957
        %999 = vmatprep.subr.bf16.mxu0 0
        %1000 = vmatpush1.bf16.msra.mxu0 %v956
        %1001 = vmatprep.subr.bf16.mxu0 0
        %1002 = vmatpush1.bf16.msra.mxu0 %v955
        %1003 = vmatprep.subr.bf16.mxu0 0
        %1004 = vmatpush2.bf16.msra.mxu0 %v970
        %1005 = vmatprep.subr.bf16.mxu0 0
        %1006 = vmatpush2.bf16.msra.mxu0 %v969
        %1007 = vmatprep.subr.bf16.mxu0 0
        %1008 = vmatpush2.bf16.msra.mxu0 %v968
        %1009 = vmatprep.subr.bf16.mxu0 0
        %1010 = vmatpush2.bf16.msra.mxu0 %v967
        %1011 = vmatprep.subr.bf16.mxu0 0
        %1012 = vmatpush2.bf16.msra.mxu0 %v966
        %1013 = vmatprep.subr.bf16.mxu0 0
        %1014 = vmatpush2.bf16.msra.mxu0 %v965
        %1015 = vmatprep.subr.bf16.mxu0 0
        %1016 = vmatpush2.bf16.msra.mxu0 %v964
        %1017 = vmatprep.subr.bf16.mxu0 0
        %1018 = vmatpush2.bf16.msra.mxu0 %v963
        %1019 = vmatprep.mubr.bf16.mxu0 %v821
        %1020 = vmatmul.mubr.bf16.gmra.mxu0 %v820
        %v1021 = vpop.f32.mrf.mxu0
        %v1022 = vadd.f32 %v889, %v1021
        %v1023 = vpop.f32.mrf.mxu0
        %v1024 = vpop.f32.mrf.mxu0
        %v1025 = vadd.f32 %v889, %v1024
        %v1026 = vpop.f32.mrf.mxu0
        %1027 = vmatprep.mubr.bf16.mxu0 %v823
        %1028 = vmatmul.mubr.bf16.gmra.mxu0 %v822
        %v1029 = vpop.f32.mrf.mxu0
        %v1030 = vadd.f32 %v889, %v1029
        %v1031 = vpop.f32.mrf.mxu0
        %v1032 = vpop.f32.mrf.mxu0
        %v1033 = vadd.f32 %v889, %v1032
        %v1034 = vpop.f32.mrf.mxu0
        %1035 = vmatprep.mubr.bf16.mxu0 %v825
        %1036 = vmatmul.mubr.bf16.gmra.mxu0 %v824
        %v1037 = vpop.f32.mrf.mxu0
        %v1038 = vadd.f32 %v889, %v1037
        %v1039 = vpop.f32.mrf.mxu0
        %v1040 = vpop.f32.mrf.mxu0
        %v1041 = vadd.f32 %v889, %v1040
        %v1042 = vpop.f32.mrf.mxu0
        %1043 = vmatprep.mubr.bf16.mxu0 %v827
        %1044 = vmatmul.mubr.bf16.gmra.mxu0 %v826
        %v1045 = vpop.f32.mrf.mxu0
        %v1046 = vadd.f32 %v889, %v1045
        %v1047 = vpop.f32.mrf.mxu0
        %v1048 = vpop.f32.mrf.mxu0
        %v1049 = vadd.f32 %v889, %v1048
        %v1050 = vpop.f32.mrf.mxu0
        %1051 = vmatprep.mubr.bf16.mxu0 %v829
        %1052 = vmatmul.mubr.bf16.gmra.mxu0 %v828
        %v1053 = vpop.f32.mrf.mxu0
        %v1054 = vadd.f32 %v889, %v1053
        %v1055 = vpop.f32.mrf.mxu0
        %v1056 = vpop.f32.mrf.mxu0
        %v1057 = vadd.f32 %v889, %v1056
        %v1058 = vpop.f32.mrf.mxu0
        %1059 = vmatprep.mubr.bf16.mxu0 %v831
        %1060 = vmatmul.mubr.bf16.gmra.mxu0 %v830
        %v1061 = vpop.f32.mrf.mxu0
        %v1062 = vadd.f32 %v889, %v1061
        %v1063 = vpop.f32.mrf.mxu0
        %v1064 = vpop.f32.mrf.mxu0
        %v1065 = vadd.f32 %v889, %v1064
        %v1066 = vpop.f32.mrf.mxu0
        %1067 = vmatprep.mubr.bf16.mxu0 %v833
        %1068 = vmatmul.mubr.bf16.gmra.mxu0 %v832
        %v1069 = vpop.f32.mrf.mxu0
        %v1070 = vadd.f32 %v889, %v1069
        %v1071 = vpop.f32.mrf.mxu0
        %v1072 = vpop.f32.mrf.mxu0
        %v1073 = vadd.f32 %v889, %v1072
        %v1074 = vpop.f32.mrf.mxu0
        %1075 = vmatprep.mubr.bf16.mxu0 %v835
        %1076 = vmatmul.mubr.bf16.gmra.mxu0 %v834
        %v1077 = vpop.f32.mrf.mxu0
        %v1078 = vadd.f32 %v889, %v1077
        %v1079 = vpop.f32.mrf.mxu0
        %v1080 = vpop.f32.mrf.mxu0
        %v1081 = vadd.f32 %v889, %v1080
        %v1082 = vpop.f32.mrf.mxu0
        %1083 = vmatprep.mubr.bf16.mxu0 %v837
        %1084 = vmatmul.mubr.bf16.gmra.mxu0 %v836
        %v1085 = vpop.f32.mrf.mxu0
        %v1086 = vadd.f32 %v889, %v1085
        %v1087 = vpop.f32.mrf.mxu0
        %v1088 = vpop.f32.mrf.mxu0
        %v1089 = vadd.f32 %v889, %v1088
        %v1090 = vpop.f32.mrf.mxu0
        %1091 = vmatprep.mubr.bf16.mxu0 %v839
        %1092 = vmatmul.mubr.bf16.gmra.mxu0 %v838
        %v1093 = vpop.f32.mrf.mxu0
        %v1094 = vadd.f32 %v889, %v1093
        %v1095 = vpop.f32.mrf.mxu0
        %v1096 = vpop.f32.mrf.mxu0
        %v1097 = vadd.f32 %v889, %v1096
        %v1098 = vpop.f32.mrf.mxu0
        %1099 = vmatprep.mubr.bf16.mxu0 %v841
        %1100 = vmatmul.mubr.bf16.gmra.mxu0 %v840
        %v1101 = vpop.f32.mrf.mxu0
        %v1102 = vadd.f32 %v889, %v1101
        %v1103 = vpop.f32.mrf.mxu0
        %v1104 = vpop.f32.mrf.mxu0
        %v1105 = vadd.f32 %v889, %v1104
        %v1106 = vpop.f32.mrf.mxu0
        %1107 = vmatprep.mubr.bf16.mxu0 %v843
        %1108 = vmatmul.mubr.bf16.gmra.mxu0 %v842
        %v1109 = vpop.f32.mrf.mxu0
        %v1110 = vadd.f32 %v889, %v1109
        %v1111 = vpop.f32.mrf.mxu0
        %v1112 = vpop.f32.mrf.mxu0
        %v1113 = vadd.f32 %v889, %v1112
        %v1114 = vpop.f32.mrf.mxu0
        %1115 = vmatprep.mubr.bf16.mxu0 %v845
        %1116 = vmatmul.mubr.bf16.gmra.mxu0 %v844
        %v1117 = vpop.f32.mrf.mxu0
        %v1118 = vadd.f32 %v889, %v1117
        %v1119 = vpop.f32.mrf.mxu0
        %v1120 = vpop.f32.mrf.mxu0
        %v1121 = vadd.f32 %v889, %v1120
        %v1122 = vpop.f32.mrf.mxu0
        %1123 = vmatprep.mubr.bf16.mxu0 %v847
        %1124 = vmatmul.mubr.bf16.gmra.mxu0 %v846
        %v1125 = vpop.f32.mrf.mxu0
        %v1126 = vadd.f32 %v889, %v1125
        %v1127 = vpop.f32.mrf.mxu0
        %v1128 = vpop.f32.mrf.mxu0
        %v1129 = vadd.f32 %v889, %v1128
        %v1130 = vpop.f32.mrf.mxu0
        %1131 = vmatprep.mubr.bf16.mxu0 %v849
        %1132 = vmatmul.mubr.bf16.gmra.mxu0 %v848
        %v1133 = vpop.f32.mrf.mxu0
        %v1134 = vadd.f32 %v889, %v1133
        %v1135 = vpop.f32.mrf.mxu0
        %v1136 = vpop.f32.mrf.mxu0
        %v1137 = vadd.f32 %v889, %v1136
        %v1138 = vpop.f32.mrf.mxu0
        %1139 = vmatprep.mubr.bf16.mxu0 %v851
        %1140 = vmatmul.mubr.bf16.gmra.mxu0 %v850
        %v1141 = vpop.f32.mrf.mxu0
        %v1142 = vadd.f32 %v889, %v1141
        %v1143 = vpop.f32.mrf.mxu0
        %v1144 = vpop.f32.mrf.mxu0
        %v1145 = vadd.f32 %v889, %v1144
        %v1146 = vpop.f32.mrf.mxu0
        %1147 = vdwg.mxu0
        %v1148 = vld [vmem:[%s282] sm:$0xff]
        %v1149 = vld [vmem:[%s282 + $0x8] sm:$0xff]
        %v1150 = vld [vmem:[%s282 + $0x10] sm:$0xff]
        %v1151 = vld [vmem:[%s282 + $0x18] sm:$0xff]
        %v1152 = vld [vmem:[%s282 + $0x20] sm:$0xff]
        %v1153 = vld [vmem:[%s282 + $0x28] sm:$0xff]
        %v1154 = vld [vmem:[%s282 + $0x30] sm:$0xff]
        %v1155 = vld [vmem:[%s282 + $0x38] sm:$0xff]
        %v1156 = vld [vmem:[%s282 + $0x40] sm:$0xff]
        %v1157 = vld [vmem:[%s282 + $0x48] sm:$0xff]
        %v1158 = vld [vmem:[%s282 + $0x50] sm:$0xff]
        %v1159 = vld [vmem:[%s282 + $0x58] sm:$0xff]
        %v1160 = vld [vmem:[%s282 + $0x60] sm:$0xff]
        %v1161 = vld [vmem:[%s282 + $0x68] sm:$0xff]
        %v1162 = vld [vmem:[%s282 + $0x70] sm:$0xff]
        %v1163 = vld [vmem:[%s282 + $0x78] sm:$0xff]
        %v1164 = vld [vmem:[%s282 + $0x80] sm:$0xff]
        %v1165 = vld [vmem:[%s282 + $0x88] sm:$0xff]
        %v1166 = vld [vmem:[%s282 + $0x90] sm:$0xff]
        %v1167 = vld [vmem:[%s282 + $0x98] sm:$0xff]
        %v1168 = vld [vmem:[%s282 + $0xa0] sm:$0xff]
        %v1169 = vld [vmem:[%s282 + $0xa8] sm:$0xff]
        %v1170 = vld [vmem:[%s282 + $0xb0] sm:$0xff]
        %v1171 = vld [vmem:[%s282 + $0xb8] sm:$0xff]
        %v1172 = vld [vmem:[%s282 + $0xc0] sm:$0xff]
        %v1173 = vld [vmem:[%s282 + $0xc8] sm:$0xff]
        %v1174 = vld [vmem:[%s282 + $0xd0] sm:$0xff]
        %v1175 = vld [vmem:[%s282 + $0xd8] sm:$0xff]
        %v1176 = vld [vmem:[%s282 + $0xe0] sm:$0xff]
        %v1177 = vld [vmem:[%s282 + $0xe8] sm:$0xff]
        %v1178 = vld [vmem:[%s282 + $0xf0] sm:$0xff]
        %v1179 = vld [vmem:[%s282 + $0xf8] sm:$0xff]
        %v1180 = vld [vmem:[%s276] sm:$0xff]
        %v1181 = vld [vmem:[%s276 + $0x8] sm:$0xff]
        %v1182 = vld [vmem:[%s276 + $0x10] sm:$0xff]
        %v1183 = vld [vmem:[%s276 + $0x18] sm:$0xff]
        %v1184 = vld [vmem:[%s276 + $0x20] sm:$0xff]
        %v1185 = vld [vmem:[%s276 + $0x28] sm:$0xff]
        %v1186 = vld [vmem:[%s276 + $0x30] sm:$0xff]
        %v1187 = vld [vmem:[%s276 + $0x38] sm:$0xff]
        %v1188 = vld [vmem:[%s276 + $0x40] sm:$0xff]
        %v1189 = vld [vmem:[%s276 + $0x48] sm:$0xff]
        %v1190 = vld [vmem:[%s276 + $0x50] sm:$0xff]
        %v1191 = vld [vmem:[%s276 + $0x58] sm:$0xff]
        %v1192 = vld [vmem:[%s276 + $0x60] sm:$0xff]
        %v1193 = vld [vmem:[%s276 + $0x68] sm:$0xff]
        %v1194 = vld [vmem:[%s276 + $0x70] sm:$0xff]
        %v1195 = vld [vmem:[%s276 + $0x78] sm:$0xff]
        %v1196 = vld [vmem:[%s276 + $0x80] sm:$0xff]
        %v1197 = vld [vmem:[%s276 + $0x88] sm:$0xff]
        %v1198 = vld [vmem:[%s276 + $0x90] sm:$0xff]
        %v1199 = vld [vmem:[%s276 + $0x98] sm:$0xff]
        %v1200 = vld [vmem:[%s276 + $0xa0] sm:$0xff]
        %v1201 = vld [vmem:[%s276 + $0xa8] sm:$0xff]
        %v1202 = vld [vmem:[%s276 + $0xb0] sm:$0xff]
        %v1203 = vld [vmem:[%s276 + $0xb8] sm:$0xff]
        %v1204 = vld [vmem:[%s276 + $0xc0] sm:$0xff]
        %v1205 = vld [vmem:[%s276 + $0xc8] sm:$0xff]
        %v1206 = vld [vmem:[%s276 + $0xd0] sm:$0xff]
        %v1207 = vld [vmem:[%s276 + $0xd8] sm:$0xff]
        %v1208 = vld [vmem:[%s276 + $0xe0] sm:$0xff]
        %v1209 = vld [vmem:[%s276 + $0xe8] sm:$0xff]
        %v1210 = vld [vmem:[%s276 + $0xf0] sm:$0xff]
        %v1211 = vld [vmem:[%s276 + $0xf8] sm:$0xff]
        %1213 = vset.pattern.permute.xlu0 0
        %1214 = vperm.xlu0 %1213, %v1180
        %v1215 = vpop.permute.xlu0 %1214
        %1218 = vset.pattern.permute.xlu0 0
        %1219 = vperm.xlu0 %1218, %v1181
        %v1220 = vpop.permute.xlu0 %1219
        %1223 = vset.pattern.permute.xlu0 0
        %1224 = vperm.xlu0 %1223, %v1182
        %v1225 = vpop.permute.xlu0 %1224
        %1228 = vset.pattern.permute.xlu0 0
        %1229 = vperm.xlu0 %1228, %v1183
        %v1230 = vpop.permute.xlu0 %1229
        %1233 = vset.pattern.permute.xlu0 0
        %1234 = vperm.xlu0 %1233, %v1184
        %v1235 = vpop.permute.xlu0 %1234
        %1238 = vset.pattern.permute.xlu0 0
        %1239 = vperm.xlu0 %1238, %v1185
        %v1240 = vpop.permute.xlu0 %1239
        %1243 = vset.pattern.permute.xlu0 0
        %1244 = vperm.xlu0 %1243, %v1186
        %v1245 = vpop.permute.xlu0 %1244
        %1248 = vset.pattern.permute.xlu0 0
        %1249 = vperm.xlu0 %1248, %v1187
        %v1250 = vpop.permute.xlu0 %1249
        %1253 = vset.pattern.permute.xlu0 0
        %1254 = vperm.xlu0 %1253, %v1188
        %v1255 = vpop.permute.xlu0 %1254
        %1258 = vset.pattern.permute.xlu0 0
        %1259 = vperm.xlu0 %1258, %v1189
        %v1260 = vpop.permute.xlu0 %1259
        %1263 = vset.pattern.permute.xlu0 0
        %1264 = vperm.xlu0 %1263, %v1190
        %v1265 = vpop.permute.xlu0 %1264
        %1268 = vset.pattern.permute.xlu0 0
        %1269 = vperm.xlu0 %1268, %v1191
        %v1270 = vpop.permute.xlu0 %1269
        %1273 = vset.pattern.permute.xlu0 0
        %1274 = vperm.xlu0 %1273, %v1192
        %v1275 = vpop.permute.xlu0 %1274
        %1278 = vset.pattern.permute.xlu0 0
        %1279 = vperm.xlu0 %1278, %v1193
        %v1280 = vpop.permute.xlu0 %1279
        %1283 = vset.pattern.permute.xlu0 0
        %1284 = vperm.xlu0 %1283, %v1194
        %v1285 = vpop.permute.xlu0 %1284
        %1288 = vset.pattern.permute.xlu0 0
        %1289 = vperm.xlu0 %1288, %v1195
        %v1290 = vpop.permute.xlu0 %1289
        %1293 = vset.pattern.permute.xlu0 0
        %1294 = vperm.xlu0 %1293, %v1196
        %v1295 = vpop.permute.xlu0 %1294
        %1298 = vset.pattern.permute.xlu0 0
        %1299 = vperm.xlu0 %1298, %v1197
        %v1300 = vpop.permute.xlu0 %1299
        %1303 = vset.pattern.permute.xlu0 0
        %1304 = vperm.xlu0 %1303, %v1198
        %v1305 = vpop.permute.xlu0 %1304
        %1308 = vset.pattern.permute.xlu0 0
        %1309 = vperm.xlu0 %1308, %v1199
        %v1310 = vpop.permute.xlu0 %1309
        %1313 = vset.pattern.permute.xlu0 0
        %1314 = vperm.xlu0 %1313, %v1200
        %v1315 = vpop.permute.xlu0 %1314
        %1318 = vset.pattern.permute.xlu0 0
        %1319 = vperm.xlu0 %1318, %v1201
        %v1320 = vpop.permute.xlu0 %1319
        %1323 = vset.pattern.permute.xlu0 0
        %1324 = vperm.xlu0 %1323, %v1202
        %v1325 = vpop.permute.xlu0 %1324
        %1328 = vset.pattern.permute.xlu0 0
        %1329 = vperm.xlu0 %1328, %v1203
        %v1330 = vpop.permute.xlu0 %1329
        %1333 = vset.pattern.permute.xlu0 0
        %1334 = vperm.xlu0 %1333, %v1204
        %v1335 = vpop.permute.xlu0 %1334
        %1338 = vset.pattern.permute.xlu0 0
        %1339 = vperm.xlu0 %1338, %v1205
        %v1340 = vpop.permute.xlu0 %1339
        %1343 = vset.pattern.permute.xlu0 0
        %1344 = vperm.xlu0 %1343, %v1206
        %v1345 = vpop.permute.xlu0 %1344
        %1348 = vset.pattern.permute.xlu0 0
        %1349 = vperm.xlu0 %1348, %v1207
        %v1350 = vpop.permute.xlu0 %1349
        %1353 = vset.pattern.permute.xlu0 0
        %1354 = vperm.xlu0 %1353, %v1208
        %v1355 = vpop.permute.xlu0 %1354
        %1358 = vset.pattern.permute.xlu0 0
        %1359 = vperm.xlu0 %1358, %v1209
        %v1360 = vpop.permute.xlu0 %1359
        %1363 = vset.pattern.permute.xlu0 0
        %1364 = vperm.xlu0 %1363, %v1210
        %v1365 = vpop.permute.xlu0 %1364
        %1368 = vset.pattern.permute.xlu0 0
        %1369 = vperm.xlu0 %1368, %v1211
        %v1370 = vpop.permute.xlu0 %1369
        %v1372 = vmul.f32 %v1215, %v1022
        %v1373 = vmul.f32 %v1220, %v1025
        %v1374 = vmul.f32 %v1225, %v1030
        %v1375 = vmul.f32 %v1230, %v1033
        %v1376 = vmul.f32 %v1235, %v1038
        %v1377 = vmul.f32 %v1240, %v1041
        %v1378 = vmul.f32 %v1245, %v1046
        %v1379 = vmul.f32 %v1250, %v1049
        %v1380 = vmul.f32 %v1255, %v1054
        %v1381 = vmul.f32 %v1260, %v1057
        %v1382 = vmul.f32 %v1265, %v1062
        %v1383 = vmul.f32 %v1270, %v1065
        %v1384 = vmul.f32 %v1275, %v1070
        %v1385 = vmul.f32 %v1280, %v1073
        %v1386 = vmul.f32 %v1285, %v1078
        %v1387 = vmul.f32 %v1290, %v1081
        %v1388 = vmul.f32 %v1295, %v1086
        %v1389 = vmul.f32 %v1300, %v1089
        %v1390 = vmul.f32 %v1305, %v1094
        %v1391 = vmul.f32 %v1310, %v1097
        %v1392 = vmul.f32 %v1315, %v1102
        %v1393 = vmul.f32 %v1320, %v1105
        %v1394 = vmul.f32 %v1325, %v1110
        %v1395 = vmul.f32 %v1330, %v1113
        %v1396 = vmul.f32 %v1335, %v1118
        %v1397 = vmul.f32 %v1340, %v1121
        %v1398 = vmul.f32 %v1345, %v1126
        %v1399 = vmul.f32 %v1350, %v1129
        %v1400 = vmul.f32 %v1355, %v1134
        %v1401 = vmul.f32 %v1360, %v1137
        %v1402 = vmul.f32 %v1365, %v1142
        %v1403 = vmul.f32 %v1370, %v1145
        %v1404 = vadd.f32 %v1148, %v1372
        %v1405 = vadd.f32 %v1149, %v1373
        %v1406 = vadd.f32 %v1150, %v1374
        %v1407 = vadd.f32 %v1151, %v1375
        %v1408 = vadd.f32 %v1152, %v1376
        %v1409 = vadd.f32 %v1153, %v1377
        %v1410 = vadd.f32 %v1154, %v1378
        %v1411 = vadd.f32 %v1155, %v1379
        %v1412 = vadd.f32 %v1156, %v1380
        %v1413 = vadd.f32 %v1157, %v1381
        %v1414 = vadd.f32 %v1158, %v1382
        %v1415 = vadd.f32 %v1159, %v1383
        %v1416 = vadd.f32 %v1160, %v1384
        %v1417 = vadd.f32 %v1161, %v1385
        %v1418 = vadd.f32 %v1162, %v1386
        %v1419 = vadd.f32 %v1163, %v1387
        %v1420 = vadd.f32 %v1164, %v1388
        %v1421 = vadd.f32 %v1165, %v1389
        %v1422 = vadd.f32 %v1166, %v1390
        %v1423 = vadd.f32 %v1167, %v1391
        %v1424 = vadd.f32 %v1168, %v1392
        %v1425 = vadd.f32 %v1169, %v1393
        %v1426 = vadd.f32 %v1170, %v1394
        %v1427 = vadd.f32 %v1171, %v1395
        %v1428 = vadd.f32 %v1172, %v1396
        %v1429 = vadd.f32 %v1173, %v1397
        %v1430 = vadd.f32 %v1174, %v1398
        %v1431 = vadd.f32 %v1175, %v1399
        %v1432 = vadd.f32 %v1176, %v1400
        %v1433 = vadd.f32 %v1177, %v1401
        %v1434 = vadd.f32 %v1178, %v1402
        %v1435 = vadd.f32 %v1179, %v1403
        %1436 = vst [vmem:[%s282] sm:$0xff] %v1404
        %1437 = vst [vmem:[%s282 + $0x8] sm:$0xff] %v1405
        %1438 = vst [vmem:[%s282 + $0x10] sm:$0xff] %v1406
        %1439 = vst [vmem:[%s282 + $0x18] sm:$0xff] %v1407
        %1440 = vst [vmem:[%s282 + $0x20] sm:$0xff] %v1408
        %1441 = vst [vmem:[%s282 + $0x28] sm:$0xff] %v1409
        %1442 = vst [vmem:[%s282 + $0x30] sm:$0xff] %v1410
        %1443 = vst [vmem:[%s282 + $0x38] sm:$0xff] %v1411
        %1444 = vst [vmem:[%s282 + $0x40] sm:$0xff] %v1412
        %1445 = vst [vmem:[%s282 + $0x48] sm:$0xff] %v1413
        %1446 = vst [vmem:[%s282 + $0x50] sm:$0xff] %v1414
        %1447 = vst [vmem:[%s282 + $0x58] sm:$0xff] %v1415
        %1448 = vst [vmem:[%s282 + $0x60] sm:$0xff] %v1416
        %1449 = vst [vmem:[%s282 + $0x68] sm:$0xff] %v1417
        %1450 = vst [vmem:[%s282 + $0x70] sm:$0xff] %v1418
        %1451 = vst [vmem:[%s282 + $0x78] sm:$0xff] %v1419
        %1452 = vst [vmem:[%s282 + $0x80] sm:$0xff] %v1420
        %1453 = vst [vmem:[%s282 + $0x88] sm:$0xff] %v1421
        %1454 = vst [vmem:[%s282 + $0x90] sm:$0xff] %v1422
        %1455 = vst [vmem:[%s282 + $0x98] sm:$0xff] %v1423
        %1456 = vst [vmem:[%s282 + $0xa0] sm:$0xff] %v1424
        %1457 = vst [vmem:[%s282 + $0xa8] sm:$0xff] %v1425
        %1458 = vst [vmem:[%s282 + $0xb0] sm:$0xff] %v1426
        %1459 = vst [vmem:[%s282 + $0xb8] sm:$0xff] %v1427
        %1460 = vst [vmem:[%s282 + $0xc0] sm:$0xff] %v1428
        %1461 = vst [vmem:[%s282 + $0xc8] sm:$0xff] %v1429
        %1462 = vst [vmem:[%s282 + $0xd0] sm:$0xff] %v1430
        %1463 = vst [vmem:[%s282 + $0xd8] sm:$0xff] %v1431
        %1464 = vst [vmem:[%s282 + $0xe0] sm:$0xff] %v1432
        %1465 = vst [vmem:[%s282 + $0xe8] sm:$0xff] %v1433
        %1466 = vst [vmem:[%s282 + $0xf0] sm:$0xff] %v1434
        %1467 = vst [vmem:[%s282 + $0xf8] sm:$0xff] %v1435
      $region48: #{simple_moe_layer.1} parent=43 // pred_fallthru
        _
      %p1468 = scmp.le.s32.totalorder %s286, 1
      %p1469 = scmp.ge.s32.totalorder %s288, 1
      %p1470 = pnand %p1468, %p1469
      %p1471 = pneg %p1470
      // Predicated region
      $region49: #{simple_moe_layer.1} parent=43 // pred_check
        _
      $region50: #{simple_moe_layer.1} parent=43 // pred_check_branch
        %1473 = sbr.rel (%p1470) target = $region52
      $region51: #{simple_moe_layer.1} parent=43 // pred_region
        %v1474 = vld [vmem:[%s270] sm:$0xf]
        %v1475 = vld [vmem:[%s270 + $0x4] sm:$0xf]
        %v1476 = vld [vmem:[%s270 + $0x8] sm:$0xf]
        %v1477 = vld [vmem:[%s270 + $0xc] sm:$0xf]
        %v1478 = vld [vmem:[%s270 + $0x10] sm:$0xf]
        %v1479 = vld [vmem:[%s270 + $0x14] sm:$0xf]
        %v1480 = vld [vmem:[%s270 + $0x18] sm:$0xf]
        %v1481 = vld [vmem:[%s270 + $0x1c] sm:$0xf]
        %v1482 = vld [vmem:[%s270 + $0x20] sm:$0xf]
        %v1483 = vld [vmem:[%s270 + $0x24] sm:$0xf]
        %v1484 = vld [vmem:[%s270 + $0x28] sm:$0xf]
        %v1485 = vld [vmem:[%s270 + $0x2c] sm:$0xf]
        %v1486 = vld [vmem:[%s270 + $0x30] sm:$0xf]
        %v1487 = vld [vmem:[%s270 + $0x34] sm:$0xf]
        %v1488 = vld [vmem:[%s270 + $0x38] sm:$0xf]
        %v1489 = vld [vmem:[%s270 + $0x3c] sm:$0xf]
        %v1490 = vld [vmem:[%s270 + $0x40] sm:$0xf]
        %v1491 = vld [vmem:[%s270 + $0x44] sm:$0xf]
        %v1492 = vld [vmem:[%s270 + $0x48] sm:$0xf]
        %v1493 = vld [vmem:[%s270 + $0x4c] sm:$0xf]
        %v1494 = vld [vmem:[%s270 + $0x50] sm:$0xf]
        %v1495 = vld [vmem:[%s270 + $0x54] sm:$0xf]
        %v1496 = vld [vmem:[%s270 + $0x58] sm:$0xf]
        %v1497 = vld [vmem:[%s270 + $0x5c] sm:$0xf]
        %v1498 = vld [vmem:[%s270 + $0x60] sm:$0xf]
        %v1499 = vld [vmem:[%s270 + $0x64] sm:$0xf]
        %v1500 = vld [vmem:[%s270 + $0x68] sm:$0xf]
        %v1501 = vld [vmem:[%s270 + $0x6c] sm:$0xf]
        %v1502 = vld [vmem:[%s270 + $0x70] sm:$0xf]
        %v1503 = vld [vmem:[%s270 + $0x74] sm:$0xf]
        %v1504 = vld [vmem:[%s270 + $0x78] sm:$0xf]
        %v1505 = vld [vmem:[%s270 + $0x7c] sm:$0xf]
        %s1506 = scalar_lea.vmem %s2, 128
        %v1507 = vld [vmem:[%s1506] sm:$0xff]
        %v1508 = vld [vmem:[%s1506 + $0x8] sm:$0xff]
        %v1509 = vld [vmem:[%s1506 + $0x10] sm:$0xff]
        %v1510 = vld [vmem:[%s1506 + $0x18] sm:$0xff]
        %v1511 = vld [vmem:[%s1506 + $0x20] sm:$0xff]
        %v1512 = vld [vmem:[%s1506 + $0x28] sm:$0xff]
        %v1513 = vld [vmem:[%s1506 + $0x30] sm:$0xff]
        %v1514 = vld [vmem:[%s1506 + $0x38] sm:$0xff]
        %v1515 = vld [vmem:[%s1506 + $0x40] sm:$0xff]
        %v1516 = vld [vmem:[%s1506 + $0x48] sm:$0xff]
        %v1517 = vld [vmem:[%s1506 + $0x50] sm:$0xff]
        %v1518 = vld [vmem:[%s1506 + $0x58] sm:$0xff]
        %v1519 = vld [vmem:[%s1506 + $0x60] sm:$0xff]
        %v1520 = vld [vmem:[%s1506 + $0x68] sm:$0xff]
        %v1521 = vld [vmem:[%s1506 + $0x70] sm:$0xff]
        %v1522 = vld [vmem:[%s1506 + $0x78] sm:$0xff]
        %s1523 = scalar_lea.vmem %s3, 2
        %v1524 = vld [vmem:[%s1523] sm:$0x3]
        %v1526 = vlaneseq
        %v1527 = vshrl.u32 %v1526, 7
        %v1528 = vsub.s32 0, %v1527
        %v1529 = vrot.slane %v1524, %v1528
        %v1530 = vlaneseq
        %v1531 = vshrl.u32 %v1530, 7
        %v1532 = vsub.s32 1, %v1531
        %v1533 = vrot.slane %v1524, %v1532
        %v1568 = vunpack.c.l.b16 %v1474
        %v1569 = vunpack.c.l.b16 %v1475
        %v1570 = vunpack.c.l.b16 %v1476
        %v1571 = vunpack.c.l.b16 %v1477
        %v1572 = vunpack.c.l.b16 %v1478
        %v1573 = vunpack.c.l.b16 %v1479
        %v1574 = vunpack.c.l.b16 %v1480
        %v1575 = vunpack.c.l.b16 %v1481
        %v1576 = vunpack.c.l.b16 %v1482
        %v1577 = vunpack.c.l.b16 %v1483
        %v1578 = vunpack.c.l.b16 %v1484
        %v1579 = vunpack.c.l.b16 %v1485
        %v1580 = vunpack.c.l.b16 %v1486
        %v1581 = vunpack.c.l.b16 %v1487
        %v1582 = vunpack.c.l.b16 %v1488
        %v1583 = vunpack.c.l.b16 %v1489
        %v1584 = vunpack.c.l.b16 %v1490
        %v1585 = vunpack.c.l.b16 %v1491
        %v1586 = vunpack.c.l.b16 %v1492
        %v1587 = vunpack.c.l.b16 %v1493
        %v1588 = vunpack.c.l.b16 %v1494
        %v1589 = vunpack.c.l.b16 %v1495
        %v1590 = vunpack.c.l.b16 %v1496
        %v1591 = vunpack.c.l.b16 %v1497
        %v1592 = vunpack.c.l.b16 %v1498
        %v1593 = vunpack.c.l.b16 %v1499
        %v1594 = vunpack.c.l.b16 %v1500
        %v1595 = vunpack.c.l.b16 %v1501
        %v1596 = vunpack.c.l.b16 %v1502
        %v1597 = vunpack.c.l.b16 %v1503
        %v1598 = vunpack.c.l.b16 %v1504
        %v1599 = vunpack.c.l.b16 %v1505
        %v1600 = vpack.c.b16 %v1569, %v1568
        %v1601 = vpack.c.b16 %v1571, %v1570
        %v1602 = vpack.c.b16 %v1573, %v1572
        %v1603 = vpack.c.b16 %v1575, %v1574
        %v1604 = vpack.c.b16 %v1577, %v1576
        %v1605 = vpack.c.b16 %v1579, %v1578
        %v1606 = vpack.c.b16 %v1581, %v1580
        %v1607 = vpack.c.b16 %v1583, %v1582
        %v1608 = vpack.c.b16 %v1585, %v1584
        %v1609 = vpack.c.b16 %v1587, %v1586
        %v1610 = vpack.c.b16 %v1589, %v1588
        %v1611 = vpack.c.b16 %v1591, %v1590
        %v1612 = vpack.c.b16 %v1593, %v1592
        %v1613 = vpack.c.b16 %v1595, %v1594
        %v1614 = vpack.c.b16 %v1597, %v1596
        %v1615 = vpack.c.b16 %v1599, %v1598
        %v1648 = vunpack.c.l.b16 %v1507
        %v1649 = vunpack.c.h.b16 %v1507
        %v1650 = vunpack.c.l.b16 %v1508
        %v1651 = vunpack.c.h.b16 %v1508
        %v1652 = vunpack.c.l.b16 %v1509
        %v1653 = vunpack.c.h.b16 %v1509
        %v1654 = vunpack.c.l.b16 %v1510
        %v1655 = vunpack.c.h.b16 %v1510
        %v1656 = vunpack.c.l.b16 %v1511
        %v1657 = vunpack.c.h.b16 %v1511
        %v1658 = vunpack.c.l.b16 %v1512
        %v1659 = vunpack.c.h.b16 %v1512
        %v1660 = vunpack.c.l.b16 %v1513
        %v1661 = vunpack.c.h.b16 %v1513
        %v1662 = vunpack.c.l.b16 %v1514
        %v1663 = vunpack.c.h.b16 %v1514
        %v1664 = vunpack.c.l.b16 %v1515
        %v1665 = vunpack.c.h.b16 %v1515
        %v1666 = vunpack.c.l.b16 %v1516
        %v1667 = vunpack.c.h.b16 %v1516
        %v1668 = vunpack.c.l.b16 %v1517
        %v1669 = vunpack.c.h.b16 %v1517
        %v1670 = vunpack.c.l.b16 %v1518
        %v1671 = vunpack.c.h.b16 %v1518
        %v1672 = vunpack.c.l.b16 %v1519
        %v1673 = vunpack.c.h.b16 %v1519
        %v1674 = vunpack.c.l.b16 %v1520
        %v1675 = vunpack.c.h.b16 %v1520
        %v1676 = vunpack.c.l.b16 %v1521
        %v1677 = vunpack.c.h.b16 %v1521
        %v1678 = vunpack.c.l.b16 %v1522
        %v1679 = vunpack.c.h.b16 %v1522
        %v1680 = vpack.c.b16 %v1650, %v1648
        %v1681 = vpack.c.b16 %v1651, %v1649
        %v1682 = vpack.c.b16 %v1654, %v1652
        %v1683 = vpack.c.b16 %v1655, %v1653
        %v1684 = vpack.c.b16 %v1658, %v1656
        %v1685 = vpack.c.b16 %v1659, %v1657
        %v1686 = vpack.c.b16 %v1662, %v1660
        %v1687 = vpack.c.b16 %v1663, %v1661
        %v1688 = vpack.c.b16 %v1666, %v1664
        %v1689 = vpack.c.b16 %v1667, %v1665
        %v1690 = vpack.c.b16 %v1670, %v1668
        %v1691 = vpack.c.b16 %v1671, %v1669
        %v1692 = vpack.c.b16 %v1674, %v1672
        %v1693 = vpack.c.b16 %v1675, %v1673
        %v1694 = vpack.c.b16 %v1678, %v1676
        %v1695 = vpack.c.b16 %v1679, %v1677
        %1712 = vmatprep.subr.bf16.mxu0 %v1695
        %1713 = vmatpush1.bf16.msra.mxu0 %v1694
        %1714 = vmatprep.subr.bf16.mxu0 %v1693
        %1715 = vmatpush1.bf16.msra.mxu0 %v1692
        %1716 = vmatprep.subr.bf16.mxu0 %v1691
        %1717 = vmatpush1.bf16.msra.mxu0 %v1690
        %1718 = vmatprep.subr.bf16.mxu0 %v1689
        %1719 = vmatpush1.bf16.msra.mxu0 %v1688
        %1720 = vmatprep.subr.bf16.mxu0 %v1687
        %1721 = vmatpush1.bf16.msra.mxu0 %v1686
        %1722 = vmatprep.subr.bf16.mxu0 %v1685
        %1723 = vmatpush1.bf16.msra.mxu0 %v1684
        %1724 = vmatprep.subr.bf16.mxu0 %v1683
        %1725 = vmatpush1.bf16.msra.mxu0 %v1682
        %1726 = vmatprep.subr.bf16.mxu0 %v1681
        %1727 = vmatpush1.bf16.msra.mxu0 %v1680
        %1728 = vmatprep.subr.bf16.mxu0 0
        %1729 = vmatpush2.bf16.msra.mxu0 0
        %1730 = vmatprep.subr.bf16.mxu0 0
        %1731 = vmatpush2.bf16.msra.mxu0 0
        %1732 = vmatprep.subr.bf16.mxu0 0
        %1733 = vmatpush2.bf16.msra.mxu0 0
        %1734 = vmatprep.subr.bf16.mxu0 0
        %1735 = vmatpush2.bf16.msra.mxu0 0
        %1736 = vmatprep.subr.bf16.mxu0 0
        %1737 = vmatpush2.bf16.msra.mxu0 0
        %1738 = vmatprep.subr.bf16.mxu0 0
        %1739 = vmatpush2.bf16.msra.mxu0 0
        %1740 = vmatprep.subr.bf16.mxu0 0
        %1741 = vmatpush2.bf16.msra.mxu0 0
        %1742 = vmatprep.subr.bf16.mxu0 0
        %1743 = vmatpush2.bf16.msra.mxu0 0
        %1744 = vmatprep.mubr.bf16.mxu0 0
        %1745 = vmatmul.mubr.bf16.gmra.mxu0 %v1600
        %v1746 = vpop.f32.mrf.mxu0
        %v1747 = vadd.f32 %v1529, %v1746
        %v1748 = vpop.f32.mrf.mxu0
        %v1749 = vadd.f32 %v1533, %v1748
        %v1750 = vpop.f32.mrf.mxu0
        %v1751 = vadd.f32 %v1529, %v1750
        %v1752 = vpop.f32.mrf.mxu0
        %v1753 = vadd.f32 %v1533, %v1752
        %1754 = vmatprep.mubr.bf16.mxu0 0
        %1755 = vmatmul.mubr.bf16.gmra.mxu0 %v1601
        %v1756 = vpop.f32.mrf.mxu0
        %v1757 = vadd.f32 %v1529, %v1756
        %v1758 = vpop.f32.mrf.mxu0
        %v1759 = vadd.f32 %v1533, %v1758
        %v1760 = vpop.f32.mrf.mxu0
        %v1761 = vadd.f32 %v1529, %v1760
        %v1762 = vpop.f32.mrf.mxu0
        %v1763 = vadd.f32 %v1533, %v1762
        %1764 = vmatprep.mubr.bf16.mxu0 0
        %1765 = vmatmul.mubr.bf16.gmra.mxu0 %v1602
        %v1766 = vpop.f32.mrf.mxu0
        %v1767 = vadd.f32 %v1529, %v1766
        %v1768 = vpop.f32.mrf.mxu0
        %v1769 = vadd.f32 %v1533, %v1768
        %v1770 = vpop.f32.mrf.mxu0
        %v1771 = vadd.f32 %v1529, %v1770
        %v1772 = vpop.f32.mrf.mxu0
        %v1773 = vadd.f32 %v1533, %v1772
        %1774 = vmatprep.mubr.bf16.mxu0 0
        %1775 = vmatmul.mubr.bf16.gmra.mxu0 %v1603
        %v1776 = vpop.f32.mrf.mxu0
        %v1777 = vadd.f32 %v1529, %v1776
        %v1778 = vpop.f32.mrf.mxu0
        %v1779 = vadd.f32 %v1533, %v1778
        %v1780 = vpop.f32.mrf.mxu0
        %v1781 = vadd.f32 %v1529, %v1780
        %v1782 = vpop.f32.mrf.mxu0
        %v1783 = vadd.f32 %v1533, %v1782
        %1784 = vmatprep.mubr.bf16.mxu0 0
        %1785 = vmatmul.mubr.bf16.gmra.mxu0 %v1604
        %v1786 = vpop.f32.mrf.mxu0
        %v1787 = vadd.f32 %v1529, %v1786
        %v1788 = vpop.f32.mrf.mxu0
        %v1789 = vadd.f32 %v1533, %v1788
        %v1790 = vpop.f32.mrf.mxu0
        %v1791 = vadd.f32 %v1529, %v1790
        %v1792 = vpop.f32.mrf.mxu0
        %v1793 = vadd.f32 %v1533, %v1792
        %1794 = vmatprep.mubr.bf16.mxu0 0
        %1795 = vmatmul.mubr.bf16.gmra.mxu0 %v1605
        %v1796 = vpop.f32.mrf.mxu0
        %v1797 = vadd.f32 %v1529, %v1796
        %v1798 = vpop.f32.mrf.mxu0
        %v1799 = vadd.f32 %v1533, %v1798
        %v1800 = vpop.f32.mrf.mxu0
        %v1801 = vadd.f32 %v1529, %v1800
        %v1802 = vpop.f32.mrf.mxu0
        %v1803 = vadd.f32 %v1533, %v1802
        %1804 = vmatprep.mubr.bf16.mxu0 0
        %1805 = vmatmul.mubr.bf16.gmra.mxu0 %v1606
        %v1806 = vpop.f32.mrf.mxu0
        %v1807 = vadd.f32 %v1529, %v1806
        %v1808 = vpop.f32.mrf.mxu0
        %v1809 = vadd.f32 %v1533, %v1808
        %v1810 = vpop.f32.mrf.mxu0
        %v1811 = vadd.f32 %v1529, %v1810
        %v1812 = vpop.f32.mrf.mxu0
        %v1813 = vadd.f32 %v1533, %v1812
        %1814 = vmatprep.mubr.bf16.mxu0 0
        %1815 = vmatmul.mubr.bf16.gmra.mxu0 %v1607
        %v1816 = vpop.f32.mrf.mxu0
        %v1817 = vadd.f32 %v1529, %v1816
        %v1818 = vpop.f32.mrf.mxu0
        %v1819 = vadd.f32 %v1533, %v1818
        %v1820 = vpop.f32.mrf.mxu0
        %v1821 = vadd.f32 %v1529, %v1820
        %v1822 = vpop.f32.mrf.mxu0
        %v1823 = vadd.f32 %v1533, %v1822
        %1824 = vmatprep.mubr.bf16.mxu0 0
        %1825 = vmatmul.mubr.bf16.gmra.mxu0 %v1608
        %v1826 = vpop.f32.mrf.mxu0
        %v1827 = vadd.f32 %v1529, %v1826
        %v1828 = vpop.f32.mrf.mxu0
        %v1829 = vadd.f32 %v1533, %v1828
        %v1830 = vpop.f32.mrf.mxu0
        %v1831 = vadd.f32 %v1529, %v1830
        %v1832 = vpop.f32.mrf.mxu0
        %v1833 = vadd.f32 %v1533, %v1832
        %1834 = vmatprep.mubr.bf16.mxu0 0
        %1835 = vmatmul.mubr.bf16.gmra.mxu0 %v1609
        %v1836 = vpop.f32.mrf.mxu0
        %v1837 = vadd.f32 %v1529, %v1836
        %v1838 = vpop.f32.mrf.mxu0
        %v1839 = vadd.f32 %v1533, %v1838
        %v1840 = vpop.f32.mrf.mxu0
        %v1841 = vadd.f32 %v1529, %v1840
        %v1842 = vpop.f32.mrf.mxu0
        %v1843 = vadd.f32 %v1533, %v1842
        %1844 = vmatprep.mubr.bf16.mxu0 0
        %1845 = vmatmul.mubr.bf16.gmra.mxu0 %v1610
        %v1846 = vpop.f32.mrf.mxu0
        %v1847 = vadd.f32 %v1529, %v1846
        %v1848 = vpop.f32.mrf.mxu0
        %v1849 = vadd.f32 %v1533, %v1848
        %v1850 = vpop.f32.mrf.mxu0
        %v1851 = vadd.f32 %v1529, %v1850
        %v1852 = vpop.f32.mrf.mxu0
        %v1853 = vadd.f32 %v1533, %v1852
        %1854 = vmatprep.mubr.bf16.mxu0 0
        %1855 = vmatmul.mubr.bf16.gmra.mxu0 %v1611
        %v1856 = vpop.f32.mrf.mxu0
        %v1857 = vadd.f32 %v1529, %v1856
        %v1858 = vpop.f32.mrf.mxu0
        %v1859 = vadd.f32 %v1533, %v1858
        %v1860 = vpop.f32.mrf.mxu0
        %v1861 = vadd.f32 %v1529, %v1860
        %v1862 = vpop.f32.mrf.mxu0
        %v1863 = vadd.f32 %v1533, %v1862
        %1864 = vmatprep.mubr.bf16.mxu0 0
        %1865 = vmatmul.mubr.bf16.gmra.mxu0 %v1612
        %v1866 = vpop.f32.mrf.mxu0
        %v1867 = vadd.f32 %v1529, %v1866
        %v1868 = vpop.f32.mrf.mxu0
        %v1869 = vadd.f32 %v1533, %v1868
        %v1870 = vpop.f32.mrf.mxu0
        %v1871 = vadd.f32 %v1529, %v1870
        %v1872 = vpop.f32.mrf.mxu0
        %v1873 = vadd.f32 %v1533, %v1872
        %1874 = vmatprep.mubr.bf16.mxu0 0
        %1875 = vmatmul.mubr.bf16.gmra.mxu0 %v1613
        %v1876 = vpop.f32.mrf.mxu0
        %v1877 = vadd.f32 %v1529, %v1876
        %v1878 = vpop.f32.mrf.mxu0
        %v1879 = vadd.f32 %v1533, %v1878
        %v1880 = vpop.f32.mrf.mxu0
        %v1881 = vadd.f32 %v1529, %v1880
        %v1882 = vpop.f32.mrf.mxu0
        %v1883 = vadd.f32 %v1533, %v1882
        %1884 = vmatprep.mubr.bf16.mxu0 0
        %1885 = vmatmul.mubr.bf16.gmra.mxu0 %v1614
        %v1886 = vpop.f32.mrf.mxu0
        %v1887 = vadd.f32 %v1529, %v1886
        %v1888 = vpop.f32.mrf.mxu0
        %v1889 = vadd.f32 %v1533, %v1888
        %v1890 = vpop.f32.mrf.mxu0
        %v1891 = vadd.f32 %v1529, %v1890
        %v1892 = vpop.f32.mrf.mxu0
        %v1893 = vadd.f32 %v1533, %v1892
        %1894 = vmatprep.mubr.bf16.mxu0 0
        %1895 = vmatmul.mubr.bf16.gmra.mxu0 %v1615
        %v1896 = vpop.f32.mrf.mxu0
        %v1897 = vadd.f32 %v1529, %v1896
        %v1898 = vpop.f32.mrf.mxu0
        %v1899 = vadd.f32 %v1533, %v1898
        %v1900 = vpop.f32.mrf.mxu0
        %v1901 = vadd.f32 %v1529, %v1900
        %v1902 = vpop.f32.mrf.mxu0
        %v1903 = vadd.f32 %v1533, %v1902
        %1904 = vdwg.mxu0
        %v1905 = vmax.f32 %v1747, 0.0
        %v1906 = vmax.f32 %v1749, 0.0
        %v1907 = vmax.f32 %v1751, 0.0
        %v1908 = vmax.f32 %v1753, 0.0
        %v1909 = vmax.f32 %v1757, 0.0
        %v1910 = vmax.f32 %v1759, 0.0
        %v1911 = vmax.f32 %v1761, 0.0
        %v1912 = vmax.f32 %v1763, 0.0
        %v1913 = vmax.f32 %v1767, 0.0
        %v1914 = vmax.f32 %v1769, 0.0
        %v1915 = vmax.f32 %v1771, 0.0
        %v1916 = vmax.f32 %v1773, 0.0
        %v1917 = vmax.f32 %v1777, 0.0
        %v1918 = vmax.f32 %v1779, 0.0
        %v1919 = vmax.f32 %v1781, 0.0
        %v1920 = vmax.f32 %v1783, 0.0
        %v1921 = vmax.f32 %v1787, 0.0
        %v1922 = vmax.f32 %v1789, 0.0
        %v1923 = vmax.f32 %v1791, 0.0
        %v1924 = vmax.f32 %v1793, 0.0
        %v1925 = vmax.f32 %v1797, 0.0
        %v1926 = vmax.f32 %v1799, 0.0
        %v1927 = vmax.f32 %v1801, 0.0
        %v1928 = vmax.f32 %v1803, 0.0
        %v1929 = vmax.f32 %v1807, 0.0
        %v1930 = vmax.f32 %v1809, 0.0
        %v1931 = vmax.f32 %v1811, 0.0
        %v1932 = vmax.f32 %v1813, 0.0
        %v1933 = vmax.f32 %v1817, 0.0
        %v1934 = vmax.f32 %v1819, 0.0
        %v1935 = vmax.f32 %v1821, 0.0
        %v1936 = vmax.f32 %v1823, 0.0
        %v1937 = vmax.f32 %v1827, 0.0
        %v1938 = vmax.f32 %v1829, 0.0
        %v1939 = vmax.f32 %v1831, 0.0
        %v1940 = vmax.f32 %v1833, 0.0
        %v1941 = vmax.f32 %v1837, 0.0
        %v1942 = vmax.f32 %v1839, 0.0
        %v1943 = vmax.f32 %v1841, 0.0
        %v1944 = vmax.f32 %v1843, 0.0
        %v1945 = vmax.f32 %v1847, 0.0
        %v1946 = vmax.f32 %v1849, 0.0
        %v1947 = vmax.f32 %v1851, 0.0
        %v1948 = vmax.f32 %v1853, 0.0
        %v1949 = vmax.f32 %v1857, 0.0
        %v1950 = vmax.f32 %v1859, 0.0
        %v1951 = vmax.f32 %v1861, 0.0
        %v1952 = vmax.f32 %v1863, 0.0
        %v1953 = vmax.f32 %v1867, 0.0
        %v1954 = vmax.f32 %v1869, 0.0
        %v1955 = vmax.f32 %v1871, 0.0
        %v1956 = vmax.f32 %v1873, 0.0
        %v1957 = vmax.f32 %v1877, 0.0
        %v1958 = vmax.f32 %v1879, 0.0
        %v1959 = vmax.f32 %v1881, 0.0
        %v1960 = vmax.f32 %v1883, 0.0
        %v1961 = vmax.f32 %v1887, 0.0
        %v1962 = vmax.f32 %v1889, 0.0
        %v1963 = vmax.f32 %v1891, 0.0
        %v1964 = vmax.f32 %v1893, 0.0
        %v1965 = vmax.f32 %v1897, 0.0
        %v1966 = vmax.f32 %v1899, 0.0
        %v1967 = vmax.f32 %v1901, 0.0
        %v1968 = vmax.f32 %v1903, 0.0
        %v1969 = vpack.c.bf16 %v1907, %v1905
        %v1970 = vpack.c.bf16 %v1908, %v1906
        %v1971 = vpack.c.bf16 %v1911, %v1909
        %v1972 = vpack.c.bf16 %v1912, %v1910
        %v1973 = vpack.c.bf16 %v1915, %v1913
        %v1974 = vpack.c.bf16 %v1916, %v1914
        %v1975 = vpack.c.bf16 %v1919, %v1917
        %v1976 = vpack.c.bf16 %v1920, %v1918
        %v1977 = vpack.c.bf16 %v1923, %v1921
        %v1978 = vpack.c.bf16 %v1924, %v1922
        %v1979 = vpack.c.bf16 %v1927, %v1925
        %v1980 = vpack.c.bf16 %v1928, %v1926
        %v1981 = vpack.c.bf16 %v1931, %v1929
        %v1982 = vpack.c.bf16 %v1932, %v1930
        %v1983 = vpack.c.bf16 %v1935, %v1933
        %v1984 = vpack.c.bf16 %v1936, %v1934
        %v1985 = vpack.c.bf16 %v1939, %v1937
        %v1986 = vpack.c.bf16 %v1940, %v1938
        %v1987 = vpack.c.bf16 %v1943, %v1941
        %v1988 = vpack.c.bf16 %v1944, %v1942
        %v1989 = vpack.c.bf16 %v1947, %v1945
        %v1990 = vpack.c.bf16 %v1948, %v1946
        %v1991 = vpack.c.bf16 %v1951, %v1949
        %v1992 = vpack.c.bf16 %v1952, %v1950
        %v1993 = vpack.c.bf16 %v1955, %v1953
        %v1994 = vpack.c.bf16 %v1956, %v1954
        %v1995 = vpack.c.bf16 %v1959, %v1957
        %v1996 = vpack.c.bf16 %v1960, %v1958
        %v1997 = vpack.c.bf16 %v1963, %v1961
        %v1998 = vpack.c.bf16 %v1964, %v1962
        %v1999 = vpack.c.bf16 %v1967, %v1965
        %v2000 = vpack.c.bf16 %v1968, %v1966
        %s2001 = scalar_lea.vmem %s4, 128
        %v2002 = vld [vmem:[%s2001] sm:$0xf]
        %v2003 = vld [vmem:[%s2001 + $0x4] sm:$0xf]
        %v2004 = vld [vmem:[%s2001 + $0x8] sm:$0xf]
        %v2005 = vld [vmem:[%s2001 + $0xc] sm:$0xf]
        %v2006 = vld [vmem:[%s2001 + $0x10] sm:$0xf]
        %v2007 = vld [vmem:[%s2001 + $0x14] sm:$0xf]
        %v2008 = vld [vmem:[%s2001 + $0x18] sm:$0xf]
        %v2009 = vld [vmem:[%s2001 + $0x1c] sm:$0xf]
        %v2010 = vld [vmem:[%s2001 + $0x20] sm:$0xf]
        %v2011 = vld [vmem:[%s2001 + $0x24] sm:$0xf]
        %v2012 = vld [vmem:[%s2001 + $0x28] sm:$0xf]
        %v2013 = vld [vmem:[%s2001 + $0x2c] sm:$0xf]
        %v2014 = vld [vmem:[%s2001 + $0x30] sm:$0xf]
        %v2015 = vld [vmem:[%s2001 + $0x34] sm:$0xf]
        %v2016 = vld [vmem:[%s2001 + $0x38] sm:$0xf]
        %v2017 = vld [vmem:[%s2001 + $0x3c] sm:$0xf]
        %v2018 = vld [vmem:[%s2001 + $0x40] sm:$0xf]
        %v2019 = vld [vmem:[%s2001 + $0x44] sm:$0xf]
        %v2020 = vld [vmem:[%s2001 + $0x48] sm:$0xf]
        %v2021 = vld [vmem:[%s2001 + $0x4c] sm:$0xf]
        %v2022 = vld [vmem:[%s2001 + $0x50] sm:$0xf]
        %v2023 = vld [vmem:[%s2001 + $0x54] sm:$0xf]
        %v2024 = vld [vmem:[%s2001 + $0x58] sm:$0xf]
        %v2025 = vld [vmem:[%s2001 + $0x5c] sm:$0xf]
        %v2026 = vld [vmem:[%s2001 + $0x60] sm:$0xf]
        %v2027 = vld [vmem:[%s2001 + $0x64] sm:$0xf]
        %v2028 = vld [vmem:[%s2001 + $0x68] sm:$0xf]
        %v2029 = vld [vmem:[%s2001 + $0x6c] sm:$0xf]
        %v2030 = vld [vmem:[%s2001 + $0x70] sm:$0xf]
        %v2031 = vld [vmem:[%s2001 + $0x74] sm:$0xf]
        %v2032 = vld [vmem:[%s2001 + $0x78] sm:$0xf]
        %v2033 = vld [vmem:[%s2001 + $0x7c] sm:$0xf]
        %s2034 = scalar_lea.vmem %s5, 1
        %v2035 = vld [vmem:[%s2034] sm:$0x1]
        %v2037 = vlaneseq
        %v2038 = vshrl.u32 %v2037, 7
        %v2039 = vsub.s32 0, %v2038
        %v2040 = vrot.slane %v2035, %v2039
        %v2074 = vunpack.c.l.b16 %v2002
        %v2075 = vunpack.c.l.b16 %v2003
        %v2076 = vunpack.c.l.b16 %v2004
        %v2077 = vunpack.c.l.b16 %v2005
        %v2078 = vunpack.c.l.b16 %v2006
        %v2079 = vunpack.c.l.b16 %v2007
        %v2080 = vunpack.c.l.b16 %v2008
        %v2081 = vunpack.c.l.b16 %v2009
        %v2082 = vunpack.c.l.b16 %v2010
        %v2083 = vunpack.c.l.b16 %v2011
        %v2084 = vunpack.c.l.b16 %v2012
        %v2085 = vunpack.c.l.b16 %v2013
        %v2086 = vunpack.c.l.b16 %v2014
        %v2087 = vunpack.c.l.b16 %v2015
        %v2088 = vunpack.c.l.b16 %v2016
        %v2089 = vunpack.c.l.b16 %v2017
        %v2090 = vunpack.c.l.b16 %v2018
        %v2091 = vunpack.c.l.b16 %v2019
        %v2092 = vunpack.c.l.b16 %v2020
        %v2093 = vunpack.c.l.b16 %v2021
        %v2094 = vunpack.c.l.b16 %v2022
        %v2095 = vunpack.c.l.b16 %v2023
        %v2096 = vunpack.c.l.b16 %v2024
        %v2097 = vunpack.c.l.b16 %v2025
        %v2098 = vunpack.c.l.b16 %v2026
        %v2099 = vunpack.c.l.b16 %v2027
        %v2100 = vunpack.c.l.b16 %v2028
        %v2101 = vunpack.c.l.b16 %v2029
        %v2102 = vunpack.c.l.b16 %v2030
        %v2103 = vunpack.c.l.b16 %v2031
        %v2104 = vunpack.c.l.b16 %v2032
        %v2105 = vunpack.c.l.b16 %v2033
        %v2106 = vpack.c.b16 %v2075, %v2074
        %v2107 = vpack.c.b16 %v2077, %v2076
        %v2108 = vpack.c.b16 %v2079, %v2078
        %v2109 = vpack.c.b16 %v2081, %v2080
        %v2110 = vpack.c.b16 %v2083, %v2082
        %v2111 = vpack.c.b16 %v2085, %v2084
        %v2112 = vpack.c.b16 %v2087, %v2086
        %v2113 = vpack.c.b16 %v2089, %v2088
        %v2114 = vpack.c.b16 %v2091, %v2090
        %v2115 = vpack.c.b16 %v2093, %v2092
        %v2116 = vpack.c.b16 %v2095, %v2094
        %v2117 = vpack.c.b16 %v2097, %v2096
        %v2118 = vpack.c.b16 %v2099, %v2098
        %v2119 = vpack.c.b16 %v2101, %v2100
        %v2120 = vpack.c.b16 %v2103, %v2102
        %v2121 = vpack.c.b16 %v2105, %v2104
        %2138 = vmatprep.subr.bf16.mxu0 0
        %2139 = vmatpush1.bf16.msra.mxu0 %v2113
        %2140 = vmatprep.subr.bf16.mxu0 0
        %2141 = vmatpush1.bf16.msra.mxu0 %v2112
        %2142 = vmatprep.subr.bf16.mxu0 0
        %2143 = vmatpush1.bf16.msra.mxu0 %v2111
        %2144 = vmatprep.subr.bf16.mxu0 0
        %2145 = vmatpush1.bf16.msra.mxu0 %v2110
        %2146 = vmatprep.subr.bf16.mxu0 0
        %2147 = vmatpush1.bf16.msra.mxu0 %v2109
        %2148 = vmatprep.subr.bf16.mxu0 0
        %2149 = vmatpush1.bf16.msra.mxu0 %v2108
        %2150 = vmatprep.subr.bf16.mxu0 0
        %2151 = vmatpush1.bf16.msra.mxu0 %v2107
        %2152 = vmatprep.subr.bf16.mxu0 0
        %2153 = vmatpush1.bf16.msra.mxu0 %v2106
        %2154 = vmatprep.subr.bf16.mxu0 0
        %2155 = vmatpush2.bf16.msra.mxu0 %v2121
        %2156 = vmatprep.subr.bf16.mxu0 0
        %2157 = vmatpush2.bf16.msra.mxu0 %v2120
        %2158 = vmatprep.subr.bf16.mxu0 0
        %2159 = vmatpush2.bf16.msra.mxu0 %v2119
        %2160 = vmatprep.subr.bf16.mxu0 0
        %2161 = vmatpush2.bf16.msra.mxu0 %v2118
        %2162 = vmatprep.subr.bf16.mxu0 0
        %2163 = vmatpush2.bf16.msra.mxu0 %v2117
        %2164 = vmatprep.subr.bf16.mxu0 0
        %2165 = vmatpush2.bf16.msra.mxu0 %v2116
        %2166 = vmatprep.subr.bf16.mxu0 0
        %2167 = vmatpush2.bf16.msra.mxu0 %v2115
        %2168 = vmatprep.subr.bf16.mxu0 0
        %2169 = vmatpush2.bf16.msra.mxu0 %v2114
        %2170 = vmatprep.mubr.bf16.mxu0 %v1970
        %2171 = vmatmul.mubr.bf16.gmra.mxu0 %v1969
        %v2172 = vpop.f32.mrf.mxu0
        %v2173 = vadd.f32 %v2040, %v2172
        %v2174 = vpop.f32.mrf.mxu0
        %v2175 = vpop.f32.mrf.mxu0
        %v2176 = vadd.f32 %v2040, %v2175
        %v2177 = vpop.f32.mrf.mxu0
        %2178 = vmatprep.mubr.bf16.mxu0 %v1972
        %2179 = vmatmul.mubr.bf16.gmra.mxu0 %v1971
        %v2180 = vpop.f32.mrf.mxu0
        %v2181 = vadd.f32 %v2040, %v2180
        %v2182 = vpop.f32.mrf.mxu0
        %v2183 = vpop.f32.mrf.mxu0
        %v2184 = vadd.f32 %v2040, %v2183
        %v2185 = vpop.f32.mrf.mxu0
        %2186 = vmatprep.mubr.bf16.mxu0 %v1974
        %2187 = vmatmul.mubr.bf16.gmra.mxu0 %v1973
        %v2188 = vpop.f32.mrf.mxu0
        %v2189 = vadd.f32 %v2040, %v2188
        %v2190 = vpop.f32.mrf.mxu0
        %v2191 = vpop.f32.mrf.mxu0
        %v2192 = vadd.f32 %v2040, %v2191
        %v2193 = vpop.f32.mrf.mxu0
        %2194 = vmatprep.mubr.bf16.mxu0 %v1976
        %2195 = vmatmul.mubr.bf16.gmra.mxu0 %v1975
        %v2196 = vpop.f32.mrf.mxu0
        %v2197 = vadd.f32 %v2040, %v2196
        %v2198 = vpop.f32.mrf.mxu0
        %v2199 = vpop.f32.mrf.mxu0
        %v2200 = vadd.f32 %v2040, %v2199
        %v2201 = vpop.f32.mrf.mxu0
        %2202 = vmatprep.mubr.bf16.mxu0 %v1978
        %2203 = vmatmul.mubr.bf16.gmra.mxu0 %v1977
        %v2204 = vpop.f32.mrf.mxu0
        %v2205 = vadd.f32 %v2040, %v2204
        %v2206 = vpop.f32.mrf.mxu0
        %v2207 = vpop.f32.mrf.mxu0
        %v2208 = vadd.f32 %v2040, %v2207
        %v2209 = vpop.f32.mrf.mxu0
        %2210 = vmatprep.mubr.bf16.mxu0 %v1980
        %2211 = vmatmul.mubr.bf16.gmra.mxu0 %v1979
        %v2212 = vpop.f32.mrf.mxu0
        %v2213 = vadd.f32 %v2040, %v2212
        %v2214 = vpop.f32.mrf.mxu0
        %v2215 = vpop.f32.mrf.mxu0
        %v2216 = vadd.f32 %v2040, %v2215
        %v2217 = vpop.f32.mrf.mxu0
        %2218 = vmatprep.mubr.bf16.mxu0 %v1982
        %2219 = vmatmul.mubr.bf16.gmra.mxu0 %v1981
        %v2220 = vpop.f32.mrf.mxu0
        %v2221 = vadd.f32 %v2040, %v2220
        %v2222 = vpop.f32.mrf.mxu0
        %v2223 = vpop.f32.mrf.mxu0
        %v2224 = vadd.f32 %v2040, %v2223
        %v2225 = vpop.f32.mrf.mxu0
        %2226 = vmatprep.mubr.bf16.mxu0 %v1984
        %2227 = vmatmul.mubr.bf16.gmra.mxu0 %v1983
        %v2228 = vpop.f32.mrf.mxu0
        %v2229 = vadd.f32 %v2040, %v2228
        %v2230 = vpop.f32.mrf.mxu0
        %v2231 = vpop.f32.mrf.mxu0
        %v2232 = vadd.f32 %v2040, %v2231
        %v2233 = vpop.f32.mrf.mxu0
        %2234 = vmatprep.mubr.bf16.mxu0 %v1986
        %2235 = vmatmul.mubr.bf16.gmra.mxu0 %v1985
        %v2236 = vpop.f32.mrf.mxu0
        %v2237 = vadd.f32 %v2040, %v2236
        %v2238 = vpop.f32.mrf.mxu0
        %v2239 = vpop.f32.mrf.mxu0
        %v2240 = vadd.f32 %v2040, %v2239
        %v2241 = vpop.f32.mrf.mxu0
        %2242 = vmatprep.mubr.bf16.mxu0 %v1988
        %2243 = vmatmul.mubr.bf16.gmra.mxu0 %v1987
        %v2244 = vpop.f32.mrf.mxu0
        %v2245 = vadd.f32 %v2040, %v2244
        %v2246 = vpop.f32.mrf.mxu0
        %v2247 = vpop.f32.mrf.mxu0
        %v2248 = vadd.f32 %v2040, %v2247
        %v2249 = vpop.f32.mrf.mxu0
        %2250 = vmatprep.mubr.bf16.mxu0 %v1990
        %2251 = vmatmul.mubr.bf16.gmra.mxu0 %v1989
        %v2252 = vpop.f32.mrf.mxu0
        %v2253 = vadd.f32 %v2040, %v2252
        %v2254 = vpop.f32.mrf.mxu0
        %v2255 = vpop.f32.mrf.mxu0
        %v2256 = vadd.f32 %v2040, %v2255
        %v2257 = vpop.f32.mrf.mxu0
        %2258 = vmatprep.mubr.bf16.mxu0 %v1992
        %2259 = vmatmul.mubr.bf16.gmra.mxu0 %v1991
        %v2260 = vpop.f32.mrf.mxu0
        %v2261 = vadd.f32 %v2040, %v2260
        %v2262 = vpop.f32.mrf.mxu0
        %v2263 = vpop.f32.mrf.mxu0
        %v2264 = vadd.f32 %v2040, %v2263
        %v2265 = vpop.f32.mrf.mxu0
        %2266 = vmatprep.mubr.bf16.mxu0 %v1994
        %2267 = vmatmul.mubr.bf16.gmra.mxu0 %v1993
        %v2268 = vpop.f32.mrf.mxu0
        %v2269 = vadd.f32 %v2040, %v2268
        %v2270 = vpop.f32.mrf.mxu0
        %v2271 = vpop.f32.mrf.mxu0
        %v2272 = vadd.f32 %v2040, %v2271
        %v2273 = vpop.f32.mrf.mxu0
        %2274 = vmatprep.mubr.bf16.mxu0 %v1996
        %2275 = vmatmul.mubr.bf16.gmra.mxu0 %v1995
        %v2276 = vpop.f32.mrf.mxu0
        %v2277 = vadd.f32 %v2040, %v2276
        %v2278 = vpop.f32.mrf.mxu0
        %v2279 = vpop.f32.mrf.mxu0
        %v2280 = vadd.f32 %v2040, %v2279
        %v2281 = vpop.f32.mrf.mxu0
        %2282 = vmatprep.mubr.bf16.mxu0 %v1998
        %2283 = vmatmul.mubr.bf16.gmra.mxu0 %v1997
        %v2284 = vpop.f32.mrf.mxu0
        %v2285 = vadd.f32 %v2040, %v2284
        %v2286 = vpop.f32.mrf.mxu0
        %v2287 = vpop.f32.mrf.mxu0
        %v2288 = vadd.f32 %v2040, %v2287
        %v2289 = vpop.f32.mrf.mxu0
        %2290 = vmatprep.mubr.bf16.mxu0 %v2000
        %2291 = vmatmul.mubr.bf16.gmra.mxu0 %v1999
        %v2292 = vpop.f32.mrf.mxu0
        %v2293 = vadd.f32 %v2040, %v2292
        %v2294 = vpop.f32.mrf.mxu0
        %v2295 = vpop.f32.mrf.mxu0
        %v2296 = vadd.f32 %v2040, %v2295
        %v2297 = vpop.f32.mrf.mxu0
        %2298 = vdwg.mxu0
        %v2299 = vld [vmem:[%s282] sm:$0xff]
        %v2300 = vld [vmem:[%s282 + $0x8] sm:$0xff]
        %v2301 = vld [vmem:[%s282 + $0x10] sm:$0xff]
        %v2302 = vld [vmem:[%s282 + $0x18] sm:$0xff]
        %v2303 = vld [vmem:[%s282 + $0x20] sm:$0xff]
        %v2304 = vld [vmem:[%s282 + $0x28] sm:$0xff]
        %v2305 = vld [vmem:[%s282 + $0x30] sm:$0xff]
        %v2306 = vld [vmem:[%s282 + $0x38] sm:$0xff]
        %v2307 = vld [vmem:[%s282 + $0x40] sm:$0xff]
        %v2308 = vld [vmem:[%s282 + $0x48] sm:$0xff]
        %v2309 = vld [vmem:[%s282 + $0x50] sm:$0xff]
        %v2310 = vld [vmem:[%s282 + $0x58] sm:$0xff]
        %v2311 = vld [vmem:[%s282 + $0x60] sm:$0xff]
        %v2312 = vld [vmem:[%s282 + $0x68] sm:$0xff]
        %v2313 = vld [vmem:[%s282 + $0x70] sm:$0xff]
        %v2314 = vld [vmem:[%s282 + $0x78] sm:$0xff]
        %v2315 = vld [vmem:[%s282 + $0x80] sm:$0xff]
        %v2316 = vld [vmem:[%s282 + $0x88] sm:$0xff]
        %v2317 = vld [vmem:[%s282 + $0x90] sm:$0xff]
        %v2318 = vld [vmem:[%s282 + $0x98] sm:$0xff]
        %v2319 = vld [vmem:[%s282 + $0xa0] sm:$0xff]
        %v2320 = vld [vmem:[%s282 + $0xa8] sm:$0xff]
        %v2321 = vld [vmem:[%s282 + $0xb0] sm:$0xff]
        %v2322 = vld [vmem:[%s282 + $0xb8] sm:$0xff]
        %v2323 = vld [vmem:[%s282 + $0xc0] sm:$0xff]
        %v2324 = vld [vmem:[%s282 + $0xc8] sm:$0xff]
        %v2325 = vld [vmem:[%s282 + $0xd0] sm:$0xff]
        %v2326 = vld [vmem:[%s282 + $0xd8] sm:$0xff]
        %v2327 = vld [vmem:[%s282 + $0xe0] sm:$0xff]
        %v2328 = vld [vmem:[%s282 + $0xe8] sm:$0xff]
        %v2329 = vld [vmem:[%s282 + $0xf0] sm:$0xff]
        %v2330 = vld [vmem:[%s282 + $0xf8] sm:$0xff]
        %v2331 = vld [vmem:[%s276] sm:$0xff]
        %v2332 = vld [vmem:[%s276 + $0x8] sm:$0xff]
        %v2333 = vld [vmem:[%s276 + $0x10] sm:$0xff]
        %v2334 = vld [vmem:[%s276 + $0x18] sm:$0xff]
        %v2335 = vld [vmem:[%s276 + $0x20] sm:$0xff]
        %v2336 = vld [vmem:[%s276 + $0x28] sm:$0xff]
        %v2337 = vld [vmem:[%s276 + $0x30] sm:$0xff]
        %v2338 = vld [vmem:[%s276 + $0x38] sm:$0xff]
        %v2339 = vld [vmem:[%s276 + $0x40] sm:$0xff]
        %v2340 = vld [vmem:[%s276 + $0x48] sm:$0xff]
        %v2341 = vld [vmem:[%s276 + $0x50] sm:$0xff]
        %v2342 = vld [vmem:[%s276 + $0x58] sm:$0xff]
        %v2343 = vld [vmem:[%s276 + $0x60] sm:$0xff]
        %v2344 = vld [vmem:[%s276 + $0x68] sm:$0xff]
        %v2345 = vld [vmem:[%s276 + $0x70] sm:$0xff]
        %v2346 = vld [vmem:[%s276 + $0x78] sm:$0xff]
        %v2347 = vld [vmem:[%s276 + $0x80] sm:$0xff]
        %v2348 = vld [vmem:[%s276 + $0x88] sm:$0xff]
        %v2349 = vld [vmem:[%s276 + $0x90] sm:$0xff]
        %v2350 = vld [vmem:[%s276 + $0x98] sm:$0xff]
        %v2351 = vld [vmem:[%s276 + $0xa0] sm:$0xff]
        %v2352 = vld [vmem:[%s276 + $0xa8] sm:$0xff]
        %v2353 = vld [vmem:[%s276 + $0xb0] sm:$0xff]
        %v2354 = vld [vmem:[%s276 + $0xb8] sm:$0xff]
        %v2355 = vld [vmem:[%s276 + $0xc0] sm:$0xff]
        %v2356 = vld [vmem:[%s276 + $0xc8] sm:$0xff]
        %v2357 = vld [vmem:[%s276 + $0xd0] sm:$0xff]
        %v2358 = vld [vmem:[%s276 + $0xd8] sm:$0xff]
        %v2359 = vld [vmem:[%s276 + $0xe0] sm:$0xff]
        %v2360 = vld [vmem:[%s276 + $0xe8] sm:$0xff]
        %v2361 = vld [vmem:[%s276 + $0xf0] sm:$0xff]
        %v2362 = vld [vmem:[%s276 + $0xf8] sm:$0xff]
        %2364 = vset.pattern.permute.xlu0 1
        %2365 = vperm.xlu0 %2364, %v2331
        %v2366 = vpop.permute.xlu0 %2365
        %2369 = vset.pattern.permute.xlu0 1
        %2370 = vperm.xlu0 %2369, %v2332
        %v2371 = vpop.permute.xlu0 %2370
        %2374 = vset.pattern.permute.xlu0 1
        %2375 = vperm.xlu0 %2374, %v2333
        %v2376 = vpop.permute.xlu0 %2375
        %2379 = vset.pattern.permute.xlu0 1
        %2380 = vperm.xlu0 %2379, %v2334
        %v2381 = vpop.permute.xlu0 %2380
        %2384 = vset.pattern.permute.xlu0 1
        %2385 = vperm.xlu0 %2384, %v2335
        %v2386 = vpop.permute.xlu0 %2385
        %2389 = vset.pattern.permute.xlu0 1
        %2390 = vperm.xlu0 %2389, %v2336
        %v2391 = vpop.permute.xlu0 %2390
        %2394 = vset.pattern.permute.xlu0 1
        %2395 = vperm.xlu0 %2394, %v2337
        %v2396 = vpop.permute.xlu0 %2395
        %2399 = vset.pattern.permute.xlu0 1
        %2400 = vperm.xlu0 %2399, %v2338
        %v2401 = vpop.permute.xlu0 %2400
        %2404 = vset.pattern.permute.xlu0 1
        %2405 = vperm.xlu0 %2404, %v2339
        %v2406 = vpop.permute.xlu0 %2405
        %2409 = vset.pattern.permute.xlu0 1
        %2410 = vperm.xlu0 %2409, %v2340
        %v2411 = vpop.permute.xlu0 %2410
        %2414 = vset.pattern.permute.xlu0 1
        %2415 = vperm.xlu0 %2414, %v2341
        %v2416 = vpop.permute.xlu0 %2415
        %2419 = vset.pattern.permute.xlu0 1
        %2420 = vperm.xlu0 %2419, %v2342
        %v2421 = vpop.permute.xlu0 %2420
        %2424 = vset.pattern.permute.xlu0 1
        %2425 = vperm.xlu0 %2424, %v2343
        %v2426 = vpop.permute.xlu0 %2425
        %2429 = vset.pattern.permute.xlu0 1
        %2430 = vperm.xlu0 %2429, %v2344
        %v2431 = vpop.permute.xlu0 %2430
        %2434 = vset.pattern.permute.xlu0 1
        %2435 = vperm.xlu0 %2434, %v2345
        %v2436 = vpop.permute.xlu0 %2435
        %2439 = vset.pattern.permute.xlu0 1
        %2440 = vperm.xlu0 %2439, %v2346
        %v2441 = vpop.permute.xlu0 %2440
        %2444 = vset.pattern.permute.xlu0 1
        %2445 = vperm.xlu0 %2444, %v2347
        %v2446 = vpop.permute.xlu0 %2445
        %2449 = vset.pattern.permute.xlu0 1
        %2450 = vperm.xlu0 %2449, %v2348
        %v2451 = vpop.permute.xlu0 %2450
        %2454 = vset.pattern.permute.xlu0 1
        %2455 = vperm.xlu0 %2454, %v2349
        %v2456 = vpop.permute.xlu0 %2455
        %2459 = vset.pattern.permute.xlu0 1
        %2460 = vperm.xlu0 %2459, %v2350
        %v2461 = vpop.permute.xlu0 %2460
        %2464 = vset.pattern.permute.xlu0 1
        %2465 = vperm.xlu0 %2464, %v2351
        %v2466 = vpop.permute.xlu0 %2465
        %2469 = vset.pattern.permute.xlu0 1
        %2470 = vperm.xlu0 %2469, %v2352
        %v2471 = vpop.permute.xlu0 %2470
        %2474 = vset.pattern.permute.xlu0 1
        %2475 = vperm.xlu0 %2474, %v2353
        %v2476 = vpop.permute.xlu0 %2475
        %2479 = vset.pattern.permute.xlu0 1
        %2480 = vperm.xlu0 %2479, %v2354
        %v2481 = vpop.permute.xlu0 %2480
        %2484 = vset.pattern.permute.xlu0 1
        %2485 = vperm.xlu0 %2484, %v2355
        %v2486 = vpop.permute.xlu0 %2485
        %2489 = vset.pattern.permute.xlu0 1
        %2490 = vperm.xlu0 %2489, %v2356
        %v2491 = vpop.permute.xlu0 %2490
        %2494 = vset.pattern.permute.xlu0 1
        %2495 = vperm.xlu0 %2494, %v2357
        %v2496 = vpop.permute.xlu0 %2495
        %2499 = vset.pattern.permute.xlu0 1
        %2500 = vperm.xlu0 %2499, %v2358
        %v2501 = vpop.permute.xlu0 %2500
        %2504 = vset.pattern.permute.xlu0 1
        %2505 = vperm.xlu0 %2504, %v2359
        %v2506 = vpop.permute.xlu0 %2505
        %2509 = vset.pattern.permute.xlu0 1
        %2510 = vperm.xlu0 %2509, %v2360
        %v2511 = vpop.permute.xlu0 %2510
        %2514 = vset.pattern.permute.xlu0 1
        %2515 = vperm.xlu0 %2514, %v2361
        %v2516 = vpop.permute.xlu0 %2515
        %2519 = vset.pattern.permute.xlu0 1
        %2520 = vperm.xlu0 %2519, %v2362
        %v2521 = vpop.permute.xlu0 %2520
        %v2523 = vmul.f32 %v2366, %v2173
        %v2524 = vmul.f32 %v2371, %v2176
        %v2525 = vmul.f32 %v2376, %v2181
        %v2526 = vmul.f32 %v2381, %v2184
        %v2527 = vmul.f32 %v2386, %v2189
        %v2528 = vmul.f32 %v2391, %v2192
        %v2529 = vmul.f32 %v2396, %v2197
        %v2530 = vmul.f32 %v2401, %v2200
        %v2531 = vmul.f32 %v2406, %v2205
        %v2532 = vmul.f32 %v2411, %v2208
        %v2533 = vmul.f32 %v2416, %v2213
        %v2534 = vmul.f32 %v2421, %v2216
        %v2535 = vmul.f32 %v2426, %v2221
        %v2536 = vmul.f32 %v2431, %v2224
        %v2537 = vmul.f32 %v2436, %v2229
        %v2538 = vmul.f32 %v2441, %v2232
        %v2539 = vmul.f32 %v2446, %v2237
        %v2540 = vmul.f32 %v2451, %v2240
        %v2541 = vmul.f32 %v2456, %v2245
        %v2542 = vmul.f32 %v2461, %v2248
        %v2543 = vmul.f32 %v2466, %v2253
        %v2544 = vmul.f32 %v2471, %v2256
        %v2545 = vmul.f32 %v2476, %v2261
        %v2546 = vmul.f32 %v2481, %v2264
        %v2547 = vmul.f32 %v2486, %v2269
        %v2548 = vmul.f32 %v2491, %v2272
        %v2549 = vmul.f32 %v2496, %v2277
        %v2550 = vmul.f32 %v2501, %v2280
        %v2551 = vmul.f32 %v2506, %v2285
        %v2552 = vmul.f32 %v2511, %v2288
        %v2553 = vmul.f32 %v2516, %v2293
        %v2554 = vmul.f32 %v2521, %v2296
        %v2555 = vadd.f32 %v2299, %v2523
        %v2556 = vadd.f32 %v2300, %v2524
        %v2557 = vadd.f32 %v2301, %v2525
        %v2558 = vadd.f32 %v2302, %v2526
        %v2559 = vadd.f32 %v2303, %v2527
        %v2560 = vadd.f32 %v2304, %v2528
        %v2561 = vadd.f32 %v2305, %v2529
        %v2562 = vadd.f32 %v2306, %v2530
        %v2563 = vadd.f32 %v2307, %v2531
        %v2564 = vadd.f32 %v2308, %v2532
        %v2565 = vadd.f32 %v2309, %v2533
        %v2566 = vadd.f32 %v2310, %v2534
        %v2567 = vadd.f32 %v2311, %v2535
        %v2568 = vadd.f32 %v2312, %v2536
        %v2569 = vadd.f32 %v2313, %v2537
        %v2570 = vadd.f32 %v2314, %v2538
        %v2571 = vadd.f32 %v2315, %v2539
        %v2572 = vadd.f32 %v2316, %v2540
        %v2573 = vadd.f32 %v2317, %v2541
        %v2574 = vadd.f32 %v2318, %v2542
        %v2575 = vadd.f32 %v2319, %v2543
        %v2576 = vadd.f32 %v2320, %v2544
        %v2577 = vadd.f32 %v2321, %v2545
        %v2578 = vadd.f32 %v2322, %v2546
        %v2579 = vadd.f32 %v2323, %v2547
        %v2580 = vadd.f32 %v2324, %v2548
        %v2581 = vadd.f32 %v2325, %v2549
        %v2582 = vadd.f32 %v2326, %v2550
        %v2583 = vadd.f32 %v2327, %v2551
        %v2584 = vadd.f32 %v2328, %v2552
        %v2585 = vadd.f32 %v2329, %v2553
        %v2586 = vadd.f32 %v2330, %v2554
        %2587 = vst [vmem:[%s282] sm:$0xff] %v2555
        %2588 = vst [vmem:[%s282 + $0x8] sm:$0xff] %v2556
        %2589 = vst [vmem:[%s282 + $0x10] sm:$0xff] %v2557
        %2590 = vst [vmem:[%s282 + $0x18] sm:$0xff] %v2558
        %2591 = vst [vmem:[%s282 + $0x20] sm:$0xff] %v2559
        %2592 = vst [vmem:[%s282 + $0x28] sm:$0xff] %v2560
        %2593 = vst [vmem:[%s282 + $0x30] sm:$0xff] %v2561
        %2594 = vst [vmem:[%s282 + $0x38] sm:$0xff] %v2562
        %2595 = vst [vmem:[%s282 + $0x40] sm:$0xff] %v2563
        %2596 = vst [vmem:[%s282 + $0x48] sm:$0xff] %v2564
        %2597 = vst [vmem:[%s282 + $0x50] sm:$0xff] %v2565
        %2598 = vst [vmem:[%s282 + $0x58] sm:$0xff] %v2566
        %2599 = vst [vmem:[%s282 + $0x60] sm:$0xff] %v2567
        %2600 = vst [vmem:[%s282 + $0x68] sm:$0xff] %v2568
        %2601 = vst [vmem:[%s282 + $0x70] sm:$0xff] %v2569
        %2602 = vst [vmem:[%s282 + $0x78] sm:$0xff] %v2570
        %2603 = vst [vmem:[%s282 + $0x80] sm:$0xff] %v2571
        %2604 = vst [vmem:[%s282 + $0x88] sm:$0xff] %v2572
        %2605 = vst [vmem:[%s282 + $0x90] sm:$0xff] %v2573
        %2606 = vst [vmem:[%s282 + $0x98] sm:$0xff] %v2574
        %2607 = vst [vmem:[%s282 + $0xa0] sm:$0xff] %v2575
        %2608 = vst [vmem:[%s282 + $0xa8] sm:$0xff] %v2576
        %2609 = vst [vmem:[%s282 + $0xb0] sm:$0xff] %v2577
        %2610 = vst [vmem:[%s282 + $0xb8] sm:$0xff] %v2578
        %2611 = vst [vmem:[%s282 + $0xc0] sm:$0xff] %v2579
        %2612 = vst [vmem:[%s282 + $0xc8] sm:$0xff] %v2580
        %2613 = vst [vmem:[%s282 + $0xd0] sm:$0xff] %v2581
        %2614 = vst [vmem:[%s282 + $0xd8] sm:$0xff] %v2582
        %2615 = vst [vmem:[%s282 + $0xe0] sm:$0xff] %v2583
        %2616 = vst [vmem:[%s282 + $0xe8] sm:$0xff] %v2584
        %2617 = vst [vmem:[%s282 + $0xf0] sm:$0xff] %v2585
        %2618 = vst [vmem:[%s282 + $0xf8] sm:$0xff] %v2586
      $region52: #{simple_moe_layer.1} parent=43 // pred_fallthru
        _
      %p2619 = scmp.le.s32.totalorder %s286, 2
      %p2620 = scmp.ge.s32.totalorder %s288, 2
      %p2621 = pnand %p2619, %p2620
      %p2622 = pneg %p2621
      // Predicated region
      $region53: #{simple_moe_layer.1} parent=43 // pred_check
        _
      $region54: #{simple_moe_layer.1} parent=43 // pred_check_branch
        %2624 = sbr.rel (%p2621) target = $region56
      $region55: #{simple_moe_layer.1} parent=43 // pred_region
        %v2625 = vld [vmem:[%s270] sm:$0xf]
        %v2626 = vld [vmem:[%s270 + $0x4] sm:$0xf]
        %v2627 = vld [vmem:[%s270 + $0x8] sm:$0xf]
        %v2628 = vld [vmem:[%s270 + $0xc] sm:$0xf]
        %v2629 = vld [vmem:[%s270 + $0x10] sm:$0xf]
        %v2630 = vld [vmem:[%s270 + $0x14] sm:$0xf]
        %v2631 = vld [vmem:[%s270 + $0x18] sm:$0xf]
        %v2632 = vld [vmem:[%s270 + $0x1c] sm:$0xf]
        %v2633 = vld [vmem:[%s270 + $0x20] sm:$0xf]
        %v2634 = vld [vmem:[%s270 + $0x24] sm:$0xf]
        %v2635 = vld [vmem:[%s270 + $0x28] sm:$0xf]
        %v2636 = vld [vmem:[%s270 + $0x2c] sm:$0xf]
        %v2637 = vld [vmem:[%s270 + $0x30] sm:$0xf]
        %v2638 = vld [vmem:[%s270 + $0x34] sm:$0xf]
        %v2639 = vld [vmem:[%s270 + $0x38] sm:$0xf]
        %v2640 = vld [vmem:[%s270 + $0x3c] sm:$0xf]
        %v2641 = vld [vmem:[%s270 + $0x40] sm:$0xf]
        %v2642 = vld [vmem:[%s270 + $0x44] sm:$0xf]
        %v2643 = vld [vmem:[%s270 + $0x48] sm:$0xf]
        %v2644 = vld [vmem:[%s270 + $0x4c] sm:$0xf]
        %v2645 = vld [vmem:[%s270 + $0x50] sm:$0xf]
        %v2646 = vld [vmem:[%s270 + $0x54] sm:$0xf]
        %v2647 = vld [vmem:[%s270 + $0x58] sm:$0xf]
        %v2648 = vld [vmem:[%s270 + $0x5c] sm:$0xf]
        %v2649 = vld [vmem:[%s270 + $0x60] sm:$0xf]
        %v2650 = vld [vmem:[%s270 + $0x64] sm:$0xf]
        %v2651 = vld [vmem:[%s270 + $0x68] sm:$0xf]
        %v2652 = vld [vmem:[%s270 + $0x6c] sm:$0xf]
        %v2653 = vld [vmem:[%s270 + $0x70] sm:$0xf]
        %v2654 = vld [vmem:[%s270 + $0x74] sm:$0xf]
        %v2655 = vld [vmem:[%s270 + $0x78] sm:$0xf]
        %v2656 = vld [vmem:[%s270 + $0x7c] sm:$0xf]
        %s2657 = scalar_lea.vmem %s2, 256
        %v2658 = vld [vmem:[%s2657] sm:$0xff]
        %v2659 = vld [vmem:[%s2657 + $0x8] sm:$0xff]
        %v2660 = vld [vmem:[%s2657 + $0x10] sm:$0xff]
        %v2661 = vld [vmem:[%s2657 + $0x18] sm:$0xff]
        %v2662 = vld [vmem:[%s2657 + $0x20] sm:$0xff]
        %v2663 = vld [vmem:[%s2657 + $0x28] sm:$0xff]
        %v2664 = vld [vmem:[%s2657 + $0x30] sm:$0xff]
        %v2665 = vld [vmem:[%s2657 + $0x38] sm:$0xff]
        %v2666 = vld [vmem:[%s2657 + $0x40] sm:$0xff]
        %v2667 = vld [vmem:[%s2657 + $0x48] sm:$0xff]
        %v2668 = vld [vmem:[%s2657 + $0x50] sm:$0xff]
        %v2669 = vld [vmem:[%s2657 + $0x58] sm:$0xff]
        %v2670 = vld [vmem:[%s2657 + $0x60] sm:$0xff]
        %v2671 = vld [vmem:[%s2657 + $0x68] sm:$0xff]
        %v2672 = vld [vmem:[%s2657 + $0x70] sm:$0xff]
        %v2673 = vld [vmem:[%s2657 + $0x78] sm:$0xff]
        %s2674 = scalar_lea.vmem %s3, 4
        %v2675 = vld [vmem:[%s2674] sm:$0x3]
        %v2677 = vlaneseq
        %v2678 = vshrl.u32 %v2677, 7
        %v2679 = vsub.s32 0, %v2678
        %v2680 = vrot.slane %v2675, %v2679
        %v2681 = vlaneseq
        %v2682 = vshrl.u32 %v2681, 7
        %v2683 = vsub.s32 1, %v2682
        %v2684 = vrot.slane %v2675, %v2683
        %v2719 = vunpack.c.l.b16 %v2625
        %v2720 = vunpack.c.l.b16 %v2626
        %v2721 = vunpack.c.l.b16 %v2627
        %v2722 = vunpack.c.l.b16 %v2628
        %v2723 = vunpack.c.l.b16 %v2629
        %v2724 = vunpack.c.l.b16 %v2630
        %v2725 = vunpack.c.l.b16 %v2631
        %v2726 = vunpack.c.l.b16 %v2632
        %v2727 = vunpack.c.l.b16 %v2633
        %v2728 = vunpack.c.l.b16 %v2634
        %v2729 = vunpack.c.l.b16 %v2635
        %v2730 = vunpack.c.l.b16 %v2636
        %v2731 = vunpack.c.l.b16 %v2637
        %v2732 = vunpack.c.l.b16 %v2638
        %v2733 = vunpack.c.l.b16 %v2639
        %v2734 = vunpack.c.l.b16 %v2640
        %v2735 = vunpack.c.l.b16 %v2641
        %v2736 = vunpack.c.l.b16 %v2642
        %v2737 = vunpack.c.l.b16 %v2643
        %v2738 = vunpack.c.l.b16 %v2644
        %v2739 = vunpack.c.l.b16 %v2645
        %v2740 = vunpack.c.l.b16 %v2646
        %v2741 = vunpack.c.l.b16 %v2647
        %v2742 = vunpack.c.l.b16 %v2648
        %v2743 = vunpack.c.l.b16 %v2649
        %v2744 = vunpack.c.l.b16 %v2650
        %v2745 = vunpack.c.l.b16 %v2651
        %v2746 = vunpack.c.l.b16 %v2652
        %v2747 = vunpack.c.l.b16 %v2653
        %v2748 = vunpack.c.l.b16 %v2654
        %v2749 = vunpack.c.l.b16 %v2655
        %v2750 = vunpack.c.l.b16 %v2656
        %v2751 = vpack.c.b16 %v2720, %v2719
        %v2752 = vpack.c.b16 %v2722, %v2721
        %v2753 = vpack.c.b16 %v2724, %v2723
        %v2754 = vpack.c.b16 %v2726, %v2725
        %v2755 = vpack.c.b16 %v2728, %v2727
        %v2756 = vpack.c.b16 %v2730, %v2729
        %v2757 = vpack.c.b16 %v2732, %v2731
        %v2758 = vpack.c.b16 %v2734, %v2733
        %v2759 = vpack.c.b16 %v2736, %v2735
        %v2760 = vpack.c.b16 %v2738, %v2737
        %v2761 = vpack.c.b16 %v2740, %v2739
        %v2762 = vpack.c.b16 %v2742, %v2741
        %v2763 = vpack.c.b16 %v2744, %v2743
        %v2764 = vpack.c.b16 %v2746, %v2745
        %v2765 = vpack.c.b16 %v2748, %v2747
        %v2766 = vpack.c.b16 %v2750, %v2749
        %v2799 = vunpack.c.l.b16 %v2658
        %v2800 = vunpack.c.h.b16 %v2658
        %v2801 = vunpack.c.l.b16 %v2659
        %v2802 = vunpack.c.h.b16 %v2659
        %v2803 = vunpack.c.l.b16 %v2660
        %v2804 = vunpack.c.h.b16 %v2660
        %v2805 = vunpack.c.l.b16 %v2661
        %v2806 = vunpack.c.h.b16 %v2661
        %v2807 = vunpack.c.l.b16 %v2662
        %v2808 = vunpack.c.h.b16 %v2662
        %v2809 = vunpack.c.l.b16 %v2663
        %v2810 = vunpack.c.h.b16 %v2663
        %v2811 = vunpack.c.l.b16 %v2664
        %v2812 = vunpack.c.h.b16 %v2664
        %v2813 = vunpack.c.l.b16 %v2665
        %v2814 = vunpack.c.h.b16 %v2665
        %v2815 = vunpack.c.l.b16 %v2666
        %v2816 = vunpack.c.h.b16 %v2666
        %v2817 = vunpack.c.l.b16 %v2667
        %v2818 = vunpack.c.h.b16 %v2667
        %v2819 = vunpack.c.l.b16 %v2668
        %v2820 = vunpack.c.h.b16 %v2668
        %v2821 = vunpack.c.l.b16 %v2669
        %v2822 = vunpack.c.h.b16 %v2669
        %v2823 = vunpack.c.l.b16 %v2670
        %v2824 = vunpack.c.h.b16 %v2670
        %v2825 = vunpack.c.l.b16 %v2671
        %v2826 = vunpack.c.h.b16 %v2671
        %v2827 = vunpack.c.l.b16 %v2672
        %v2828 = vunpack.c.h.b16 %v2672
        %v2829 = vunpack.c.l.b16 %v2673
        %v2830 = vunpack.c.h.b16 %v2673
        %v2831 = vpack.c.b16 %v2801, %v2799
        %v2832 = vpack.c.b16 %v2802, %v2800
        %v2833 = vpack.c.b16 %v2805, %v2803
        %v2834 = vpack.c.b16 %v2806, %v2804
        %v2835 = vpack.c.b16 %v2809, %v2807
        %v2836 = vpack.c.b16 %v2810, %v2808
        %v2837 = vpack.c.b16 %v2813, %v2811
        %v2838 = vpack.c.b16 %v2814, %v2812
        %v2839 = vpack.c.b16 %v2817, %v2815
        %v2840 = vpack.c.b16 %v2818, %v2816
        %v2841 = vpack.c.b16 %v2821, %v2819
        %v2842 = vpack.c.b16 %v2822, %v2820
        %v2843 = vpack.c.b16 %v2825, %v2823
        %v2844 = vpack.c.b16 %v2826, %v2824
        %v2845 = vpack.c.b16 %v2829, %v2827
        %v2846 = vpack.c.b16 %v2830, %v2828
        %2863 = vmatprep.subr.bf16.mxu0 %v2846
        %2864 = vmatpush1.bf16.msra.mxu0 %v2845
        %2865 = vmatprep.subr.bf16.mxu0 %v2844
        %2866 = vmatpush1.bf16.msra.mxu0 %v2843
        %2867 = vmatprep.subr.bf16.mxu0 %v2842
        %2868 = vmatpush1.bf16.msra.mxu0 %v2841
        %2869 = vmatprep.subr.bf16.mxu0 %v2840
        %2870 = vmatpush1.bf16.msra.mxu0 %v2839
        %2871 = vmatprep.subr.bf16.mxu0 %v2838
        %2872 = vmatpush1.bf16.msra.mxu0 %v2837
        %2873 = vmatprep.subr.bf16.mxu0 %v2836
        %2874 = vmatpush1.bf16.msra.mxu0 %v2835
        %2875 = vmatprep.subr.bf16.mxu0 %v2834
        %2876 = vmatpush1.bf16.msra.mxu0 %v2833
        %2877 = vmatprep.subr.bf16.mxu0 %v2832
        %2878 = vmatpush1.bf16.msra.mxu0 %v2831
        %2879 = vmatprep.subr.bf16.mxu0 0
        %2880 = vmatpush2.bf16.msra.mxu0 0
        %2881 = vmatprep.subr.bf16.mxu0 0
        %2882 = vmatpush2.bf16.msra.mxu0 0
        %2883 = vmatprep.subr.bf16.mxu0 0
        %2884 = vmatpush2.bf16.msra.mxu0 0
        %2885 = vmatprep.subr.bf16.mxu0 0
        %2886 = vmatpush2.bf16.msra.mxu0 0
        %2887 = vmatprep.subr.bf16.mxu0 0
        %2888 = vmatpush2.bf16.msra.mxu0 0
        %2889 = vmatprep.subr.bf16.mxu0 0
        %2890 = vmatpush2.bf16.msra.mxu0 0
        %2891 = vmatprep.subr.bf16.mxu0 0
        %2892 = vmatpush2.bf16.msra.mxu0 0
        %2893 = vmatprep.subr.bf16.mxu0 0
        %2894 = vmatpush2.bf16.msra.mxu0 0
        %2895 = vmatprep.mubr.bf16.mxu0 0
        %2896 = vmatmul.mubr.bf16.gmra.mxu0 %v2751
        %v2897 = vpop.f32.mrf.mxu0
        %v2898 = vadd.f32 %v2680, %v2897
        %v2899 = vpop.f32.mrf.mxu0
        %v2900 = vadd.f32 %v2684, %v2899
        %v2901 = vpop.f32.mrf.mxu0
        %v2902 = vadd.f32 %v2680, %v2901
        %v2903 = vpop.f32.mrf.mxu0
        %v2904 = vadd.f32 %v2684, %v2903
        %2905 = vmatprep.mubr.bf16.mxu0 0
        %2906 = vmatmul.mubr.bf16.gmra.mxu0 %v2752
        %v2907 = vpop.f32.mrf.mxu0
        %v2908 = vadd.f32 %v2680, %v2907
        %v2909 = vpop.f32.mrf.mxu0
        %v2910 = vadd.f32 %v2684, %v2909
        %v2911 = vpop.f32.mrf.mxu0
        %v2912 = vadd.f32 %v2680, %v2911
        %v2913 = vpop.f32.mrf.mxu0
        %v2914 = vadd.f32 %v2684, %v2913
        %2915 = vmatprep.mubr.bf16.mxu0 0
        %2916 = vmatmul.mubr.bf16.gmra.mxu0 %v2753
        %v2917 = vpop.f32.mrf.mxu0
        %v2918 = vadd.f32 %v2680, %v2917
        %v2919 = vpop.f32.mrf.mxu0
        %v2920 = vadd.f32 %v2684, %v2919
        %v2921 = vpop.f32.mrf.mxu0
        %v2922 = vadd.f32 %v2680, %v2921
        %v2923 = vpop.f32.mrf.mxu0
        %v2924 = vadd.f32 %v2684, %v2923
        %2925 = vmatprep.mubr.bf16.mxu0 0
        %2926 = vmatmul.mubr.bf16.gmra.mxu0 %v2754
        %v2927 = vpop.f32.mrf.mxu0
        %v2928 = vadd.f32 %v2680, %v2927
        %v2929 = vpop.f32.mrf.mxu0
        %v2930 = vadd.f32 %v2684, %v2929
        %v2931 = vpop.f32.mrf.mxu0
        %v2932 = vadd.f32 %v2680, %v2931
        %v2933 = vpop.f32.mrf.mxu0
        %v2934 = vadd.f32 %v2684, %v2933
        %2935 = vmatprep.mubr.bf16.mxu0 0
        %2936 = vmatmul.mubr.bf16.gmra.mxu0 %v2755
        %v2937 = vpop.f32.mrf.mxu0
        %v2938 = vadd.f32 %v2680, %v2937
        %v2939 = vpop.f32.mrf.mxu0
        %v2940 = vadd.f32 %v2684, %v2939
        %v2941 = vpop.f32.mrf.mxu0
        %v2942 = vadd.f32 %v2680, %v2941
        %v2943 = vpop.f32.mrf.mxu0
        %v2944 = vadd.f32 %v2684, %v2943
        %2945 = vmatprep.mubr.bf16.mxu0 0
        %2946 = vmatmul.mubr.bf16.gmra.mxu0 %v2756
        %v2947 = vpop.f32.mrf.mxu0
        %v2948 = vadd.f32 %v2680, %v2947
        %v2949 = vpop.f32.mrf.mxu0
        %v2950 = vadd.f32 %v2684, %v2949
        %v2951 = vpop.f32.mrf.mxu0
        %v2952 = vadd.f32 %v2680, %v2951
        %v2953 = vpop.f32.mrf.mxu0
        %v2954 = vadd.f32 %v2684, %v2953
        %2955 = vmatprep.mubr.bf16.mxu0 0
        %2956 = vmatmul.mubr.bf16.gmra.mxu0 %v2757
        %v2957 = vpop.f32.mrf.mxu0
        %v2958 = vadd.f32 %v2680, %v2957
        %v2959 = vpop.f32.mrf.mxu0
        %v2960 = vadd.f32 %v2684, %v2959
        %v2961 = vpop.f32.mrf.mxu0
        %v2962 = vadd.f32 %v2680, %v2961
        %v2963 = vpop.f32.mrf.mxu0
        %v2964 = vadd.f32 %v2684, %v2963
        %2965 = vmatprep.mubr.bf16.mxu0 0
        %2966 = vmatmul.mubr.bf16.gmra.mxu0 %v2758
        %v2967 = vpop.f32.mrf.mxu0
        %v2968 = vadd.f32 %v2680, %v2967
        %v2969 = vpop.f32.mrf.mxu0
        %v2970 = vadd.f32 %v2684, %v2969
        %v2971 = vpop.f32.mrf.mxu0
        %v2972 = vadd.f32 %v2680, %v2971
        %v2973 = vpop.f32.mrf.mxu0
        %v2974 = vadd.f32 %v2684, %v2973
        %2975 = vmatprep.mubr.bf16.mxu0 0
        %2976 = vmatmul.mubr.bf16.gmra.mxu0 %v2759
        %v2977 = vpop.f32.mrf.mxu0
        %v2978 = vadd.f32 %v2680, %v2977
        %v2979 = vpop.f32.mrf.mxu0
        %v2980 = vadd.f32 %v2684, %v2979
        %v2981 = vpop.f32.mrf.mxu0
        %v2982 = vadd.f32 %v2680, %v2981
        %v2983 = vpop.f32.mrf.mxu0
        %v2984 = vadd.f32 %v2684, %v2983
        %2985 = vmatprep.mubr.bf16.mxu0 0
        %2986 = vmatmul.mubr.bf16.gmra.mxu0 %v2760
        %v2987 = vpop.f32.mrf.mxu0
        %v2988 = vadd.f32 %v2680, %v2987
        %v2989 = vpop.f32.mrf.mxu0
        %v2990 = vadd.f32 %v2684, %v2989
        %v2991 = vpop.f32.mrf.mxu0
        %v2992 = vadd.f32 %v2680, %v2991
        %v2993 = vpop.f32.mrf.mxu0
        %v2994 = vadd.f32 %v2684, %v2993
        %2995 = vmatprep.mubr.bf16.mxu0 0
        %2996 = vmatmul.mubr.bf16.gmra.mxu0 %v2761
        %v2997 = vpop.f32.mrf.mxu0
        %v2998 = vadd.f32 %v2680, %v2997
        %v2999 = vpop.f32.mrf.mxu0
        %v3000 = vadd.f32 %v2684, %v2999
        %v3001 = vpop.f32.mrf.mxu0
        %v3002 = vadd.f32 %v2680, %v3001
        %v3003 = vpop.f32.mrf.mxu0
        %v3004 = vadd.f32 %v2684, %v3003
        %3005 = vmatprep.mubr.bf16.mxu0 0
        %3006 = vmatmul.mubr.bf16.gmra.mxu0 %v2762
        %v3007 = vpop.f32.mrf.mxu0
        %v3008 = vadd.f32 %v2680, %v3007
        %v3009 = vpop.f32.mrf.mxu0
        %v3010 = vadd.f32 %v2684, %v3009
        %v3011 = vpop.f32.mrf.mxu0
        %v3012 = vadd.f32 %v2680, %v3011
        %v3013 = vpop.f32.mrf.mxu0
        %v3014 = vadd.f32 %v2684, %v3013
        %3015 = vmatprep.mubr.bf16.mxu0 0
        %3016 = vmatmul.mubr.bf16.gmra.mxu0 %v2763
        %v3017 = vpop.f32.mrf.mxu0
        %v3018 = vadd.f32 %v2680, %v3017
        %v3019 = vpop.f32.mrf.mxu0
        %v3020 = vadd.f32 %v2684, %v3019
        %v3021 = vpop.f32.mrf.mxu0
        %v3022 = vadd.f32 %v2680, %v3021
        %v3023 = vpop.f32.mrf.mxu0
        %v3024 = vadd.f32 %v2684, %v3023
        %3025 = vmatprep.mubr.bf16.mxu0 0
        %3026 = vmatmul.mubr.bf16.gmra.mxu0 %v2764
        %v3027 = vpop.f32.mrf.mxu0
        %v3028 = vadd.f32 %v2680, %v3027
        %v3029 = vpop.f32.mrf.mxu0
        %v3030 = vadd.f32 %v2684, %v3029
        %v3031 = vpop.f32.mrf.mxu0
        %v3032 = vadd.f32 %v2680, %v3031
        %v3033 = vpop.f32.mrf.mxu0
        %v3034 = vadd.f32 %v2684, %v3033
        %3035 = vmatprep.mubr.bf16.mxu0 0
        %3036 = vmatmul.mubr.bf16.gmra.mxu0 %v2765
        %v3037 = vpop.f32.mrf.mxu0
        %v3038 = vadd.f32 %v2680, %v3037
        %v3039 = vpop.f32.mrf.mxu0
        %v3040 = vadd.f32 %v2684, %v3039
        %v3041 = vpop.f32.mrf.mxu0
        %v3042 = vadd.f32 %v2680, %v3041
        %v3043 = vpop.f32.mrf.mxu0
        %v3044 = vadd.f32 %v2684, %v3043
        %3045 = vmatprep.mubr.bf16.mxu0 0
        %3046 = vmatmul.mubr.bf16.gmra.mxu0 %v2766
        %v3047 = vpop.f32.mrf.mxu0
        %v3048 = vadd.f32 %v2680, %v3047
        %v3049 = vpop.f32.mrf.mxu0
        %v3050 = vadd.f32 %v2684, %v3049
        %v3051 = vpop.f32.mrf.mxu0
        %v3052 = vadd.f32 %v2680, %v3051
        %v3053 = vpop.f32.mrf.mxu0
        %v3054 = vadd.f32 %v2684, %v3053
        %3055 = vdwg.mxu0
        %v3056 = vmax.f32 %v2898, 0.0
        %v3057 = vmax.f32 %v2900, 0.0
        %v3058 = vmax.f32 %v2902, 0.0
        %v3059 = vmax.f32 %v2904, 0.0
        %v3060 = vmax.f32 %v2908, 0.0
        %v3061 = vmax.f32 %v2910, 0.0
        %v3062 = vmax.f32 %v2912, 0.0
        %v3063 = vmax.f32 %v2914, 0.0
        %v3064 = vmax.f32 %v2918, 0.0
        %v3065 = vmax.f32 %v2920, 0.0
        %v3066 = vmax.f32 %v2922, 0.0
        %v3067 = vmax.f32 %v2924, 0.0
        %v3068 = vmax.f32 %v2928, 0.0
        %v3069 = vmax.f32 %v2930, 0.0
        %v3070 = vmax.f32 %v2932, 0.0
        %v3071 = vmax.f32 %v2934, 0.0
        %v3072 = vmax.f32 %v2938, 0.0
        %v3073 = vmax.f32 %v2940, 0.0
        %v3074 = vmax.f32 %v2942, 0.0
        %v3075 = vmax.f32 %v2944, 0.0
        %v3076 = vmax.f32 %v2948, 0.0
        %v3077 = vmax.f32 %v2950, 0.0
        %v3078 = vmax.f32 %v2952, 0.0
        %v3079 = vmax.f32 %v2954, 0.0
        %v3080 = vmax.f32 %v2958, 0.0
        %v3081 = vmax.f32 %v2960, 0.0
        %v3082 = vmax.f32 %v2962, 0.0
        %v3083 = vmax.f32 %v2964, 0.0
        %v3084 = vmax.f32 %v2968, 0.0
        %v3085 = vmax.f32 %v2970, 0.0
        %v3086 = vmax.f32 %v2972, 0.0
        %v3087 = vmax.f32 %v2974, 0.0
        %v3088 = vmax.f32 %v2978, 0.0
        %v3089 = vmax.f32 %v2980, 0.0
        %v3090 = vmax.f32 %v2982, 0.0
        %v3091 = vmax.f32 %v2984, 0.0
        %v3092 = vmax.f32 %v2988, 0.0
        %v3093 = vmax.f32 %v2990, 0.0
        %v3094 = vmax.f32 %v2992, 0.0
        %v3095 = vmax.f32 %v2994, 0.0
        %v3096 = vmax.f32 %v2998, 0.0
        %v3097 = vmax.f32 %v3000, 0.0
        %v3098 = vmax.f32 %v3002, 0.0
        %v3099 = vmax.f32 %v3004, 0.0
        %v3100 = vmax.f32 %v3008, 0.0
        %v3101 = vmax.f32 %v3010, 0.0
        %v3102 = vmax.f32 %v3012, 0.0
        %v3103 = vmax.f32 %v3014, 0.0
        %v3104 = vmax.f32 %v3018, 0.0
        %v3105 = vmax.f32 %v3020, 0.0
        %v3106 = vmax.f32 %v3022, 0.0
        %v3107 = vmax.f32 %v3024, 0.0
        %v3108 = vmax.f32 %v3028, 0.0
        %v3109 = vmax.f32 %v3030, 0.0
        %v3110 = vmax.f32 %v3032, 0.0
        %v3111 = vmax.f32 %v3034, 0.0
        %v3112 = vmax.f32 %v3038, 0.0
        %v3113 = vmax.f32 %v3040, 0.0
        %v3114 = vmax.f32 %v3042, 0.0
        %v3115 = vmax.f32 %v3044, 0.0
        %v3116 = vmax.f32 %v3048, 0.0
        %v3117 = vmax.f32 %v3050, 0.0
        %v3118 = vmax.f32 %v3052, 0.0
        %v3119 = vmax.f32 %v3054, 0.0
        %v3120 = vpack.c.bf16 %v3058, %v3056
        %v3121 = vpack.c.bf16 %v3059, %v3057
        %v3122 = vpack.c.bf16 %v3062, %v3060
        %v3123 = vpack.c.bf16 %v3063, %v3061
        %v3124 = vpack.c.bf16 %v3066, %v3064
        %v3125 = vpack.c.bf16 %v3067, %v3065
        %v3126 = vpack.c.bf16 %v3070, %v3068
        %v3127 = vpack.c.bf16 %v3071, %v3069
        %v3128 = vpack.c.bf16 %v3074, %v3072
        %v3129 = vpack.c.bf16 %v3075, %v3073
        %v3130 = vpack.c.bf16 %v3078, %v3076
        %v3131 = vpack.c.bf16 %v3079, %v3077
        %v3132 = vpack.c.bf16 %v3082, %v3080
        %v3133 = vpack.c.bf16 %v3083, %v3081
        %v3134 = vpack.c.bf16 %v3086, %v3084
        %v3135 = vpack.c.bf16 %v3087, %v3085
        %v3136 = vpack.c.bf16 %v3090, %v3088
        %v3137 = vpack.c.bf16 %v3091, %v3089
        %v3138 = vpack.c.bf16 %v3094, %v3092
        %v3139 = vpack.c.bf16 %v3095, %v3093
        %v3140 = vpack.c.bf16 %v3098, %v3096
        %v3141 = vpack.c.bf16 %v3099, %v3097
        %v3142 = vpack.c.bf16 %v3102, %v3100
        %v3143 = vpack.c.bf16 %v3103, %v3101
        %v3144 = vpack.c.bf16 %v3106, %v3104
        %v3145 = vpack.c.bf16 %v3107, %v3105
        %v3146 = vpack.c.bf16 %v3110, %v3108
        %v3147 = vpack.c.bf16 %v3111, %v3109
        %v3148 = vpack.c.bf16 %v3114, %v3112
        %v3149 = vpack.c.bf16 %v3115, %v3113
        %v3150 = vpack.c.bf16 %v3118, %v3116
        %v3151 = vpack.c.bf16 %v3119, %v3117
        %s3152 = scalar_lea.vmem %s4, 256
        %v3153 = vld [vmem:[%s3152] sm:$0xf]
        %v3154 = vld [vmem:[%s3152 + $0x4] sm:$0xf]
        %v3155 = vld [vmem:[%s3152 + $0x8] sm:$0xf]
        %v3156 = vld [vmem:[%s3152 + $0xc] sm:$0xf]
        %v3157 = vld [vmem:[%s3152 + $0x10] sm:$0xf]
        %v3158 = vld [vmem:[%s3152 + $0x14] sm:$0xf]
        %v3159 = vld [vmem:[%s3152 + $0x18] sm:$0xf]
        %v3160 = vld [vmem:[%s3152 + $0x1c] sm:$0xf]
        %v3161 = vld [vmem:[%s3152 + $0x20] sm:$0xf]
        %v3162 = vld [vmem:[%s3152 + $0x24] sm:$0xf]
        %v3163 = vld [vmem:[%s3152 + $0x28] sm:$0xf]
        %v3164 = vld [vmem:[%s3152 + $0x2c] sm:$0xf]
        %v3165 = vld [vmem:[%s3152 + $0x30] sm:$0xf]
        %v3166 = vld [vmem:[%s3152 + $0x34] sm:$0xf]
        %v3167 = vld [vmem:[%s3152 + $0x38] sm:$0xf]
        %v3168 = vld [vmem:[%s3152 + $0x3c] sm:$0xf]
        %v3169 = vld [vmem:[%s3152 + $0x40] sm:$0xf]
        %v3170 = vld [vmem:[%s3152 + $0x44] sm:$0xf]
        %v3171 = vld [vmem:[%s3152 + $0x48] sm:$0xf]
        %v3172 = vld [vmem:[%s3152 + $0x4c] sm:$0xf]
        %v3173 = vld [vmem:[%s3152 + $0x50] sm:$0xf]
        %v3174 = vld [vmem:[%s3152 + $0x54] sm:$0xf]
        %v3175 = vld [vmem:[%s3152 + $0x58] sm:$0xf]
        %v3176 = vld [vmem:[%s3152 + $0x5c] sm:$0xf]
        %v3177 = vld [vmem:[%s3152 + $0x60] sm:$0xf]
        %v3178 = vld [vmem:[%s3152 + $0x64] sm:$0xf]
        %v3179 = vld [vmem:[%s3152 + $0x68] sm:$0xf]
        %v3180 = vld [vmem:[%s3152 + $0x6c] sm:$0xf]
        %v3181 = vld [vmem:[%s3152 + $0x70] sm:$0xf]
        %v3182 = vld [vmem:[%s3152 + $0x74] sm:$0xf]
        %v3183 = vld [vmem:[%s3152 + $0x78] sm:$0xf]
        %v3184 = vld [vmem:[%s3152 + $0x7c] sm:$0xf]
        %s3185 = scalar_lea.vmem %s5, 2
        %v3186 = vld [vmem:[%s3185] sm:$0x1]
        %v3188 = vlaneseq
        %v3189 = vshrl.u32 %v3188, 7
        %v3190 = vsub.s32 0, %v3189
        %v3191 = vrot.slane %v3186, %v3190
        %v3225 = vunpack.c.l.b16 %v3153
        %v3226 = vunpack.c.l.b16 %v3154
        %v3227 = vunpack.c.l.b16 %v3155
        %v3228 = vunpack.c.l.b16 %v3156
        %v3229 = vunpack.c.l.b16 %v3157
        %v3230 = vunpack.c.l.b16 %v3158
        %v3231 = vunpack.c.l.b16 %v3159
        %v3232 = vunpack.c.l.b16 %v3160
        %v3233 = vunpack.c.l.b16 %v3161
        %v3234 = vunpack.c.l.b16 %v3162
        %v3235 = vunpack.c.l.b16 %v3163
        %v3236 = vunpack.c.l.b16 %v3164
        %v3237 = vunpack.c.l.b16 %v3165
        %v3238 = vunpack.c.l.b16 %v3166
        %v3239 = vunpack.c.l.b16 %v3167
        %v3240 = vunpack.c.l.b16 %v3168
        %v3241 = vunpack.c.l.b16 %v3169
        %v3242 = vunpack.c.l.b16 %v3170
        %v3243 = vunpack.c.l.b16 %v3171
        %v3244 = vunpack.c.l.b16 %v3172
        %v3245 = vunpack.c.l.b16 %v3173
        %v3246 = vunpack.c.l.b16 %v3174
        %v3247 = vunpack.c.l.b16 %v3175
        %v3248 = vunpack.c.l.b16 %v3176
        %v3249 = vunpack.c.l.b16 %v3177
        %v3250 = vunpack.c.l.b16 %v3178
        %v3251 = vunpack.c.l.b16 %v3179
        %v3252 = vunpack.c.l.b16 %v3180
        %v3253 = vunpack.c.l.b16 %v3181
        %v3254 = vunpack.c.l.b16 %v3182
        %v3255 = vunpack.c.l.b16 %v3183
        %v3256 = vunpack.c.l.b16 %v3184
        %v3257 = vpack.c.b16 %v3226, %v3225
        %v3258 = vpack.c.b16 %v3228, %v3227
        %v3259 = vpack.c.b16 %v3230, %v3229
        %v3260 = vpack.c.b16 %v3232, %v3231
        %v3261 = vpack.c.b16 %v3234, %v3233
        %v3262 = vpack.c.b16 %v3236, %v3235
        %v3263 = vpack.c.b16 %v3238, %v3237
        %v3264 = vpack.c.b16 %v3240, %v3239
        %v3265 = vpack.c.b16 %v3242, %v3241
        %v3266 = vpack.c.b16 %v3244, %v3243
        %v3267 = vpack.c.b16 %v3246, %v3245
        %v3268 = vpack.c.b16 %v3248, %v3247
        %v3269 = vpack.c.b16 %v3250, %v3249
        %v3270 = vpack.c.b16 %v3252, %v3251
        %v3271 = vpack.c.b16 %v3254, %v3253
        %v3272 = vpack.c.b16 %v3256, %v3255
        %3289 = vmatprep.subr.bf16.mxu0 0
        %3290 = vmatpush1.bf16.msra.mxu0 %v3264
        %3291 = vmatprep.subr.bf16.mxu0 0
        %3292 = vmatpush1.bf16.msra.mxu0 %v3263
        %3293 = vmatprep.subr.bf16.mxu0 0
        %3294 = vmatpush1.bf16.msra.mxu0 %v3262
        %3295 = vmatprep.subr.bf16.mxu0 0
        %3296 = vmatpush1.bf16.msra.mxu0 %v3261
        %3297 = vmatprep.subr.bf16.mxu0 0
        %3298 = vmatpush1.bf16.msra.mxu0 %v3260
        %3299 = vmatprep.subr.bf16.mxu0 0
        %3300 = vmatpush1.bf16.msra.mxu0 %v3259
        %3301 = vmatprep.subr.bf16.mxu0 0
        %3302 = vmatpush1.bf16.msra.mxu0 %v3258
        %3303 = vmatprep.subr.bf16.mxu0 0
        %3304 = vmatpush1.bf16.msra.mxu0 %v3257
        %3305 = vmatprep.subr.bf16.mxu0 0
        %3306 = vmatpush2.bf16.msra.mxu0 %v3272
        %3307 = vmatprep.subr.bf16.mxu0 0
        %3308 = vmatpush2.bf16.msra.mxu0 %v3271
        %3309 = vmatprep.subr.bf16.mxu0 0
        %3310 = vmatpush2.bf16.msra.mxu0 %v3270
        %3311 = vmatprep.subr.bf16.mxu0 0
        %3312 = vmatpush2.bf16.msra.mxu0 %v3269
        %3313 = vmatprep.subr.bf16.mxu0 0
        %3314 = vmatpush2.bf16.msra.mxu0 %v3268
        %3315 = vmatprep.subr.bf16.mxu0 0
        %3316 = vmatpush2.bf16.msra.mxu0 %v3267
        %3317 = vmatprep.subr.bf16.mxu0 0
        %3318 = vmatpush2.bf16.msra.mxu0 %v3266
        %3319 = vmatprep.subr.bf16.mxu0 0
        %3320 = vmatpush2.bf16.msra.mxu0 %v3265
        %3321 = vmatprep.mubr.bf16.mxu0 %v3121
        %3322 = vmatmul.mubr.bf16.gmra.mxu0 %v3120
        %v3323 = vpop.f32.mrf.mxu0
        %v3324 = vadd.f32 %v3191, %v3323
        %v3325 = vpop.f32.mrf.mxu0
        %v3326 = vpop.f32.mrf.mxu0
        %v3327 = vadd.f32 %v3191, %v3326
        %v3328 = vpop.f32.mrf.mxu0
        %3329 = vmatprep.mubr.bf16.mxu0 %v3123
        %3330 = vmatmul.mubr.bf16.gmra.mxu0 %v3122
        %v3331 = vpop.f32.mrf.mxu0
        %v3332 = vadd.f32 %v3191, %v3331
        %v3333 = vpop.f32.mrf.mxu0
        %v3334 = vpop.f32.mrf.mxu0
        %v3335 = vadd.f32 %v3191, %v3334
        %v3336 = vpop.f32.mrf.mxu0
        %3337 = vmatprep.mubr.bf16.mxu0 %v3125
        %3338 = vmatmul.mubr.bf16.gmra.mxu0 %v3124
        %v3339 = vpop.f32.mrf.mxu0
        %v3340 = vadd.f32 %v3191, %v3339
        %v3341 = vpop.f32.mrf.mxu0
        %v3342 = vpop.f32.mrf.mxu0
        %v3343 = vadd.f32 %v3191, %v3342
        %v3344 = vpop.f32.mrf.mxu0
        %3345 = vmatprep.mubr.bf16.mxu0 %v3127
        %3346 = vmatmul.mubr.bf16.gmra.mxu0 %v3126
        %v3347 = vpop.f32.mrf.mxu0
        %v3348 = vadd.f32 %v3191, %v3347
        %v3349 = vpop.f32.mrf.mxu0
        %v3350 = vpop.f32.mrf.mxu0
        %v3351 = vadd.f32 %v3191, %v3350
        %v3352 = vpop.f32.mrf.mxu0
        %3353 = vmatprep.mubr.bf16.mxu0 %v3129
        %3354 = vmatmul.mubr.bf16.gmra.mxu0 %v3128
        %v3355 = vpop.f32.mrf.mxu0
        %v3356 = vadd.f32 %v3191, %v3355
        %v3357 = vpop.f32.mrf.mxu0
        %v3358 = vpop.f32.mrf.mxu0
        %v3359 = vadd.f32 %v3191, %v3358
        %v3360 = vpop.f32.mrf.mxu0
        %3361 = vmatprep.mubr.bf16.mxu0 %v3131
        %3362 = vmatmul.mubr.bf16.gmra.mxu0 %v3130
        %v3363 = vpop.f32.mrf.mxu0
        %v3364 = vadd.f32 %v3191, %v3363
        %v3365 = vpop.f32.mrf.mxu0
        %v3366 = vpop.f32.mrf.mxu0
        %v3367 = vadd.f32 %v3191, %v3366
        %v3368 = vpop.f32.mrf.mxu0
        %3369 = vmatprep.mubr.bf16.mxu0 %v3133
        %3370 = vmatmul.mubr.bf16.gmra.mxu0 %v3132
        %v3371 = vpop.f32.mrf.mxu0
        %v3372 = vadd.f32 %v3191, %v3371
        %v3373 = vpop.f32.mrf.mxu0
        %v3374 = vpop.f32.mrf.mxu0
        %v3375 = vadd.f32 %v3191, %v3374
        %v3376 = vpop.f32.mrf.mxu0
        %3377 = vmatprep.mubr.bf16.mxu0 %v3135
        %3378 = vmatmul.mubr.bf16.gmra.mxu0 %v3134
        %v3379 = vpop.f32.mrf.mxu0
        %v3380 = vadd.f32 %v3191, %v3379
        %v3381 = vpop.f32.mrf.mxu0
        %v3382 = vpop.f32.mrf.mxu0
        %v3383 = vadd.f32 %v3191, %v3382
        %v3384 = vpop.f32.mrf.mxu0
        %3385 = vmatprep.mubr.bf16.mxu0 %v3137
        %3386 = vmatmul.mubr.bf16.gmra.mxu0 %v3136
        %v3387 = vpop.f32.mrf.mxu0
        %v3388 = vadd.f32 %v3191, %v3387
        %v3389 = vpop.f32.mrf.mxu0
        %v3390 = vpop.f32.mrf.mxu0
        %v3391 = vadd.f32 %v3191, %v3390
        %v3392 = vpop.f32.mrf.mxu0
        %3393 = vmatprep.mubr.bf16.mxu0 %v3139
        %3394 = vmatmul.mubr.bf16.gmra.mxu0 %v3138
        %v3395 = vpop.f32.mrf.mxu0
        %v3396 = vadd.f32 %v3191, %v3395
        %v3397 = vpop.f32.mrf.mxu0
        %v3398 = vpop.f32.mrf.mxu0
        %v3399 = vadd.f32 %v3191, %v3398
        %v3400 = vpop.f32.mrf.mxu0
        %3401 = vmatprep.mubr.bf16.mxu0 %v3141
        %3402 = vmatmul.mubr.bf16.gmra.mxu0 %v3140
        %v3403 = vpop.f32.mrf.mxu0
        %v3404 = vadd.f32 %v3191, %v3403
        %v3405 = vpop.f32.mrf.mxu0
        %v3406 = vpop.f32.mrf.mxu0
        %v3407 = vadd.f32 %v3191, %v3406
        %v3408 = vpop.f32.mrf.mxu0
        %3409 = vmatprep.mubr.bf16.mxu0 %v3143
        %3410 = vmatmul.mubr.bf16.gmra.mxu0 %v3142
        %v3411 = vpop.f32.mrf.mxu0
        %v3412 = vadd.f32 %v3191, %v3411
        %v3413 = vpop.f32.mrf.mxu0
        %v3414 = vpop.f32.mrf.mxu0
        %v3415 = vadd.f32 %v3191, %v3414
        %v3416 = vpop.f32.mrf.mxu0
        %3417 = vmatprep.mubr.bf16.mxu0 %v3145
        %3418 = vmatmul.mubr.bf16.gmra.mxu0 %v3144
        %v3419 = vpop.f32.mrf.mxu0
        %v3420 = vadd.f32 %v3191, %v3419
        %v3421 = vpop.f32.mrf.mxu0
        %v3422 = vpop.f32.mrf.mxu0
        %v3423 = vadd.f32 %v3191, %v3422
        %v3424 = vpop.f32.mrf.mxu0
        %3425 = vmatprep.mubr.bf16.mxu0 %v3147
        %3426 = vmatmul.mubr.bf16.gmra.mxu0 %v3146
        %v3427 = vpop.f32.mrf.mxu0
        %v3428 = vadd.f32 %v3191, %v3427
        %v3429 = vpop.f32.mrf.mxu0
        %v3430 = vpop.f32.mrf.mxu0
        %v3431 = vadd.f32 %v3191, %v3430
        %v3432 = vpop.f32.mrf.mxu0
        %3433 = vmatprep.mubr.bf16.mxu0 %v3149
        %3434 = vmatmul.mubr.bf16.gmra.mxu0 %v3148
        %v3435 = vpop.f32.mrf.mxu0
        %v3436 = vadd.f32 %v3191, %v3435
        %v3437 = vpop.f32.mrf.mxu0
        %v3438 = vpop.f32.mrf.mxu0
        %v3439 = vadd.f32 %v3191, %v3438
        %v3440 = vpop.f32.mrf.mxu0
        %3441 = vmatprep.mubr.bf16.mxu0 %v3151
        %3442 = vmatmul.mubr.bf16.gmra.mxu0 %v3150
        %v3443 = vpop.f32.mrf.mxu0
        %v3444 = vadd.f32 %v3191, %v3443
        %v3445 = vpop.f32.mrf.mxu0
        %v3446 = vpop.f32.mrf.mxu0
        %v3447 = vadd.f32 %v3191, %v3446
        %v3448 = vpop.f32.mrf.mxu0
        %3449 = vdwg.mxu0
        %v3450 = vld [vmem:[%s282] sm:$0xff]
        %v3451 = vld [vmem:[%s282 + $0x8] sm:$0xff]
        %v3452 = vld [vmem:[%s282 + $0x10] sm:$0xff]
        %v3453 = vld [vmem:[%s282 + $0x18] sm:$0xff]
        %v3454 = vld [vmem:[%s282 + $0x20] sm:$0xff]
        %v3455 = vld [vmem:[%s282 + $0x28] sm:$0xff]
        %v3456 = vld [vmem:[%s282 + $0x30] sm:$0xff]
        %v3457 = vld [vmem:[%s282 + $0x38] sm:$0xff]
        %v3458 = vld [vmem:[%s282 + $0x40] sm:$0xff]
        %v3459 = vld [vmem:[%s282 + $0x48] sm:$0xff]
        %v3460 = vld [vmem:[%s282 + $0x50] sm:$0xff]
        %v3461 = vld [vmem:[%s282 + $0x58] sm:$0xff]
        %v3462 = vld [vmem:[%s282 + $0x60] sm:$0xff]
        %v3463 = vld [vmem:[%s282 + $0x68] sm:$0xff]
        %v3464 = vld [vmem:[%s282 + $0x70] sm:$0xff]
        %v3465 = vld [vmem:[%s282 + $0x78] sm:$0xff]
        %v3466 = vld [vmem:[%s282 + $0x80] sm:$0xff]
        %v3467 = vld [vmem:[%s282 + $0x88] sm:$0xff]
        %v3468 = vld [vmem:[%s282 + $0x90] sm:$0xff]
        %v3469 = vld [vmem:[%s282 + $0x98] sm:$0xff]
        %v3470 = vld [vmem:[%s282 + $0xa0] sm:$0xff]
        %v3471 = vld [vmem:[%s282 + $0xa8] sm:$0xff]
        %v3472 = vld [vmem:[%s282 + $0xb0] sm:$0xff]
        %v3473 = vld [vmem:[%s282 + $0xb8] sm:$0xff]
        %v3474 = vld [vmem:[%s282 + $0xc0] sm:$0xff]
        %v3475 = vld [vmem:[%s282 + $0xc8] sm:$0xff]
        %v3476 = vld [vmem:[%s282 + $0xd0] sm:$0xff]
        %v3477 = vld [vmem:[%s282 + $0xd8] sm:$0xff]
        %v3478 = vld [vmem:[%s282 + $0xe0] sm:$0xff]
        %v3479 = vld [vmem:[%s282 + $0xe8] sm:$0xff]
        %v3480 = vld [vmem:[%s282 + $0xf0] sm:$0xff]
        %v3481 = vld [vmem:[%s282 + $0xf8] sm:$0xff]
        %v3482 = vld [vmem:[%s276] sm:$0xff]
        %v3483 = vld [vmem:[%s276 + $0x8] sm:$0xff]
        %v3484 = vld [vmem:[%s276 + $0x10] sm:$0xff]
        %v3485 = vld [vmem:[%s276 + $0x18] sm:$0xff]
        %v3486 = vld [vmem:[%s276 + $0x20] sm:$0xff]
        %v3487 = vld [vmem:[%s276 + $0x28] sm:$0xff]
        %v3488 = vld [vmem:[%s276 + $0x30] sm:$0xff]
        %v3489 = vld [vmem:[%s276 + $0x38] sm:$0xff]
        %v3490 = vld [vmem:[%s276 + $0x40] sm:$0xff]
        %v3491 = vld [vmem:[%s276 + $0x48] sm:$0xff]
        %v3492 = vld [vmem:[%s276 + $0x50] sm:$0xff]
        %v3493 = vld [vmem:[%s276 + $0x58] sm:$0xff]
        %v3494 = vld [vmem:[%s276 + $0x60] sm:$0xff]
        %v3495 = vld [vmem:[%s276 + $0x68] sm:$0xff]
        %v3496 = vld [vmem:[%s276 + $0x70] sm:$0xff]
        %v3497 = vld [vmem:[%s276 + $0x78] sm:$0xff]
        %v3498 = vld [vmem:[%s276 + $0x80] sm:$0xff]
        %v3499 = vld [vmem:[%s276 + $0x88] sm:$0xff]
        %v3500 = vld [vmem:[%s276 + $0x90] sm:$0xff]
        %v3501 = vld [vmem:[%s276 + $0x98] sm:$0xff]
        %v3502 = vld [vmem:[%s276 + $0xa0] sm:$0xff]
        %v3503 = vld [vmem:[%s276 + $0xa8] sm:$0xff]
        %v3504 = vld [vmem:[%s276 + $0xb0] sm:$0xff]
        %v3505 = vld [vmem:[%s276 + $0xb8] sm:$0xff]
        %v3506 = vld [vmem:[%s276 + $0xc0] sm:$0xff]
        %v3507 = vld [vmem:[%s276 + $0xc8] sm:$0xff]
        %v3508 = vld [vmem:[%s276 + $0xd0] sm:$0xff]
        %v3509 = vld [vmem:[%s276 + $0xd8] sm:$0xff]
        %v3510 = vld [vmem:[%s276 + $0xe0] sm:$0xff]
        %v3511 = vld [vmem:[%s276 + $0xe8] sm:$0xff]
        %v3512 = vld [vmem:[%s276 + $0xf0] sm:$0xff]
        %v3513 = vld [vmem:[%s276 + $0xf8] sm:$0xff]
        %3515 = vset.pattern.permute.xlu0 2
        %3516 = vperm.xlu0 %3515, %v3482
        %v3517 = vpop.permute.xlu0 %3516
        %3520 = vset.pattern.permute.xlu0 2
        %3521 = vperm.xlu0 %3520, %v3483
        %v3522 = vpop.permute.xlu0 %3521
        %3525 = vset.pattern.permute.xlu0 2
        %3526 = vperm.xlu0 %3525, %v3484
        %v3527 = vpop.permute.xlu0 %3526
        %3530 = vset.pattern.permute.xlu0 2
        %3531 = vperm.xlu0 %3530, %v3485
        %v3532 = vpop.permute.xlu0 %3531
        %3535 = vset.pattern.permute.xlu0 2
        %3536 = vperm.xlu0 %3535, %v3486
        %v3537 = vpop.permute.xlu0 %3536
        %3540 = vset.pattern.permute.xlu0 2
        %3541 = vperm.xlu0 %3540, %v3487
        %v3542 = vpop.permute.xlu0 %3541
        %3545 = vset.pattern.permute.xlu0 2
        %3546 = vperm.xlu0 %3545, %v3488
        %v3547 = vpop.permute.xlu0 %3546
        %3550 = vset.pattern.permute.xlu0 2
        %3551 = vperm.xlu0 %3550, %v3489
        %v3552 = vpop.permute.xlu0 %3551
        %3555 = vset.pattern.permute.xlu0 2
        %3556 = vperm.xlu0 %3555, %v3490
        %v3557 = vpop.permute.xlu0 %3556
        %3560 = vset.pattern.permute.xlu0 2
        %3561 = vperm.xlu0 %3560, %v3491
        %v3562 = vpop.permute.xlu0 %3561
        %3565 = vset.pattern.permute.xlu0 2
        %3566 = vperm.xlu0 %3565, %v3492
        %v3567 = vpop.permute.xlu0 %3566
        %3570 = vset.pattern.permute.xlu0 2
        %3571 = vperm.xlu0 %3570, %v3493
        %v3572 = vpop.permute.xlu0 %3571
        %3575 = vset.pattern.permute.xlu0 2
        %3576 = vperm.xlu0 %3575, %v3494
        %v3577 = vpop.permute.xlu0 %3576
        %3580 = vset.pattern.permute.xlu0 2
        %3581 = vperm.xlu0 %3580, %v3495
        %v3582 = vpop.permute.xlu0 %3581
        %3585 = vset.pattern.permute.xlu0 2
        %3586 = vperm.xlu0 %3585, %v3496
        %v3587 = vpop.permute.xlu0 %3586
        %3590 = vset.pattern.permute.xlu0 2
        %3591 = vperm.xlu0 %3590, %v3497
        %v3592 = vpop.permute.xlu0 %3591
        %3595 = vset.pattern.permute.xlu0 2
        %3596 = vperm.xlu0 %3595, %v3498
        %v3597 = vpop.permute.xlu0 %3596
        %3600 = vset.pattern.permute.xlu0 2
        %3601 = vperm.xlu0 %3600, %v3499
        %v3602 = vpop.permute.xlu0 %3601
        %3605 = vset.pattern.permute.xlu0 2
        %3606 = vperm.xlu0 %3605, %v3500
        %v3607 = vpop.permute.xlu0 %3606
        %3610 = vset.pattern.permute.xlu0 2
        %3611 = vperm.xlu0 %3610, %v3501
        %v3612 = vpop.permute.xlu0 %3611
        %3615 = vset.pattern.permute.xlu0 2
        %3616 = vperm.xlu0 %3615, %v3502
        %v3617 = vpop.permute.xlu0 %3616
        %3620 = vset.pattern.permute.xlu0 2
        %3621 = vperm.xlu0 %3620, %v3503
        %v3622 = vpop.permute.xlu0 %3621
        %3625 = vset.pattern.permute.xlu0 2
        %3626 = vperm.xlu0 %3625, %v3504
        %v3627 = vpop.permute.xlu0 %3626
        %3630 = vset.pattern.permute.xlu0 2
        %3631 = vperm.xlu0 %3630, %v3505
        %v3632 = vpop.permute.xlu0 %3631
        %3635 = vset.pattern.permute.xlu0 2
        %3636 = vperm.xlu0 %3635, %v3506
        %v3637 = vpop.permute.xlu0 %3636
        %3640 = vset.pattern.permute.xlu0 2
        %3641 = vperm.xlu0 %3640, %v3507
        %v3642 = vpop.permute.xlu0 %3641
        %3645 = vset.pattern.permute.xlu0 2
        %3646 = vperm.xlu0 %3645, %v3508
        %v3647 = vpop.permute.xlu0 %3646
        %3650 = vset.pattern.permute.xlu0 2
        %3651 = vperm.xlu0 %3650, %v3509
        %v3652 = vpop.permute.xlu0 %3651
        %3655 = vset.pattern.permute.xlu0 2
        %3656 = vperm.xlu0 %3655, %v3510
        %v3657 = vpop.permute.xlu0 %3656
        %3660 = vset.pattern.permute.xlu0 2
        %3661 = vperm.xlu0 %3660, %v3511
        %v3662 = vpop.permute.xlu0 %3661
        %3665 = vset.pattern.permute.xlu0 2
        %3666 = vperm.xlu0 %3665, %v3512
        %v3667 = vpop.permute.xlu0 %3666
        %3670 = vset.pattern.permute.xlu0 2
        %3671 = vperm.xlu0 %3670, %v3513
        %v3672 = vpop.permute.xlu0 %3671
        %v3674 = vmul.f32 %v3517, %v3324
        %v3675 = vmul.f32 %v3522, %v3327
        %v3676 = vmul.f32 %v3527, %v3332
        %v3677 = vmul.f32 %v3532, %v3335
        %v3678 = vmul.f32 %v3537, %v3340
        %v3679 = vmul.f32 %v3542, %v3343
        %v3680 = vmul.f32 %v3547, %v3348
        %v3681 = vmul.f32 %v3552, %v3351
        %v3682 = vmul.f32 %v3557, %v3356
        %v3683 = vmul.f32 %v3562, %v3359
        %v3684 = vmul.f32 %v3567, %v3364
        %v3685 = vmul.f32 %v3572, %v3367
        %v3686 = vmul.f32 %v3577, %v3372
        %v3687 = vmul.f32 %v3582, %v3375
        %v3688 = vmul.f32 %v3587, %v3380
        %v3689 = vmul.f32 %v3592, %v3383
        %v3690 = vmul.f32 %v3597, %v3388
        %v3691 = vmul.f32 %v3602, %v3391
        %v3692 = vmul.f32 %v3607, %v3396
        %v3693 = vmul.f32 %v3612, %v3399
        %v3694 = vmul.f32 %v3617, %v3404
        %v3695 = vmul.f32 %v3622, %v3407
        %v3696 = vmul.f32 %v3627, %v3412
        %v3697 = vmul.f32 %v3632, %v3415
        %v3698 = vmul.f32 %v3637, %v3420
        %v3699 = vmul.f32 %v3642, %v3423
        %v3700 = vmul.f32 %v3647, %v3428
        %v3701 = vmul.f32 %v3652, %v3431
        %v3702 = vmul.f32 %v3657, %v3436
        %v3703 = vmul.f32 %v3662, %v3439
        %v3704 = vmul.f32 %v3667, %v3444
        %v3705 = vmul.f32 %v3672, %v3447
        %v3706 = vadd.f32 %v3450, %v3674
        %v3707 = vadd.f32 %v3451, %v3675
        %v3708 = vadd.f32 %v3452, %v3676
        %v3709 = vadd.f32 %v3453, %v3677
        %v3710 = vadd.f32 %v3454, %v3678
        %v3711 = vadd.f32 %v3455, %v3679
        %v3712 = vadd.f32 %v3456, %v3680
        %v3713 = vadd.f32 %v3457, %v3681
        %v3714 = vadd.f32 %v3458, %v3682
        %v3715 = vadd.f32 %v3459, %v3683
        %v3716 = vadd.f32 %v3460, %v3684
        %v3717 = vadd.f32 %v3461, %v3685
        %v3718 = vadd.f32 %v3462, %v3686
        %v3719 = vadd.f32 %v3463, %v3687
        %v3720 = vadd.f32 %v3464, %v3688
        %v3721 = vadd.f32 %v3465, %v3689
        %v3722 = vadd.f32 %v3466, %v3690
        %v3723 = vadd.f32 %v3467, %v3691
        %v3724 = vadd.f32 %v3468, %v3692
        %v3725 = vadd.f32 %v3469, %v3693
        %v3726 = vadd.f32 %v3470, %v3694
        %v3727 = vadd.f32 %v3471, %v3695
        %v3728 = vadd.f32 %v3472, %v3696
        %v3729 = vadd.f32 %v3473, %v3697
        %v3730 = vadd.f32 %v3474, %v3698
        %v3731 = vadd.f32 %v3475, %v3699
        %v3732 = vadd.f32 %v3476, %v3700
        %v3733 = vadd.f32 %v3477, %v3701
        %v3734 = vadd.f32 %v3478, %v3702
        %v3735 = vadd.f32 %v3479, %v3703
        %v3736 = vadd.f32 %v3480, %v3704
        %v3737 = vadd.f32 %v3481, %v3705
        %3738 = vst [vmem:[%s282] sm:$0xff] %v3706
        %3739 = vst [vmem:[%s282 + $0x8] sm:$0xff] %v3707
        %3740 = vst [vmem:[%s282 + $0x10] sm:$0xff] %v3708
        %3741 = vst [vmem:[%s282 + $0x18] sm:$0xff] %v3709
        %3742 = vst [vmem:[%s282 + $0x20] sm:$0xff] %v3710
        %3743 = vst [vmem:[%s282 + $0x28] sm:$0xff] %v3711
        %3744 = vst [vmem:[%s282 + $0x30] sm:$0xff] %v3712
        %3745 = vst [vmem:[%s282 + $0x38] sm:$0xff] %v3713
        %3746 = vst [vmem:[%s282 + $0x40] sm:$0xff] %v3714
        %3747 = vst [vmem:[%s282 + $0x48] sm:$0xff] %v3715
        %3748 = vst [vmem:[%s282 + $0x50] sm:$0xff] %v3716
        %3749 = vst [vmem:[%s282 + $0x58] sm:$0xff] %v3717
        %3750 = vst [vmem:[%s282 + $0x60] sm:$0xff] %v3718
        %3751 = vst [vmem:[%s282 + $0x68] sm:$0xff] %v3719
        %3752 = vst [vmem:[%s282 + $0x70] sm:$0xff] %v3720
        %3753 = vst [vmem:[%s282 + $0x78] sm:$0xff] %v3721
        %3754 = vst [vmem:[%s282 + $0x80] sm:$0xff] %v3722
        %3755 = vst [vmem:[%s282 + $0x88] sm:$0xff] %v3723
        %3756 = vst [vmem:[%s282 + $0x90] sm:$0xff] %v3724
        %3757 = vst [vmem:[%s282 + $0x98] sm:$0xff] %v3725
        %3758 = vst [vmem:[%s282 + $0xa0] sm:$0xff] %v3726
        %3759 = vst [vmem:[%s282 + $0xa8] sm:$0xff] %v3727
        %3760 = vst [vmem:[%s282 + $0xb0] sm:$0xff] %v3728
        %3761 = vst [vmem:[%s282 + $0xb8] sm:$0xff] %v3729
        %3762 = vst [vmem:[%s282 + $0xc0] sm:$0xff] %v3730
        %3763 = vst [vmem:[%s282 + $0xc8] sm:$0xff] %v3731
        %3764 = vst [vmem:[%s282 + $0xd0] sm:$0xff] %v3732
        %3765 = vst [vmem:[%s282 + $0xd8] sm:$0xff] %v3733
        %3766 = vst [vmem:[%s282 + $0xe0] sm:$0xff] %v3734
        %3767 = vst [vmem:[%s282 + $0xe8] sm:$0xff] %v3735
        %3768 = vst [vmem:[%s282 + $0xf0] sm:$0xff] %v3736
        %3769 = vst [vmem:[%s282 + $0xf8] sm:$0xff] %v3737
      $region56: #{simple_moe_layer.1} parent=43 // pred_fallthru
        _
      %p3770 = scmp.le.s32.totalorder %s286, 3
      %p3771 = scmp.ge.s32.totalorder %s288, 3
      %p3772 = pnand %p3770, %p3771
      %p3773 = pneg %p3772
      // Predicated region
      $region57: #{simple_moe_layer.1} parent=43 // pred_check
        _
      $region58: #{simple_moe_layer.1} parent=43 // pred_check_branch
        %3775 = sbr.rel (%p3772) target = $region60
      $region59: #{simple_moe_layer.1} parent=43 // pred_region
        %v3776 = vld [vmem:[%s270] sm:$0xf]
        %v3777 = vld [vmem:[%s270 + $0x4] sm:$0xf]
        %v3778 = vld [vmem:[%s270 + $0x8] sm:$0xf]
        %v3779 = vld [vmem:[%s270 + $0xc] sm:$0xf]
        %v3780 = vld [vmem:[%s270 + $0x10] sm:$0xf]
        %v3781 = vld [vmem:[%s270 + $0x14] sm:$0xf]
        %v3782 = vld [vmem:[%s270 + $0x18] sm:$0xf]
        %v3783 = vld [vmem:[%s270 + $0x1c] sm:$0xf]
        %v3784 = vld [vmem:[%s270 + $0x20] sm:$0xf]
        %v3785 = vld [vmem:[%s270 + $0x24] sm:$0xf]
        %v3786 = vld [vmem:[%s270 + $0x28] sm:$0xf]
        %v3787 = vld [vmem:[%s270 + $0x2c] sm:$0xf]
        %v3788 = vld [vmem:[%s270 + $0x30] sm:$0xf]
        %v3789 = vld [vmem:[%s270 + $0x34] sm:$0xf]
        %v3790 = vld [vmem:[%s270 + $0x38] sm:$0xf]
        %v3791 = vld [vmem:[%s270 + $0x3c] sm:$0xf]
        %v3792 = vld [vmem:[%s270 + $0x40] sm:$0xf]
        %v3793 = vld [vmem:[%s270 + $0x44] sm:$0xf]
        %v3794 = vld [vmem:[%s270 + $0x48] sm:$0xf]
        %v3795 = vld [vmem:[%s270 + $0x4c] sm:$0xf]
        %v3796 = vld [vmem:[%s270 + $0x50] sm:$0xf]
        %v3797 = vld [vmem:[%s270 + $0x54] sm:$0xf]
        %v3798 = vld [vmem:[%s270 + $0x58] sm:$0xf]
        %v3799 = vld [vmem:[%s270 + $0x5c] sm:$0xf]
        %v3800 = vld [vmem:[%s270 + $0x60] sm:$0xf]
        %v3801 = vld [vmem:[%s270 + $0x64] sm:$0xf]
        %v3802 = vld [vmem:[%s270 + $0x68] sm:$0xf]
        %v3803 = vld [vmem:[%s270 + $0x6c] sm:$0xf]
        %v3804 = vld [vmem:[%s270 + $0x70] sm:$0xf]
        %v3805 = vld [vmem:[%s270 + $0x74] sm:$0xf]
        %v3806 = vld [vmem:[%s270 + $0x78] sm:$0xf]
        %v3807 = vld [vmem:[%s270 + $0x7c] sm:$0xf]
        %s3808 = scalar_lea.vmem %s2, 384
        %v3809 = vld [vmem:[%s3808] sm:$0xff]
        %v3810 = vld [vmem:[%s3808 + $0x8] sm:$0xff]
        %v3811 = vld [vmem:[%s3808 + $0x10] sm:$0xff]
        %v3812 = vld [vmem:[%s3808 + $0x18] sm:$0xff]
        %v3813 = vld [vmem:[%s3808 + $0x20] sm:$0xff]
        %v3814 = vld [vmem:[%s3808 + $0x28] sm:$0xff]
        %v3815 = vld [vmem:[%s3808 + $0x30] sm:$0xff]
        %v3816 = vld [vmem:[%s3808 + $0x38] sm:$0xff]
        %v3817 = vld [vmem:[%s3808 + $0x40] sm:$0xff]
        %v3818 = vld [vmem:[%s3808 + $0x48] sm:$0xff]
        %v3819 = vld [vmem:[%s3808 + $0x50] sm:$0xff]
        %v3820 = vld [vmem:[%s3808 + $0x58] sm:$0xff]
        %v3821 = vld [vmem:[%s3808 + $0x60] sm:$0xff]
        %v3822 = vld [vmem:[%s3808 + $0x68] sm:$0xff]
        %v3823 = vld [vmem:[%s3808 + $0x70] sm:$0xff]
        %v3824 = vld [vmem:[%s3808 + $0x78] sm:$0xff]
        %s3825 = scalar_lea.vmem %s3, 6
        %v3826 = vld [vmem:[%s3825] sm:$0x3]
        %v3828 = vlaneseq
        %v3829 = vshrl.u32 %v3828, 7
        %v3830 = vsub.s32 0, %v3829
        %v3831 = vrot.slane %v3826, %v3830
        %v3832 = vlaneseq
        %v3833 = vshrl.u32 %v3832, 7
        %v3834 = vsub.s32 1, %v3833
        %v3835 = vrot.slane %v3826, %v3834
        %v3870 = vunpack.c.l.b16 %v3776
        %v3871 = vunpack.c.l.b16 %v3777
        %v3872 = vunpack.c.l.b16 %v3778
        %v3873 = vunpack.c.l.b16 %v3779
        %v3874 = vunpack.c.l.b16 %v3780
        %v3875 = vunpack.c.l.b16 %v3781
        %v3876 = vunpack.c.l.b16 %v3782
        %v3877 = vunpack.c.l.b16 %v3783
        %v3878 = vunpack.c.l.b16 %v3784
        %v3879 = vunpack.c.l.b16 %v3785
        %v3880 = vunpack.c.l.b16 %v3786
        %v3881 = vunpack.c.l.b16 %v3787
        %v3882 = vunpack.c.l.b16 %v3788
        %v3883 = vunpack.c.l.b16 %v3789
        %v3884 = vunpack.c.l.b16 %v3790
        %v3885 = vunpack.c.l.b16 %v3791
        %v3886 = vunpack.c.l.b16 %v3792
        %v3887 = vunpack.c.l.b16 %v3793
        %v3888 = vunpack.c.l.b16 %v3794
        %v3889 = vunpack.c.l.b16 %v3795
        %v3890 = vunpack.c.l.b16 %v3796
        %v3891 = vunpack.c.l.b16 %v3797
        %v3892 = vunpack.c.l.b16 %v3798
        %v3893 = vunpack.c.l.b16 %v3799
        %v3894 = vunpack.c.l.b16 %v3800
        %v3895 = vunpack.c.l.b16 %v3801
        %v3896 = vunpack.c.l.b16 %v3802
        %v3897 = vunpack.c.l.b16 %v3803
        %v3898 = vunpack.c.l.b16 %v3804
        %v3899 = vunpack.c.l.b16 %v3805
        %v3900 = vunpack.c.l.b16 %v3806
        %v3901 = vunpack.c.l.b16 %v3807
        %v3902 = vpack.c.b16 %v3871, %v3870
        %v3903 = vpack.c.b16 %v3873, %v3872
        %v3904 = vpack.c.b16 %v3875, %v3874
        %v3905 = vpack.c.b16 %v3877, %v3876
        %v3906 = vpack.c.b16 %v3879, %v3878
        %v3907 = vpack.c.b16 %v3881, %v3880
        %v3908 = vpack.c.b16 %v3883, %v3882
        %v3909 = vpack.c.b16 %v3885, %v3884
        %v3910 = vpack.c.b16 %v3887, %v3886
        %v3911 = vpack.c.b16 %v3889, %v3888
        %v3912 = vpack.c.b16 %v3891, %v3890
        %v3913 = vpack.c.b16 %v3893, %v3892
        %v3914 = vpack.c.b16 %v3895, %v3894
        %v3915 = vpack.c.b16 %v3897, %v3896
        %v3916 = vpack.c.b16 %v3899, %v3898
        %v3917 = vpack.c.b16 %v3901, %v3900
        %v3950 = vunpack.c.l.b16 %v3809
        %v3951 = vunpack.c.h.b16 %v3809
        %v3952 = vunpack.c.l.b16 %v3810
        %v3953 = vunpack.c.h.b16 %v3810
        %v3954 = vunpack.c.l.b16 %v3811
        %v3955 = vunpack.c.h.b16 %v3811
        %v3956 = vunpack.c.l.b16 %v3812
        %v3957 = vunpack.c.h.b16 %v3812
        %v3958 = vunpack.c.l.b16 %v3813
        %v3959 = vunpack.c.h.b16 %v3813
        %v3960 = vunpack.c.l.b16 %v3814
        %v3961 = vunpack.c.h.b16 %v3814
        %v3962 = vunpack.c.l.b16 %v3815
        %v3963 = vunpack.c.h.b16 %v3815
        %v3964 = vunpack.c.l.b16 %v3816
        %v3965 = vunpack.c.h.b16 %v3816
        %v3966 = vunpack.c.l.b16 %v3817
        %v3967 = vunpack.c.h.b16 %v3817
        %v3968 = vunpack.c.l.b16 %v3818
        %v3969 = vunpack.c.h.b16 %v3818
        %v3970 = vunpack.c.l.b16 %v3819
        %v3971 = vunpack.c.h.b16 %v3819
        %v3972 = vunpack.c.l.b16 %v3820
        %v3973 = vunpack.c.h.b16 %v3820
        %v3974 = vunpack.c.l.b16 %v3821
        %v3975 = vunpack.c.h.b16 %v3821
        %v3976 = vunpack.c.l.b16 %v3822
        %v3977 = vunpack.c.h.b16 %v3822
        %v3978 = vunpack.c.l.b16 %v3823
        %v3979 = vunpack.c.h.b16 %v3823
        %v3980 = vunpack.c.l.b16 %v3824
        %v3981 = vunpack.c.h.b16 %v3824
        %v3982 = vpack.c.b16 %v3952, %v3950
        %v3983 = vpack.c.b16 %v3953, %v3951
        %v3984 = vpack.c.b16 %v3956, %v3954
        %v3985 = vpack.c.b16 %v3957, %v3955
        %v3986 = vpack.c.b16 %v3960, %v3958
        %v3987 = vpack.c.b16 %v3961, %v3959
        %v3988 = vpack.c.b16 %v3964, %v3962
        %v3989 = vpack.c.b16 %v3965, %v3963
        %v3990 = vpack.c.b16 %v3968, %v3966
        %v3991 = vpack.c.b16 %v3969, %v3967
        %v3992 = vpack.c.b16 %v3972, %v3970
        %v3993 = vpack.c.b16 %v3973, %v3971
        %v3994 = vpack.c.b16 %v3976, %v3974
        %v3995 = vpack.c.b16 %v3977, %v3975
        %v3996 = vpack.c.b16 %v3980, %v3978
        %v3997 = vpack.c.b16 %v3981, %v3979
        %4014 = vmatprep.subr.bf16.mxu0 %v3997
        %4015 = vmatpush1.bf16.msra.mxu0 %v3996
        %4016 = vmatprep.subr.bf16.mxu0 %v3995
        %4017 = vmatpush1.bf16.msra.mxu0 %v3994
        %4018 = vmatprep.subr.bf16.mxu0 %v3993
        %4019 = vmatpush1.bf16.msra.mxu0 %v3992
        %4020 = vmatprep.subr.bf16.mxu0 %v3991
        %4021 = vmatpush1.bf16.msra.mxu0 %v3990
        %4022 = vmatprep.subr.bf16.mxu0 %v3989
        %4023 = vmatpush1.bf16.msra.mxu0 %v3988
        %4024 = vmatprep.subr.bf16.mxu0 %v3987
        %4025 = vmatpush1.bf16.msra.mxu0 %v3986
        %4026 = vmatprep.subr.bf16.mxu0 %v3985
        %4027 = vmatpush1.bf16.msra.mxu0 %v3984
        %4028 = vmatprep.subr.bf16.mxu0 %v3983
        %4029 = vmatpush1.bf16.msra.mxu0 %v3982
        %4030 = vmatprep.subr.bf16.mxu0 0
        %4031 = vmatpush2.bf16.msra.mxu0 0
        %4032 = vmatprep.subr.bf16.mxu0 0
        %4033 = vmatpush2.bf16.msra.mxu0 0
        %4034 = vmatprep.subr.bf16.mxu0 0
        %4035 = vmatpush2.bf16.msra.mxu0 0
        %4036 = vmatprep.subr.bf16.mxu0 0
        %4037 = vmatpush2.bf16.msra.mxu0 0
        %4038 = vmatprep.subr.bf16.mxu0 0
        %4039 = vmatpush2.bf16.msra.mxu0 0
        %4040 = vmatprep.subr.bf16.mxu0 0
        %4041 = vmatpush2.bf16.msra.mxu0 0
        %4042 = vmatprep.subr.bf16.mxu0 0
        %4043 = vmatpush2.bf16.msra.mxu0 0
        %4044 = vmatprep.subr.bf16.mxu0 0
        %4045 = vmatpush2.bf16.msra.mxu0 0
        %4046 = vmatprep.mubr.bf16.mxu0 0
        %4047 = vmatmul.mubr.bf16.gmra.mxu0 %v3902
        %v4048 = vpop.f32.mrf.mxu0
        %v4049 = vadd.f32 %v3831, %v4048
        %v4050 = vpop.f32.mrf.mxu0
        %v4051 = vadd.f32 %v3835, %v4050
        %v4052 = vpop.f32.mrf.mxu0
        %v4053 = vadd.f32 %v3831, %v4052
        %v4054 = vpop.f32.mrf.mxu0
        %v4055 = vadd.f32 %v3835, %v4054
        %4056 = vmatprep.mubr.bf16.mxu0 0
        %4057 = vmatmul.mubr.bf16.gmra.mxu0 %v3903
        %v4058 = vpop.f32.mrf.mxu0
        %v4059 = vadd.f32 %v3831, %v4058
        %v4060 = vpop.f32.mrf.mxu0
        %v4061 = vadd.f32 %v3835, %v4060
        %v4062 = vpop.f32.mrf.mxu0
        %v4063 = vadd.f32 %v3831, %v4062
        %v4064 = vpop.f32.mrf.mxu0
        %v4065 = vadd.f32 %v3835, %v4064
        %4066 = vmatprep.mubr.bf16.mxu0 0
        %4067 = vmatmul.mubr.bf16.gmra.mxu0 %v3904
        %v4068 = vpop.f32.mrf.mxu0
        %v4069 = vadd.f32 %v3831, %v4068
        %v4070 = vpop.f32.mrf.mxu0
        %v4071 = vadd.f32 %v3835, %v4070
        %v4072 = vpop.f32.mrf.mxu0
        %v4073 = vadd.f32 %v3831, %v4072
        %v4074 = vpop.f32.mrf.mxu0
        %v4075 = vadd.f32 %v3835, %v4074
        %4076 = vmatprep.mubr.bf16.mxu0 0
        %4077 = vmatmul.mubr.bf16.gmra.mxu0 %v3905
        %v4078 = vpop.f32.mrf.mxu0
        %v4079 = vadd.f32 %v3831, %v4078
        %v4080 = vpop.f32.mrf.mxu0
        %v4081 = vadd.f32 %v3835, %v4080
        %v4082 = vpop.f32.mrf.mxu0
        %v4083 = vadd.f32 %v3831, %v4082
        %v4084 = vpop.f32.mrf.mxu0
        %v4085 = vadd.f32 %v3835, %v4084
        %4086 = vmatprep.mubr.bf16.mxu0 0
        %4087 = vmatmul.mubr.bf16.gmra.mxu0 %v3906
        %v4088 = vpop.f32.mrf.mxu0
        %v4089 = vadd.f32 %v3831, %v4088
        %v4090 = vpop.f32.mrf.mxu0
        %v4091 = vadd.f32 %v3835, %v4090
        %v4092 = vpop.f32.mrf.mxu0
        %v4093 = vadd.f32 %v3831, %v4092
        %v4094 = vpop.f32.mrf.mxu0
        %v4095 = vadd.f32 %v3835, %v4094
        %4096 = vmatprep.mubr.bf16.mxu0 0
        %4097 = vmatmul.mubr.bf16.gmra.mxu0 %v3907
        %v4098 = vpop.f32.mrf.mxu0
        %v4099 = vadd.f32 %v3831, %v4098
        %v4100 = vpop.f32.mrf.mxu0
        %v4101 = vadd.f32 %v3835, %v4100
        %v4102 = vpop.f32.mrf.mxu0
        %v4103 = vadd.f32 %v3831, %v4102
        %v4104 = vpop.f32.mrf.mxu0
        %v4105 = vadd.f32 %v3835, %v4104
        %4106 = vmatprep.mubr.bf16.mxu0 0
        %4107 = vmatmul.mubr.bf16.gmra.mxu0 %v3908
        %v4108 = vpop.f32.mrf.mxu0
        %v4109 = vadd.f32 %v3831, %v4108
        %v4110 = vpop.f32.mrf.mxu0
        %v4111 = vadd.f32 %v3835, %v4110
        %v4112 = vpop.f32.mrf.mxu0
        %v4113 = vadd.f32 %v3831, %v4112
        %v4114 = vpop.f32.mrf.mxu0
        %v4115 = vadd.f32 %v3835, %v4114
        %4116 = vmatprep.mubr.bf16.mxu0 0
        %4117 = vmatmul.mubr.bf16.gmra.mxu0 %v3909
        %v4118 = vpop.f32.mrf.mxu0
        %v4119 = vadd.f32 %v3831, %v4118
        %v4120 = vpop.f32.mrf.mxu0
        %v4121 = vadd.f32 %v3835, %v4120
        %v4122 = vpop.f32.mrf.mxu0
        %v4123 = vadd.f32 %v3831, %v4122
        %v4124 = vpop.f32.mrf.mxu0
        %v4125 = vadd.f32 %v3835, %v4124
        %4126 = vmatprep.mubr.bf16.mxu0 0
        %4127 = vmatmul.mubr.bf16.gmra.mxu0 %v3910
        %v4128 = vpop.f32.mrf.mxu0
        %v4129 = vadd.f32 %v3831, %v4128
        %v4130 = vpop.f32.mrf.mxu0
        %v4131 = vadd.f32 %v3835, %v4130
        %v4132 = vpop.f32.mrf.mxu0
        %v4133 = vadd.f32 %v3831, %v4132
        %v4134 = vpop.f32.mrf.mxu0
        %v4135 = vadd.f32 %v3835, %v4134
        %4136 = vmatprep.mubr.bf16.mxu0 0
        %4137 = vmatmul.mubr.bf16.gmra.mxu0 %v3911
        %v4138 = vpop.f32.mrf.mxu0
        %v4139 = vadd.f32 %v3831, %v4138
        %v4140 = vpop.f32.mrf.mxu0
        %v4141 = vadd.f32 %v3835, %v4140
        %v4142 = vpop.f32.mrf.mxu0
        %v4143 = vadd.f32 %v3831, %v4142
        %v4144 = vpop.f32.mrf.mxu0
        %v4145 = vadd.f32 %v3835, %v4144
        %4146 = vmatprep.mubr.bf16.mxu0 0
        %4147 = vmatmul.mubr.bf16.gmra.mxu0 %v3912
        %v4148 = vpop.f32.mrf.mxu0
        %v4149 = vadd.f32 %v3831, %v4148
        %v4150 = vpop.f32.mrf.mxu0
        %v4151 = vadd.f32 %v3835, %v4150
        %v4152 = vpop.f32.mrf.mxu0
        %v4153 = vadd.f32 %v3831, %v4152
        %v4154 = vpop.f32.mrf.mxu0
        %v4155 = vadd.f32 %v3835, %v4154
        %4156 = vmatprep.mubr.bf16.mxu0 0
        %4157 = vmatmul.mubr.bf16.gmra.mxu0 %v3913
        %v4158 = vpop.f32.mrf.mxu0
        %v4159 = vadd.f32 %v3831, %v4158
        %v4160 = vpop.f32.mrf.mxu0
        %v4161 = vadd.f32 %v3835, %v4160
        %v4162 = vpop.f32.mrf.mxu0
        %v4163 = vadd.f32 %v3831, %v4162
        %v4164 = vpop.f32.mrf.mxu0
        %v4165 = vadd.f32 %v3835, %v4164
        %4166 = vmatprep.mubr.bf16.mxu0 0
        %4167 = vmatmul.mubr.bf16.gmra.mxu0 %v3914
        %v4168 = vpop.f32.mrf.mxu0
        %v4169 = vadd.f32 %v3831, %v4168
        %v4170 = vpop.f32.mrf.mxu0
        %v4171 = vadd.f32 %v3835, %v4170
        %v4172 = vpop.f32.mrf.mxu0
        %v4173 = vadd.f32 %v3831, %v4172
        %v4174 = vpop.f32.mrf.mxu0
        %v4175 = vadd.f32 %v3835, %v4174
        %4176 = vmatprep.mubr.bf16.mxu0 0
        %4177 = vmatmul.mubr.bf16.gmra.mxu0 %v3915
        %v4178 = vpop.f32.mrf.mxu0
        %v4179 = vadd.f32 %v3831, %v4178
        %v4180 = vpop.f32.mrf.mxu0
        %v4181 = vadd.f32 %v3835, %v4180
        %v4182 = vpop.f32.mrf.mxu0
        %v4183 = vadd.f32 %v3831, %v4182
        %v4184 = vpop.f32.mrf.mxu0
        %v4185 = vadd.f32 %v3835, %v4184
        %4186 = vmatprep.mubr.bf16.mxu0 0
        %4187 = vmatmul.mubr.bf16.gmra.mxu0 %v3916
        %v4188 = vpop.f32.mrf.mxu0
        %v4189 = vadd.f32 %v3831, %v4188
        %v4190 = vpop.f32.mrf.mxu0
        %v4191 = vadd.f32 %v3835, %v4190
        %v4192 = vpop.f32.mrf.mxu0
        %v4193 = vadd.f32 %v3831, %v4192
        %v4194 = vpop.f32.mrf.mxu0
        %v4195 = vadd.f32 %v3835, %v4194
        %4196 = vmatprep.mubr.bf16.mxu0 0
        %4197 = vmatmul.mubr.bf16.gmra.mxu0 %v3917
        %v4198 = vpop.f32.mrf.mxu0
        %v4199 = vadd.f32 %v3831, %v4198
        %v4200 = vpop.f32.mrf.mxu0
        %v4201 = vadd.f32 %v3835, %v4200
        %v4202 = vpop.f32.mrf.mxu0
        %v4203 = vadd.f32 %v3831, %v4202
        %v4204 = vpop.f32.mrf.mxu0
        %v4205 = vadd.f32 %v3835, %v4204
        %4206 = vdwg.mxu0
        %v4207 = vmax.f32 %v4049, 0.0
        %v4208 = vmax.f32 %v4051, 0.0
        %v4209 = vmax.f32 %v4053, 0.0
        %v4210 = vmax.f32 %v4055, 0.0
        %v4211 = vmax.f32 %v4059, 0.0
        %v4212 = vmax.f32 %v4061, 0.0
        %v4213 = vmax.f32 %v4063, 0.0
        %v4214 = vmax.f32 %v4065, 0.0
        %v4215 = vmax.f32 %v4069, 0.0
        %v4216 = vmax.f32 %v4071, 0.0
        %v4217 = vmax.f32 %v4073, 0.0
        %v4218 = vmax.f32 %v4075, 0.0
        %v4219 = vmax.f32 %v4079, 0.0
        %v4220 = vmax.f32 %v4081, 0.0
        %v4221 = vmax.f32 %v4083, 0.0
        %v4222 = vmax.f32 %v4085, 0.0
        %v4223 = vmax.f32 %v4089, 0.0
        %v4224 = vmax.f32 %v4091, 0.0
        %v4225 = vmax.f32 %v4093, 0.0
        %v4226 = vmax.f32 %v4095, 0.0
        %v4227 = vmax.f32 %v4099, 0.0
        %v4228 = vmax.f32 %v4101, 0.0
        %v4229 = vmax.f32 %v4103, 0.0
        %v4230 = vmax.f32 %v4105, 0.0
        %v4231 = vmax.f32 %v4109, 0.0
        %v4232 = vmax.f32 %v4111, 0.0
        %v4233 = vmax.f32 %v4113, 0.0
        %v4234 = vmax.f32 %v4115, 0.0
        %v4235 = vmax.f32 %v4119, 0.0
        %v4236 = vmax.f32 %v4121, 0.0
        %v4237 = vmax.f32 %v4123, 0.0
        %v4238 = vmax.f32 %v4125, 0.0
        %v4239 = vmax.f32 %v4129, 0.0
        %v4240 = vmax.f32 %v4131, 0.0
        %v4241 = vmax.f32 %v4133, 0.0
        %v4242 = vmax.f32 %v4135, 0.0
        %v4243 = vmax.f32 %v4139, 0.0
        %v4244 = vmax.f32 %v4141, 0.0
        %v4245 = vmax.f32 %v4143, 0.0
        %v4246 = vmax.f32 %v4145, 0.0
        %v4247 = vmax.f32 %v4149, 0.0
        %v4248 = vmax.f32 %v4151, 0.0
        %v4249 = vmax.f32 %v4153, 0.0
        %v4250 = vmax.f32 %v4155, 0.0
        %v4251 = vmax.f32 %v4159, 0.0
        %v4252 = vmax.f32 %v4161, 0.0
        %v4253 = vmax.f32 %v4163, 0.0
        %v4254 = vmax.f32 %v4165, 0.0
        %v4255 = vmax.f32 %v4169, 0.0
        %v4256 = vmax.f32 %v4171, 0.0
        %v4257 = vmax.f32 %v4173, 0.0
        %v4258 = vmax.f32 %v4175, 0.0
        %v4259 = vmax.f32 %v4179, 0.0
        %v4260 = vmax.f32 %v4181, 0.0
        %v4261 = vmax.f32 %v4183, 0.0
        %v4262 = vmax.f32 %v4185, 0.0
        %v4263 = vmax.f32 %v4189, 0.0
        %v4264 = vmax.f32 %v4191, 0.0
        %v4265 = vmax.f32 %v4193, 0.0
        %v4266 = vmax.f32 %v4195, 0.0
        %v4267 = vmax.f32 %v4199, 0.0
        %v4268 = vmax.f32 %v4201, 0.0
        %v4269 = vmax.f32 %v4203, 0.0
        %v4270 = vmax.f32 %v4205, 0.0
        %v4271 = vpack.c.bf16 %v4209, %v4207
        %v4272 = vpack.c.bf16 %v4210, %v4208
        %v4273 = vpack.c.bf16 %v4213, %v4211
        %v4274 = vpack.c.bf16 %v4214, %v4212
        %v4275 = vpack.c.bf16 %v4217, %v4215
        %v4276 = vpack.c.bf16 %v4218, %v4216
        %v4277 = vpack.c.bf16 %v4221, %v4219
        %v4278 = vpack.c.bf16 %v4222, %v4220
        %v4279 = vpack.c.bf16 %v4225, %v4223
        %v4280 = vpack.c.bf16 %v4226, %v4224
        %v4281 = vpack.c.bf16 %v4229, %v4227
        %v4282 = vpack.c.bf16 %v4230, %v4228
        %v4283 = vpack.c.bf16 %v4233, %v4231
        %v4284 = vpack.c.bf16 %v4234, %v4232
        %v4285 = vpack.c.bf16 %v4237, %v4235
        %v4286 = vpack.c.bf16 %v4238, %v4236
        %v4287 = vpack.c.bf16 %v4241, %v4239
        %v4288 = vpack.c.bf16 %v4242, %v4240
        %v4289 = vpack.c.bf16 %v4245, %v4243
        %v4290 = vpack.c.bf16 %v4246, %v4244
        %v4291 = vpack.c.bf16 %v4249, %v4247
        %v4292 = vpack.c.bf16 %v4250, %v4248
        %v4293 = vpack.c.bf16 %v4253, %v4251
        %v4294 = vpack.c.bf16 %v4254, %v4252
        %v4295 = vpack.c.bf16 %v4257, %v4255
        %v4296 = vpack.c.bf16 %v4258, %v4256
        %v4297 = vpack.c.bf16 %v4261, %v4259
        %v4298 = vpack.c.bf16 %v4262, %v4260
        %v4299 = vpack.c.bf16 %v4265, %v4263
        %v4300 = vpack.c.bf16 %v4266, %v4264
        %v4301 = vpack.c.bf16 %v4269, %v4267
        %v4302 = vpack.c.bf16 %v4270, %v4268
        %s4303 = scalar_lea.vmem %s4, 384
        %v4304 = vld [vmem:[%s4303] sm:$0xf]
        %v4305 = vld [vmem:[%s4303 + $0x4] sm:$0xf]
        %v4306 = vld [vmem:[%s4303 + $0x8] sm:$0xf]
        %v4307 = vld [vmem:[%s4303 + $0xc] sm:$0xf]
        %v4308 = vld [vmem:[%s4303 + $0x10] sm:$0xf]
        %v4309 = vld [vmem:[%s4303 + $0x14] sm:$0xf]
        %v4310 = vld [vmem:[%s4303 + $0x18] sm:$0xf]
        %v4311 = vld [vmem:[%s4303 + $0x1c] sm:$0xf]
        %v4312 = vld [vmem:[%s4303 + $0x20] sm:$0xf]
        %v4313 = vld [vmem:[%s4303 + $0x24] sm:$0xf]
        %v4314 = vld [vmem:[%s4303 + $0x28] sm:$0xf]
        %v4315 = vld [vmem:[%s4303 + $0x2c] sm:$0xf]
        %v4316 = vld [vmem:[%s4303 + $0x30] sm:$0xf]
        %v4317 = vld [vmem:[%s4303 + $0x34] sm:$0xf]
        %v4318 = vld [vmem:[%s4303 + $0x38] sm:$0xf]
        %v4319 = vld [vmem:[%s4303 + $0x3c] sm:$0xf]
        %v4320 = vld [vmem:[%s4303 + $0x40] sm:$0xf]
        %v4321 = vld [vmem:[%s4303 + $0x44] sm:$0xf]
        %v4322 = vld [vmem:[%s4303 + $0x48] sm:$0xf]
        %v4323 = vld [vmem:[%s4303 + $0x4c] sm:$0xf]
        %v4324 = vld [vmem:[%s4303 + $0x50] sm:$0xf]
        %v4325 = vld [vmem:[%s4303 + $0x54] sm:$0xf]
        %v4326 = vld [vmem:[%s4303 + $0x58] sm:$0xf]
        %v4327 = vld [vmem:[%s4303 + $0x5c] sm:$0xf]
        %v4328 = vld [vmem:[%s4303 + $0x60] sm:$0xf]
        %v4329 = vld [vmem:[%s4303 + $0x64] sm:$0xf]
        %v4330 = vld [vmem:[%s4303 + $0x68] sm:$0xf]
        %v4331 = vld [vmem:[%s4303 + $0x6c] sm:$0xf]
        %v4332 = vld [vmem:[%s4303 + $0x70] sm:$0xf]
        %v4333 = vld [vmem:[%s4303 + $0x74] sm:$0xf]
        %v4334 = vld [vmem:[%s4303 + $0x78] sm:$0xf]
        %v4335 = vld [vmem:[%s4303 + $0x7c] sm:$0xf]
        %s4336 = scalar_lea.vmem %s5, 3
        %v4337 = vld [vmem:[%s4336] sm:$0x1]
        %v4339 = vlaneseq
        %v4340 = vshrl.u32 %v4339, 7
        %v4341 = vsub.s32 0, %v4340
        %v4342 = vrot.slane %v4337, %v4341
        %v4376 = vunpack.c.l.b16 %v4304
        %v4377 = vunpack.c.l.b16 %v4305
        %v4378 = vunpack.c.l.b16 %v4306
        %v4379 = vunpack.c.l.b16 %v4307
        %v4380 = vunpack.c.l.b16 %v4308
        %v4381 = vunpack.c.l.b16 %v4309
        %v4382 = vunpack.c.l.b16 %v4310
        %v4383 = vunpack.c.l.b16 %v4311
        %v4384 = vunpack.c.l.b16 %v4312
        %v4385 = vunpack.c.l.b16 %v4313
        %v4386 = vunpack.c.l.b16 %v4314
        %v4387 = vunpack.c.l.b16 %v4315
        %v4388 = vunpack.c.l.b16 %v4316
        %v4389 = vunpack.c.l.b16 %v4317
        %v4390 = vunpack.c.l.b16 %v4318
        %v4391 = vunpack.c.l.b16 %v4319
        %v4392 = vunpack.c.l.b16 %v4320
        %v4393 = vunpack.c.l.b16 %v4321
        %v4394 = vunpack.c.l.b16 %v4322
        %v4395 = vunpack.c.l.b16 %v4323
        %v4396 = vunpack.c.l.b16 %v4324
        %v4397 = vunpack.c.l.b16 %v4325
        %v4398 = vunpack.c.l.b16 %v4326
        %v4399 = vunpack.c.l.b16 %v4327
        %v4400 = vunpack.c.l.b16 %v4328
        %v4401 = vunpack.c.l.b16 %v4329
        %v4402 = vunpack.c.l.b16 %v4330
        %v4403 = vunpack.c.l.b16 %v4331
        %v4404 = vunpack.c.l.b16 %v4332
        %v4405 = vunpack.c.l.b16 %v4333
        %v4406 = vunpack.c.l.b16 %v4334
        %v4407 = vunpack.c.l.b16 %v4335
        %v4408 = vpack.c.b16 %v4377, %v4376
        %v4409 = vpack.c.b16 %v4379, %v4378
        %v4410 = vpack.c.b16 %v4381, %v4380
        %v4411 = vpack.c.b16 %v4383, %v4382
        %v4412 = vpack.c.b16 %v4385, %v4384
        %v4413 = vpack.c.b16 %v4387, %v4386
        %v4414 = vpack.c.b16 %v4389, %v4388
        %v4415 = vpack.c.b16 %v4391, %v4390
        %v4416 = vpack.c.b16 %v4393, %v4392
        %v4417 = vpack.c.b16 %v4395, %v4394
        %v4418 = vpack.c.b16 %v4397, %v4396
        %v4419 = vpack.c.b16 %v4399, %v4398
        %v4420 = vpack.c.b16 %v4401, %v4400
        %v4421 = vpack.c.b16 %v4403, %v4402
        %v4422 = vpack.c.b16 %v4405, %v4404
        %v4423 = vpack.c.b16 %v4407, %v4406
        %4440 = vmatprep.subr.bf16.mxu0 0
        %4441 = vmatpush1.bf16.msra.mxu0 %v4415
        %4442 = vmatprep.subr.bf16.mxu0 0
        %4443 = vmatpush1.bf16.msra.mxu0 %v4414
        %4444 = vmatprep.subr.bf16.mxu0 0
        %4445 = vmatpush1.bf16.msra.mxu0 %v4413
        %4446 = vmatprep.subr.bf16.mxu0 0
        %4447 = vmatpush1.bf16.msra.mxu0 %v4412
        %4448 = vmatprep.subr.bf16.mxu0 0
        %4449 = vmatpush1.bf16.msra.mxu0 %v4411
        %4450 = vmatprep.subr.bf16.mxu0 0
        %4451 = vmatpush1.bf16.msra.mxu0 %v4410
        %4452 = vmatprep.subr.bf16.mxu0 0
        %4453 = vmatpush1.bf16.msra.mxu0 %v4409
        %4454 = vmatprep.subr.bf16.mxu0 0
        %4455 = vmatpush1.bf16.msra.mxu0 %v4408
        %4456 = vmatprep.subr.bf16.mxu0 0
        %4457 = vmatpush2.bf16.msra.mxu0 %v4423
        %4458 = vmatprep.subr.bf16.mxu0 0
        %4459 = vmatpush2.bf16.msra.mxu0 %v4422
        %4460 = vmatprep.subr.bf16.mxu0 0
        %4461 = vmatpush2.bf16.msra.mxu0 %v4421
        %4462 = vmatprep.subr.bf16.mxu0 0
        %4463 = vmatpush2.bf16.msra.mxu0 %v4420
        %4464 = vmatprep.subr.bf16.mxu0 0
        %4465 = vmatpush2.bf16.msra.mxu0 %v4419
        %4466 = vmatprep.subr.bf16.mxu0 0
        %4467 = vmatpush2.bf16.msra.mxu0 %v4418
        %4468 = vmatprep.subr.bf16.mxu0 0
        %4469 = vmatpush2.bf16.msra.mxu0 %v4417
        %4470 = vmatprep.subr.bf16.mxu0 0
        %4471 = vmatpush2.bf16.msra.mxu0 %v4416
        %4472 = vmatprep.mubr.bf16.mxu0 %v4272
        %4473 = vmatmul.mubr.bf16.gmra.mxu0 %v4271
        %v4474 = vpop.f32.mrf.mxu0
        %v4475 = vadd.f32 %v4342, %v4474
        %v4476 = vpop.f32.mrf.mxu0
        %v4477 = vpop.f32.mrf.mxu0
        %v4478 = vadd.f32 %v4342, %v4477
        %v4479 = vpop.f32.mrf.mxu0
        %4480 = vmatprep.mubr.bf16.mxu0 %v4274
        %4481 = vmatmul.mubr.bf16.gmra.mxu0 %v4273
        %v4482 = vpop.f32.mrf.mxu0
        %v4483 = vadd.f32 %v4342, %v4482
        %v4484 = vpop.f32.mrf.mxu0
        %v4485 = vpop.f32.mrf.mxu0
        %v4486 = vadd.f32 %v4342, %v4485
        %v4487 = vpop.f32.mrf.mxu0
        %4488 = vmatprep.mubr.bf16.mxu0 %v4276
        %4489 = vmatmul.mubr.bf16.gmra.mxu0 %v4275
        %v4490 = vpop.f32.mrf.mxu0
        %v4491 = vadd.f32 %v4342, %v4490
        %v4492 = vpop.f32.mrf.mxu0
        %v4493 = vpop.f32.mrf.mxu0
        %v4494 = vadd.f32 %v4342, %v4493
        %v4495 = vpop.f32.mrf.mxu0
        %4496 = vmatprep.mubr.bf16.mxu0 %v4278
        %4497 = vmatmul.mubr.bf16.gmra.mxu0 %v4277
        %v4498 = vpop.f32.mrf.mxu0
        %v4499 = vadd.f32 %v4342, %v4498
        %v4500 = vpop.f32.mrf.mxu0
        %v4501 = vpop.f32.mrf.mxu0
        %v4502 = vadd.f32 %v4342, %v4501
        %v4503 = vpop.f32.mrf.mxu0
        %4504 = vmatprep.mubr.bf16.mxu0 %v4280
        %4505 = vmatmul.mubr.bf16.gmra.mxu0 %v4279
        %v4506 = vpop.f32.mrf.mxu0
        %v4507 = vadd.f32 %v4342, %v4506
        %v4508 = vpop.f32.mrf.mxu0
        %v4509 = vpop.f32.mrf.mxu0
        %v4510 = vadd.f32 %v4342, %v4509
        %v4511 = vpop.f32.mrf.mxu0
        %4512 = vmatprep.mubr.bf16.mxu0 %v4282
        %4513 = vmatmul.mubr.bf16.gmra.mxu0 %v4281
        %v4514 = vpop.f32.mrf.mxu0
        %v4515 = vadd.f32 %v4342, %v4514
        %v4516 = vpop.f32.mrf.mxu0
        %v4517 = vpop.f32.mrf.mxu0
        %v4518 = vadd.f32 %v4342, %v4517
        %v4519 = vpop.f32.mrf.mxu0
        %4520 = vmatprep.mubr.bf16.mxu0 %v4284
        %4521 = vmatmul.mubr.bf16.gmra.mxu0 %v4283
        %v4522 = vpop.f32.mrf.mxu0
        %v4523 = vadd.f32 %v4342, %v4522
        %v4524 = vpop.f32.mrf.mxu0
        %v4525 = vpop.f32.mrf.mxu0
        %v4526 = vadd.f32 %v4342, %v4525
        %v4527 = vpop.f32.mrf.mxu0
        %4528 = vmatprep.mubr.bf16.mxu0 %v4286
        %4529 = vmatmul.mubr.bf16.gmra.mxu0 %v4285
        %v4530 = vpop.f32.mrf.mxu0
        %v4531 = vadd.f32 %v4342, %v4530
        %v4532 = vpop.f32.mrf.mxu0
        %v4533 = vpop.f32.mrf.mxu0
        %v4534 = vadd.f32 %v4342, %v4533
        %v4535 = vpop.f32.mrf.mxu0
        %4536 = vmatprep.mubr.bf16.mxu0 %v4288
        %4537 = vmatmul.mubr.bf16.gmra.mxu0 %v4287
        %v4538 = vpop.f32.mrf.mxu0
        %v4539 = vadd.f32 %v4342, %v4538
        %v4540 = vpop.f32.mrf.mxu0
        %v4541 = vpop.f32.mrf.mxu0
        %v4542 = vadd.f32 %v4342, %v4541
        %v4543 = vpop.f32.mrf.mxu0
        %4544 = vmatprep.mubr.bf16.mxu0 %v4290
        %4545 = vmatmul.mubr.bf16.gmra.mxu0 %v4289
        %v4546 = vpop.f32.mrf.mxu0
        %v4547 = vadd.f32 %v4342, %v4546
        %v4548 = vpop.f32.mrf.mxu0
        %v4549 = vpop.f32.mrf.mxu0
        %v4550 = vadd.f32 %v4342, %v4549
        %v4551 = vpop.f32.mrf.mxu0
        %4552 = vmatprep.mubr.bf16.mxu0 %v4292
        %4553 = vmatmul.mubr.bf16.gmra.mxu0 %v4291
        %v4554 = vpop.f32.mrf.mxu0
        %v4555 = vadd.f32 %v4342, %v4554
        %v4556 = vpop.f32.mrf.mxu0
        %v4557 = vpop.f32.mrf.mxu0
        %v4558 = vadd.f32 %v4342, %v4557
        %v4559 = vpop.f32.mrf.mxu0
        %4560 = vmatprep.mubr.bf16.mxu0 %v4294
        %4561 = vmatmul.mubr.bf16.gmra.mxu0 %v4293
        %v4562 = vpop.f32.mrf.mxu0
        %v4563 = vadd.f32 %v4342, %v4562
        %v4564 = vpop.f32.mrf.mxu0
        %v4565 = vpop.f32.mrf.mxu0
        %v4566 = vadd.f32 %v4342, %v4565
        %v4567 = vpop.f32.mrf.mxu0
        %4568 = vmatprep.mubr.bf16.mxu0 %v4296
        %4569 = vmatmul.mubr.bf16.gmra.mxu0 %v4295
        %v4570 = vpop.f32.mrf.mxu0
        %v4571 = vadd.f32 %v4342, %v4570
        %v4572 = vpop.f32.mrf.mxu0
        %v4573 = vpop.f32.mrf.mxu0
        %v4574 = vadd.f32 %v4342, %v4573
        %v4575 = vpop.f32.mrf.mxu0
        %4576 = vmatprep.mubr.bf16.mxu0 %v4298
        %4577 = vmatmul.mubr.bf16.gmra.mxu0 %v4297
        %v4578 = vpop.f32.mrf.mxu0
        %v4579 = vadd.f32 %v4342, %v4578
        %v4580 = vpop.f32.mrf.mxu0
        %v4581 = vpop.f32.mrf.mxu0
        %v4582 = vadd.f32 %v4342, %v4581
        %v4583 = vpop.f32.mrf.mxu0
        %4584 = vmatprep.mubr.bf16.mxu0 %v4300
        %4585 = vmatmul.mubr.bf16.gmra.mxu0 %v4299
        %v4586 = vpop.f32.mrf.mxu0
        %v4587 = vadd.f32 %v4342, %v4586
        %v4588 = vpop.f32.mrf.mxu0
        %v4589 = vpop.f32.mrf.mxu0
        %v4590 = vadd.f32 %v4342, %v4589
        %v4591 = vpop.f32.mrf.mxu0
        %4592 = vmatprep.mubr.bf16.mxu0 %v4302
        %4593 = vmatmul.mubr.bf16.gmra.mxu0 %v4301
        %v4594 = vpop.f32.mrf.mxu0
        %v4595 = vadd.f32 %v4342, %v4594
        %v4596 = vpop.f32.mrf.mxu0
        %v4597 = vpop.f32.mrf.mxu0
        %v4598 = vadd.f32 %v4342, %v4597
        %v4599 = vpop.f32.mrf.mxu0
        %4600 = vdwg.mxu0
        %v4601 = vld [vmem:[%s282] sm:$0xff]
        %v4602 = vld [vmem:[%s282 + $0x8] sm:$0xff]
        %v4603 = vld [vmem:[%s282 + $0x10] sm:$0xff]
        %v4604 = vld [vmem:[%s282 + $0x18] sm:$0xff]
        %v4605 = vld [vmem:[%s282 + $0x20] sm:$0xff]
        %v4606 = vld [vmem:[%s282 + $0x28] sm:$0xff]
        %v4607 = vld [vmem:[%s282 + $0x30] sm:$0xff]
        %v4608 = vld [vmem:[%s282 + $0x38] sm:$0xff]
        %v4609 = vld [vmem:[%s282 + $0x40] sm:$0xff]
        %v4610 = vld [vmem:[%s282 + $0x48] sm:$0xff]
        %v4611 = vld [vmem:[%s282 + $0x50] sm:$0xff]
        %v4612 = vld [vmem:[%s282 + $0x58] sm:$0xff]
        %v4613 = vld [vmem:[%s282 + $0x60] sm:$0xff]
        %v4614 = vld [vmem:[%s282 + $0x68] sm:$0xff]
        %v4615 = vld [vmem:[%s282 + $0x70] sm:$0xff]
        %v4616 = vld [vmem:[%s282 + $0x78] sm:$0xff]
        %v4617 = vld [vmem:[%s282 + $0x80] sm:$0xff]
        %v4618 = vld [vmem:[%s282 + $0x88] sm:$0xff]
        %v4619 = vld [vmem:[%s282 + $0x90] sm:$0xff]
        %v4620 = vld [vmem:[%s282 + $0x98] sm:$0xff]
        %v4621 = vld [vmem:[%s282 + $0xa0] sm:$0xff]
        %v4622 = vld [vmem:[%s282 + $0xa8] sm:$0xff]
        %v4623 = vld [vmem:[%s282 + $0xb0] sm:$0xff]
        %v4624 = vld [vmem:[%s282 + $0xb8] sm:$0xff]
        %v4625 = vld [vmem:[%s282 + $0xc0] sm:$0xff]
        %v4626 = vld [vmem:[%s282 + $0xc8] sm:$0xff]
        %v4627 = vld [vmem:[%s282 + $0xd0] sm:$0xff]
        %v4628 = vld [vmem:[%s282 + $0xd8] sm:$0xff]
        %v4629 = vld [vmem:[%s282 + $0xe0] sm:$0xff]
        %v4630 = vld [vmem:[%s282 + $0xe8] sm:$0xff]
        %v4631 = vld [vmem:[%s282 + $0xf0] sm:$0xff]
        %v4632 = vld [vmem:[%s282 + $0xf8] sm:$0xff]
        %v4633 = vld [vmem:[%s276] sm:$0xff]
        %v4634 = vld [vmem:[%s276 + $0x8] sm:$0xff]
        %v4635 = vld [vmem:[%s276 + $0x10] sm:$0xff]
        %v4636 = vld [vmem:[%s276 + $0x18] sm:$0xff]
        %v4637 = vld [vmem:[%s276 + $0x20] sm:$0xff]
        %v4638 = vld [vmem:[%s276 + $0x28] sm:$0xff]
        %v4639 = vld [vmem:[%s276 + $0x30] sm:$0xff]
        %v4640 = vld [vmem:[%s276 + $0x38] sm:$0xff]
        %v4641 = vld [vmem:[%s276 + $0x40] sm:$0xff]
        %v4642 = vld [vmem:[%s276 + $0x48] sm:$0xff]
        %v4643 = vld [vmem:[%s276 + $0x50] sm:$0xff]
        %v4644 = vld [vmem:[%s276 + $0x58] sm:$0xff]
        %v4645 = vld [vmem:[%s276 + $0x60] sm:$0xff]
        %v4646 = vld [vmem:[%s276 + $0x68] sm:$0xff]
        %v4647 = vld [vmem:[%s276 + $0x70] sm:$0xff]
        %v4648 = vld [vmem:[%s276 + $0x78] sm:$0xff]
        %v4649 = vld [vmem:[%s276 + $0x80] sm:$0xff]
        %v4650 = vld [vmem:[%s276 + $0x88] sm:$0xff]
        %v4651 = vld [vmem:[%s276 + $0x90] sm:$0xff]
        %v4652 = vld [vmem:[%s276 + $0x98] sm:$0xff]
        %v4653 = vld [vmem:[%s276 + $0xa0] sm:$0xff]
        %v4654 = vld [vmem:[%s276 + $0xa8] sm:$0xff]
        %v4655 = vld [vmem:[%s276 + $0xb0] sm:$0xff]
        %v4656 = vld [vmem:[%s276 + $0xb8] sm:$0xff]
        %v4657 = vld [vmem:[%s276 + $0xc0] sm:$0xff]
        %v4658 = vld [vmem:[%s276 + $0xc8] sm:$0xff]
        %v4659 = vld [vmem:[%s276 + $0xd0] sm:$0xff]
        %v4660 = vld [vmem:[%s276 + $0xd8] sm:$0xff]
        %v4661 = vld [vmem:[%s276 + $0xe0] sm:$0xff]
        %v4662 = vld [vmem:[%s276 + $0xe8] sm:$0xff]
        %v4663 = vld [vmem:[%s276 + $0xf0] sm:$0xff]
        %v4664 = vld [vmem:[%s276 + $0xf8] sm:$0xff]
        %4666 = vset.pattern.permute.xlu0 3
        %4667 = vperm.xlu0 %4666, %v4633
        %v4668 = vpop.permute.xlu0 %4667
        %4671 = vset.pattern.permute.xlu0 3
        %4672 = vperm.xlu0 %4671, %v4634
        %v4673 = vpop.permute.xlu0 %4672
        %4676 = vset.pattern.permute.xlu0 3
        %4677 = vperm.xlu0 %4676, %v4635
        %v4678 = vpop.permute.xlu0 %4677
        %4681 = vset.pattern.permute.xlu0 3
        %4682 = vperm.xlu0 %4681, %v4636
        %v4683 = vpop.permute.xlu0 %4682
        %4686 = vset.pattern.permute.xlu0 3
        %4687 = vperm.xlu0 %4686, %v4637
        %v4688 = vpop.permute.xlu0 %4687
        %4691 = vset.pattern.permute.xlu0 3
        %4692 = vperm.xlu0 %4691, %v4638
        %v4693 = vpop.permute.xlu0 %4692
        %4696 = vset.pattern.permute.xlu0 3
        %4697 = vperm.xlu0 %4696, %v4639
        %v4698 = vpop.permute.xlu0 %4697
        %4701 = vset.pattern.permute.xlu0 3
        %4702 = vperm.xlu0 %4701, %v4640
        %v4703 = vpop.permute.xlu0 %4702
        %4706 = vset.pattern.permute.xlu0 3
        %4707 = vperm.xlu0 %4706, %v4641
        %v4708 = vpop.permute.xlu0 %4707
        %4711 = vset.pattern.permute.xlu0 3
        %4712 = vperm.xlu0 %4711, %v4642
        %v4713 = vpop.permute.xlu0 %4712
        %4716 = vset.pattern.permute.xlu0 3
        %4717 = vperm.xlu0 %4716, %v4643
        %v4718 = vpop.permute.xlu0 %4717
        %4721 = vset.pattern.permute.xlu0 3
        %4722 = vperm.xlu0 %4721, %v4644
        %v4723 = vpop.permute.xlu0 %4722
        %4726 = vset.pattern.permute.xlu0 3
        %4727 = vperm.xlu0 %4726, %v4645
        %v4728 = vpop.permute.xlu0 %4727
        %4731 = vset.pattern.permute.xlu0 3
        %4732 = vperm.xlu0 %4731, %v4646
        %v4733 = vpop.permute.xlu0 %4732
        %4736 = vset.pattern.permute.xlu0 3
        %4737 = vperm.xlu0 %4736, %v4647
        %v4738 = vpop.permute.xlu0 %4737
        %4741 = vset.pattern.permute.xlu0 3
        %4742 = vperm.xlu0 %4741, %v4648
        %v4743 = vpop.permute.xlu0 %4742
        %4746 = vset.pattern.permute.xlu0 3
        %4747 = vperm.xlu0 %4746, %v4649
        %v4748 = vpop.permute.xlu0 %4747
        %4751 = vset.pattern.permute.xlu0 3
        %4752 = vperm.xlu0 %4751, %v4650
        %v4753 = vpop.permute.xlu0 %4752
        %4756 = vset.pattern.permute.xlu0 3
        %4757 = vperm.xlu0 %4756, %v4651
        %v4758 = vpop.permute.xlu0 %4757
        %4761 = vset.pattern.permute.xlu0 3
        %4762 = vperm.xlu0 %4761, %v4652
        %v4763 = vpop.permute.xlu0 %4762
        %4766 = vset.pattern.permute.xlu0 3
        %4767 = vperm.xlu0 %4766, %v4653
        %v4768 = vpop.permute.xlu0 %4767
        %4771 = vset.pattern.permute.xlu0 3
        %4772 = vperm.xlu0 %4771, %v4654
        %v4773 = vpop.permute.xlu0 %4772
        %4776 = vset.pattern.permute.xlu0 3
        %4777 = vperm.xlu0 %4776, %v4655
        %v4778 = vpop.permute.xlu0 %4777
        %4781 = vset.pattern.permute.xlu0 3
        %4782 = vperm.xlu0 %4781, %v4656
        %v4783 = vpop.permute.xlu0 %4782
        %4786 = vset.pattern.permute.xlu0 3
        %4787 = vperm.xlu0 %4786, %v4657
        %v4788 = vpop.permute.xlu0 %4787
        %4791 = vset.pattern.permute.xlu0 3
        %4792 = vperm.xlu0 %4791, %v4658
        %v4793 = vpop.permute.xlu0 %4792
        %4796 = vset.pattern.permute.xlu0 3
        %4797 = vperm.xlu0 %4796, %v4659
        %v4798 = vpop.permute.xlu0 %4797
        %4801 = vset.pattern.permute.xlu0 3
        %4802 = vperm.xlu0 %4801, %v4660
        %v4803 = vpop.permute.xlu0 %4802
        %4806 = vset.pattern.permute.xlu0 3
        %4807 = vperm.xlu0 %4806, %v4661
        %v4808 = vpop.permute.xlu0 %4807
        %4811 = vset.pattern.permute.xlu0 3
        %4812 = vperm.xlu0 %4811, %v4662
        %v4813 = vpop.permute.xlu0 %4812
        %4816 = vset.pattern.permute.xlu0 3
        %4817 = vperm.xlu0 %4816, %v4663
        %v4818 = vpop.permute.xlu0 %4817
        %4821 = vset.pattern.permute.xlu0 3
        %4822 = vperm.xlu0 %4821, %v4664
        %v4823 = vpop.permute.xlu0 %4822
        %v4825 = vmul.f32 %v4668, %v4475
        %v4826 = vmul.f32 %v4673, %v4478
        %v4827 = vmul.f32 %v4678, %v4483
        %v4828 = vmul.f32 %v4683, %v4486
        %v4829 = vmul.f32 %v4688, %v4491
        %v4830 = vmul.f32 %v4693, %v4494
        %v4831 = vmul.f32 %v4698, %v4499
        %v4832 = vmul.f32 %v4703, %v4502
        %v4833 = vmul.f32 %v4708, %v4507
        %v4834 = vmul.f32 %v4713, %v4510
        %v4835 = vmul.f32 %v4718, %v4515
        %v4836 = vmul.f32 %v4723, %v4518
        %v4837 = vmul.f32 %v4728, %v4523
        %v4838 = vmul.f32 %v4733, %v4526
        %v4839 = vmul.f32 %v4738, %v4531
        %v4840 = vmul.f32 %v4743, %v4534
        %v4841 = vmul.f32 %v4748, %v4539
        %v4842 = vmul.f32 %v4753, %v4542
        %v4843 = vmul.f32 %v4758, %v4547
        %v4844 = vmul.f32 %v4763, %v4550
        %v4845 = vmul.f32 %v4768, %v4555
        %v4846 = vmul.f32 %v4773, %v4558
        %v4847 = vmul.f32 %v4778, %v4563
        %v4848 = vmul.f32 %v4783, %v4566
        %v4849 = vmul.f32 %v4788, %v4571
        %v4850 = vmul.f32 %v4793, %v4574
        %v4851 = vmul.f32 %v4798, %v4579
        %v4852 = vmul.f32 %v4803, %v4582
        %v4853 = vmul.f32 %v4808, %v4587
        %v4854 = vmul.f32 %v4813, %v4590
        %v4855 = vmul.f32 %v4818, %v4595
        %v4856 = vmul.f32 %v4823, %v4598
        %v4857 = vadd.f32 %v4601, %v4825
        %v4858 = vadd.f32 %v4602, %v4826
        %v4859 = vadd.f32 %v4603, %v4827
        %v4860 = vadd.f32 %v4604, %v4828
        %v4861 = vadd.f32 %v4605, %v4829
        %v4862 = vadd.f32 %v4606, %v4830
        %v4863 = vadd.f32 %v4607, %v4831
        %v4864 = vadd.f32 %v4608, %v4832
        %v4865 = vadd.f32 %v4609, %v4833
        %v4866 = vadd.f32 %v4610, %v4834
        %v4867 = vadd.f32 %v4611, %v4835
        %v4868 = vadd.f32 %v4612, %v4836
        %v4869 = vadd.f32 %v4613, %v4837
        %v4870 = vadd.f32 %v4614, %v4838
        %v4871 = vadd.f32 %v4615, %v4839
        %v4872 = vadd.f32 %v4616, %v4840
        %v4873 = vadd.f32 %v4617, %v4841
        %v4874 = vadd.f32 %v4618, %v4842
        %v4875 = vadd.f32 %v4619, %v4843
        %v4876 = vadd.f32 %v4620, %v4844
        %v4877 = vadd.f32 %v4621, %v4845
        %v4878 = vadd.f32 %v4622, %v4846
        %v4879 = vadd.f32 %v4623, %v4847
        %v4880 = vadd.f32 %v4624, %v4848
        %v4881 = vadd.f32 %v4625, %v4849
        %v4882 = vadd.f32 %v4626, %v4850
        %v4883 = vadd.f32 %v4627, %v4851
        %v4884 = vadd.f32 %v4628, %v4852
        %v4885 = vadd.f32 %v4629, %v4853
        %v4886 = vadd.f32 %v4630, %v4854
        %v4887 = vadd.f32 %v4631, %v4855
        %v4888 = vadd.f32 %v4632, %v4856
        %4889 = vst [vmem:[%s282] sm:$0xff] %v4857
        %4890 = vst [vmem:[%s282 + $0x8] sm:$0xff] %v4858
        %4891 = vst [vmem:[%s282 + $0x10] sm:$0xff] %v4859
        %4892 = vst [vmem:[%s282 + $0x18] sm:$0xff] %v4860
        %4893 = vst [vmem:[%s282 + $0x20] sm:$0xff] %v4861
        %4894 = vst [vmem:[%s282 + $0x28] sm:$0xff] %v4862
        %4895 = vst [vmem:[%s282 + $0x30] sm:$0xff] %v4863
        %4896 = vst [vmem:[%s282 + $0x38] sm:$0xff] %v4864
        %4897 = vst [vmem:[%s282 + $0x40] sm:$0xff] %v4865
        %4898 = vst [vmem:[%s282 + $0x48] sm:$0xff] %v4866
        %4899 = vst [vmem:[%s282 + $0x50] sm:$0xff] %v4867
        %4900 = vst [vmem:[%s282 + $0x58] sm:$0xff] %v4868
        %4901 = vst [vmem:[%s282 + $0x60] sm:$0xff] %v4869
        %4902 = vst [vmem:[%s282 + $0x68] sm:$0xff] %v4870
        %4903 = vst [vmem:[%s282 + $0x70] sm:$0xff] %v4871
        %4904 = vst [vmem:[%s282 + $0x78] sm:$0xff] %v4872
        %4905 = vst [vmem:[%s282 + $0x80] sm:$0xff] %v4873
        %4906 = vst [vmem:[%s282 + $0x88] sm:$0xff] %v4874
        %4907 = vst [vmem:[%s282 + $0x90] sm:$0xff] %v4875
        %4908 = vst [vmem:[%s282 + $0x98] sm:$0xff] %v4876
        %4909 = vst [vmem:[%s282 + $0xa0] sm:$0xff] %v4877
        %4910 = vst [vmem:[%s282 + $0xa8] sm:$0xff] %v4878
        %4911 = vst [vmem:[%s282 + $0xb0] sm:$0xff] %v4879
        %4912 = vst [vmem:[%s282 + $0xb8] sm:$0xff] %v4880
        %4913 = vst [vmem:[%s282 + $0xc0] sm:$0xff] %v4881
        %4914 = vst [vmem:[%s282 + $0xc8] sm:$0xff] %v4882
        %4915 = vst [vmem:[%s282 + $0xd0] sm:$0xff] %v4883
        %4916 = vst [vmem:[%s282 + $0xd8] sm:$0xff] %v4884
        %4917 = vst [vmem:[%s282 + $0xe0] sm:$0xff] %v4885
        %4918 = vst [vmem:[%s282 + $0xe8] sm:$0xff] %v4886
        %4919 = vst [vmem:[%s282 + $0xf0] sm:$0xff] %v4887
        %4920 = vst [vmem:[%s282 + $0xf8] sm:$0xff] %v4888
      $region60: #{simple_moe_layer.1} parent=43 // pred_fallthru
        _
      %s4921 = smul.u32 32, %s24
      %p4922 = scmp.lt.s32.totalorder %s4921, 127
      %s4923 = scalar_select %p4922, %s4921, 127
      %s4924 = smul.addr %s4923, 8
      %s4925 = scalar_lea.vmem %s7, %s4924
      // Predicated region
      $region61: #{simple_moe_layer.1} parent=43 // pred_check
        %p4926 = pneg %p178
      $region62: #{simple_moe_layer.1} parent=43 // pred_check_branch
        %4928 = sbr.rel (%p4926) target = $region64
      $region63: #{simple_moe_layer.1} parent=43 // pred_region
        %s4929 = smul.u32 32, %s24
      $region64: #{simple_moe_layer.1} parent=43 // pred_fallthru
        _
    $region44: #{simple_moe_layer.1} parent=5 // pred_fallthru
      _
    %p4930 = scmp.le.s32.totalorder 2, %s19
    // Predicated region
    $region65: #{simple_moe_layer.1} parent=5 // pred_check
      %p4931 = pneg %p4930
    $region66: #{simple_moe_layer.1} parent=5 // pred_check_branch
      %4933 = sbr.rel (%p4931) target = $region68
    $region67: #{simple_moe_layer.1} parent=5 // pred_region
      %s4934 = ssub.s32 %s19, 2
      // Predicated region
      $region69: #{simple_moe_layer.1} parent=67 // pred_check
        %p4935 = pneg %p184
      $region70: #{simple_moe_layer.1} parent=67 // pred_check_branch
        %4937 = sbr.rel (%p4935) target = $region72
      $region71: #{simple_moe_layer.1} parent=67 // pred_region
        %s4938 = smul.u32 32, %s25
        %p4939 = scmp.lt.s32.totalorder %s4938, 127
        %s4940 = scalar_select %p4939, %s4938, 127
        %s4941 = smul.addr %s4940, 8
        %s4942 = scalar_lea.vmem %s7, %s4941
      $region72: #{simple_moe_layer.1} parent=67 // pred_fallthru
        _
    $region68: #{simple_moe_layer.1} parent=5 // pred_fallthru
      _
  $region6: #{simple_moe_layer.1} parent=0 // loop_footer
    %s23 = sadd.s32 1, %s19
  $region7: #{simple_moe_layer.1} parent=0 // loop_footer_branch
    %18 = sbr.rel target = $region3
  $region8: #{simple_moe_layer.1} parent=0 // loop_exit
    _

</llo_original>
